<compile_context>
chip_gen: v5e
topology: v5e:2x2
jax: 0.10.0
libtpu: 0.0.40
codegen_flags: <defaults>
</compile_context>

<pallas_src>
import jax
import jax.numpy as jnp
import numpy as np
from jax.experimental import pallas as pl
from jax.experimental.pallas import tpu as pltpu

NEG = -1e30  # "minus infinity" bias for the padded logit lanes


# ----------------------------------------------------------------------------
# Kernel 1: conv1 (one im2col matmul) + bias + relu + fused 2x2 max-pool
# ----------------------------------------------------------------------------
def _conv1_kernel(p_ref, w_ref, b_ref, o_ref):
    """p_ref: (1, 4*R, 75) rows [pool_offset d, image b, pixel m]
       w_ref: (75, 32)   b_ref: (1, 32)   o_ref: (1, R, 32)"""
    R = o_ref.shape[1]
    # One MXU matmul; the pool reduction runs on the VPU over row groups.
    y = jnp.dot(p_ref[0], w_ref[...], preferred_element_type=jnp.float32)
    acc = y[0:R, :]
    for d in range(1, 4):
        acc = jnp.maximum(acc, y[d * R:(d + 1) * R, :])
    o_ref[0] = jnp.maximum(acc + b_ref[...], 0.0)      # relu commutes with max


# ----------------------------------------------------------------------------
# Kernel 2: conv2 + bias + relu + pool + fc1 + fc2 + log_softmax (fused)
# ----------------------------------------------------------------------------
def _conv2_mlp_kernel(p_ref, w2_ref, b2_ref, w3_ref, b3_ref, w4_ref, b4_ref,
                      o_ref):
    """p_ref : (1, 4*25*BB, 800) rows [d, pixel m, image b]
       w2_ref: (800, 64)   b2_ref: (1, 64)
       w3_ref: (1600, 120) b3_ref: (1, 120)   rows ordered [m*64 + c]
       w4_ref: (120, 128)  b4_ref: (1, 128)   padded logit lanes biased -1e30
       o_ref : (1, BB, 128)"""
    BB = o_ref.shape[1]
    R = 25 * BB
    C2 = w2_ref.shape[1]                               # 64

    # conv2 as one matmul + VPU max over the 4 pool-offset row groups.
    y = jnp.dot(p_ref[0], w2_ref[...], preferred_element_type=jnp.float32)
    acc = y[0:R, :]
    for d in range(1, 4):
        acc = jnp.maximum(acc, y[d * R:(d + 1) * R, :])
    act = jnp.maximum(acc + b2_ref[...], 0.0)          # (25*BB, 64), rows [m, b]

    # fc1 as 25 accumulated per-pixel matmuls (PyTorch flatten order is folded
    # into w3's row permutation).  Same total MXU weight-push as one big dot,
    # but no lane concat / transpose and no weight padding.
    h = jnp.zeros((BB, w3_ref.shape[1]), jnp.float32)
    for m in range(25):
        h = h + jnp.dot(act[m * BB:(m + 1) * BB, :],
                        w3_ref[m * C2:(m + 1) * C2, :],
                        preferred_element_type=jnp.float32)
    h = h + b3_ref[...]

    logits = (jnp.dot(h, w4_ref[...], preferred_element_type=jnp.float32)
              + b4_ref[...])                           # (BB, 128)
    mx = jnp.max(logits, axis=-1, keepdims=True)
    s = logits - mx
    lse = jnp.log(jnp.sum(jnp.exp(s), axis=-1, keepdims=True))
    o_ref[0] = s - lse


# ----------------------------------------------------------------------------
# pallas_call wrappers (batch-block grid, weights fetched once)
# ----------------------------------------------------------------------------
def _conv1_call(p1, w1, b1, nblk, R):
    K1 = p1.shape[-1]
    return pl.pallas_call(
        _conv1_kernel,
        out_shape=jax.ShapeDtypeStruct((nblk, R, w1.shape[1]), jnp.float32),
        grid=(nblk,),
        in_specs=[pl.BlockSpec((1, 4 * R, K1), lambda i: (i, 0, 0)),
                  pl.BlockSpec(w1.shape, lambda i: (0, 0)),
                  pl.BlockSpec(b1.shape, lambda i: (0, 0))],
        out_specs=pl.BlockSpec((1, R, w1.shape[1]), lambda i: (i, 0, 0)),
        compiler_params=pltpu.CompilerParams(
            dimension_semantics=("parallel",)),
    )(p1, w1, b1)


def _conv2_mlp_call(p2, w2, b2, w3, b3, w4, b4, nblk, BB):
    K2 = p2.shape[-1]
    R = 25 * BB
    weight_specs = [pl.BlockSpec(w.shape, lambda i: (0, 0))
                    for w in (w2, b2, w3, b3, w4, b4)]
    return pl.pallas_call(
        _conv2_mlp_kernel,
        out_shape=jax.ShapeDtypeStruct((nblk, BB, w4.shape[1]), jnp.float32),
        grid=(nblk,),
        in_specs=[pl.BlockSpec((1, 4 * R, K2), lambda i: (i, 0, 0))]
                 + weight_specs,
        out_specs=pl.BlockSpec((1, BB, w4.shape[1]), lambda i: (i, 0, 0)),
        compiler_params=pltpu.CompilerParams(
            dimension_semantics=("parallel",)),
    )(p2, w2, b2, w3, b3, w4, b4)


# ----------------------------------------------------------------------------
# Glue: im2col fused with the 2x2/stride-2 pool offsets (pure indexing)
# ----------------------------------------------------------------------------
def _im2col_pool_groups(x, ksize, pool):
    """x: (B, H, W, C) -> (pool*pool, B, Ph*Pw, ksize*ksize*C)."""
    B, H, W, C = x.shape
    Ho, Wo = H - ksize + 1, W - ksize + 1
    Ph, Pw = Ho // pool, Wo // pool
    groups = []
    for dh in range(pool):
        for dw in range(pool):
            taps = []
            for kh in range(ksize):
                for kw in range(ksize):
                    h0, w0 = dh + kh, dw + kw
                    sl = jax.lax.slice(
                        x, (0, h0, w0, 0),
                        (B, h0 + (Ph - 1) * pool + 1,
                         w0 + (Pw - 1) * pool + 1, C),
                        (1, pool, pool, 1))            # (B, Ph, Pw, C)
                    taps.append(sl)
            g = jnp.stack(taps, axis=3)                # (B, Ph, Pw, k*k, C)
            groups.append(g.reshape(B, Ph * Pw, ksize * ksize * C))
    return jnp.stack(groups, axis=0)                   # (4, B, M, K)


# ----------------------------------------------------------------------------
# One-time parameter preparation (layout permutation only; no zero padding
# except the 10->128 logit lanes of fc2)
# ----------------------------------------------------------------------------
def prepare_params(p):
    w1 = jnp.transpose(p["conv1_w"], (2, 3, 1, 0)).reshape(5 * 5 * 3, 32)
    b1 = p["conv1_b"].reshape(1, 32)
    w2 = jnp.transpose(p["conv2_w"], (2, 3, 1, 0)).reshape(5 * 5 * 32, 64)
    b2 = p["conv2_b"].reshape(1, 64)
    # torch flat feature index = c*25 + m; our row index = m*64 + c.
    w3 = jnp.transpose(p["fc1_w"].reshape(120, 64, 25), (2, 1, 0))
    w3 = w3.reshape(25 * 64, 120)
    b3 = p["fc1_b"].reshape(1, 120)
    w4 = jnp.pad(p["fc2_w"].T, ((0, 0), (0, 128 - 10)))
    b4 = jnp.pad(p["fc2_b"], (0, 128 - 10), constant_values=NEG).reshape(1, 128)
    return dict(w1=w1, b1=b1, w2=w2, b2=b2, w3=w3, b3=b3, w4=w4, b4=b4)


# ----------------------------------------------------------------------------
# Full forward pass
# ----------------------------------------------------------------------------
def net_forward(x_nchw, q, block_batch=None):
    B = x_nchw.shape[0]
    BB = block_batch if block_batch is not None else min(B, 8)
    assert B % BB == 0
    nblk = B // BB
    x = jnp.transpose(x_nchw, (0, 2, 3, 1)).astype(jnp.float32)    # NHWC

    # conv1 + relu + pool
    g1 = _im2col_pool_groups(x, 5, 2)                  # (4, B, 196, 75)
    M1, K1 = g1.shape[2], g1.shape[3]
    p1 = g1.reshape(4, nblk, BB, M1, K1).transpose(1, 0, 2, 3, 4)
    p1 = p1.reshape(nblk, 4 * BB * M1, K1)             # rows [d, b, m]
    a1 = _conv1_call(p1, q["w1"], q["b1"], nblk, BB * M1)
    a1 = a1.reshape(B, 14, 14, 32)

    # conv2 + relu + pool + fc1 + fc2 + log_softmax (single fused kernel)
    g2 = _im2col_pool_groups(a1, 5, 2)                 # (4, B, 25, 800)
    M2, K2 = g2.shape[2], g2.shape[3]
    p2 = g2.reshape(4, nblk, BB, M2, K2).transpose(1, 0, 3, 2, 4)
    p2 = p2.reshape(nblk, 4 * M2 * BB, K2)             # rows [d, m, b]
    out = _conv2_mlp_call(p2, q["w2"], q["b2"], q["w3"], q["b3"],
                          q["w4"], q["b4"], nblk, BB)  # (nblk, BB, 128)
    return out.reshape(B, -1)[:, :10]


# ----------------------------------------------------------------------------
# Pure-JAX reference for validation
# ----------------------------------------------------------------------------
def reference(x_nchw, p):
    x = jnp.transpose(x_nchw, (0, 2, 3, 1))

    def conv(inp, w_t, b):
        w = jnp.transpose(w_t, (2, 3, 1, 0))
        y = jax.lax.conv_general_dilated(
            inp, w, (1, 1), "VALID",
            dimension_numbers=("NHWC", "HWIO", "NHWC"))
        return y + b

    def pool(y):
        B, H, W, C = y.shape
        return y.reshape(B, H // 2, 2, W // 2, 2, C).max(axis=(2, 4))

    y = pool(jnp.maximum(conv(x, p["conv1_w"], p["conv1_b"]), 0.0))
    y = pool(jnp.maximum(conv(y, p["conv2_w"], p["conv2_b"]), 0.0))
    feat = jnp.transpose(y, (0, 3, 1, 2)).reshape(x.shape[0], -1)
    h = feat @ p["fc1_w"].T + p["fc1_b"]
    logits = h @ p["fc2_w"].T + p["fc2_b"]
    return jax.nn.log_softmax(logits, axis=1)


if __name__ == "__main__":
    key = jax.random.PRNGKey(0)
    ks = jax.random.split(key, 9)

    # Input implied by the module: 3x32x32 (-> 28 -> 14 -> 10 -> 5 -> 64*5*5).
    x = jax.random.normal(ks[0], (2, 3, 32, 32), jnp.float32)

    params = {
        "conv1_w": jax.random.normal(ks[1], (32, 3, 5, 5), jnp.float32) * 0.05,
        "conv1_b": jax.random.normal(ks[2], (32,), jnp.float32) * 0.05,
        "conv2_w": jax.random.normal(ks[3], (64, 32, 5, 5), jnp.float32) * 0.05,
        "conv2_b": jax.random.normal(ks[4], (64,), jnp.float32) * 0.05,
        "fc1_w": jax.random.normal(ks[5], (120, 64 * 5 * 5), jnp.float32) * 0.02,
        "fc1_b": jax.random.normal(ks[6], (120,), jnp.float32) * 0.02,
        "fc2_w": jax.random.normal(ks[7], (10, 120), jnp.float32) * 0.05,
        "fc2_b": jax.random.normal(ks[8], (10,), jnp.float32) * 0.05,
    }

    prepped = prepare_params(params)   # one-time host-side layout permutation
    out = jax.jit(net_forward)(x, prepped)
    out = jax.block_until_ready(out)
    assert out.shape == (2, 10) and out.dtype == jnp.float32

    ref = reference(x, params)
    np.testing.assert_allclose(np.asarray(out), np.asarray(ref),
                               rtol=1e-3, atol=1e-3)
    print("KERNEL_OK")
</pallas_src>

<mosaic_0001>
module attributes {stable_mosaic.version = 11 : i64} {
  func.func @_conv1_kernel(%arg0: i32, %arg1: memref<1x1568x75xf32, #tpu.memory_space<vmem>>, %arg2: memref<75x32xf32, #tpu.memory_space<vmem>>, %arg3: memref<1x32xf32, #tpu.memory_space<vmem>>, %arg4: memref<1x392x32xf32, #tpu.memory_space<vmem>>) attributes {dimension_semantics = [#tpu.dimension_semantics<parallel>], iteration_bounds = array<i64: 1>, scalar_prefetch = 0 : i64, scratch_operands = 0 : i64, tpu.core_type = #tpu.core_type<tc>, window_params = [{transform_indices = @transform_0, window_bounds = array<i64: 1, 1568, 75>}, {pipeline_mode = #tpu.pipeline_mode<synchronous>, transform_indices = @transform_1, window_bounds = array<i64: 75, 32>}, {pipeline_mode = #tpu.pipeline_mode<synchronous>, transform_indices = @transform_2, window_bounds = array<i64: 1, 32>}, {transform_indices = @transform_3, window_bounds = array<i64: 1, 392, 32>}]} {
    %c0 = arith.constant 0 : index
    %c0_0 = arith.constant 0 : index
    %c0_1 = arith.constant 0 : index
    %0 = vector.load %arg1[%c0, %c0_0, %c0_1] : memref<1x1568x75xf32, #tpu.memory_space<vmem>>, vector<1x1568x75xf32>
    %1 = vector.shape_cast %0 : vector<1x1568x75xf32> to vector<1568x75xf32>
    %c0_2 = arith.constant 0 : index
    %c0_3 = arith.constant 0 : index
    %2 = vector.load %arg2[%c0_2, %c0_3] : memref<75x32xf32, #tpu.memory_space<vmem>>, vector<75x32xf32>
    %cst = arith.constant dense<0.000000e+00> : vector<1568x32xf32>
    %3 = tpu.matmul %1, %2, %cst {dimension_numbers = #tpu.dot_dimension_numbers<[1], [0], [0], [1], [0, 0, 1, 1], [], []>} : vector<1568x75xf32>, vector<75x32xf32>, vector<1568x32xf32> -> vector<1568x32xf32>
    %4 = vector.extract_strided_slice %3 {offsets = [0, 0], sizes = [392, 32], strides = [1, 1]} : vector<1568x32xf32> to vector<392x32xf32>
    %5 = vector.extract_strided_slice %3 {offsets = [392, 0], sizes = [392, 32], strides = [1, 1]} : vector<1568x32xf32> to vector<392x32xf32>
    %6 = arith.maximumf %4, %5 : vector<392x32xf32>
    %7 = vector.extract_strided_slice %3 {offsets = [784, 0], sizes = [392, 32], strides = [1, 1]} : vector<1568x32xf32> to vector<392x32xf32>
    %8 = arith.maximumf %6, %7 : vector<392x32xf32>
    %9 = vector.extract_strided_slice %3 {offsets = [1176, 0], sizes = [392, 32], strides = [1, 1]} : vector<1568x32xf32> to vector<392x32xf32>
    %10 = arith.maximumf %8, %9 : vector<392x32xf32>
    %c0_4 = arith.constant 0 : index
    %c0_5 = arith.constant 0 : index
    %11 = vector.load %arg3[%c0_4, %c0_5] : memref<1x32xf32, #tpu.memory_space<vmem>>, vector<1x32xf32>
    %12 = vector.broadcast %11 : vector<1x32xf32> to vector<392x32xf32>
    %13 = arith.addf %10, %12 : vector<392x32xf32>
    %cst_6 = arith.constant 0.000000e+00 : f32
    %14 = vector.broadcast %cst_6 : f32 to vector<392x32xf32>
    %15 = arith.maximumf %13, %14 : vector<392x32xf32>
    %c0_7 = arith.constant 0 : index
    %c0_8 = arith.constant 0 : index
    %c0_9 = arith.constant 0 : index
    %16 = vector.load %arg4[%c0_7, %c0_8, %c0_9] : memref<1x392x32xf32, #tpu.memory_space<vmem>>, vector<1x392x32xf32>
    %17 = vector.shape_cast %16 : vector<1x392x32xf32> to vector<392x32xf32>
    %18 = vector.shape_cast %15 : vector<392x32xf32> to vector<1x392x32xf32>
    tpu.vector_store %arg4[%c0_7, %c0_8, %c0_9], %18 {strides = array<i32>} : memref<1x392x32xf32, #tpu.memory_space<vmem>>, vector<1x392x32xf32>,
    return
  }
  func.func @transform_0(%arg0: i32) -> (i32, i32, i32) {
    %c0_i32 = arith.constant 0 : i32
    %c0_i32_0 = arith.constant 0 : i32
    %c0_i32_1 = arith.constant 0 : i32
    return %arg0, %c0_i32, %c0_i32_0 : i32, i32, i32
  }
  func.func @transform_1(%arg0: i32) -> (i32, i32) {
    %c0_i32 = arith.constant 0 : i32
    %c0_i32_0 = arith.constant 0 : i32
    %c0_i32_1 = arith.constant 0 : i32
    return %c0_i32, %c0_i32_0 : i32, i32
  }
  func.func @transform_2(%arg0: i32) -> (i32, i32) {
    %c0_i32 = arith.constant 0 : i32
    %c0_i32_0 = arith.constant 0 : i32
    %c0_i32_1 = arith.constant 0 : i32
    return %c0_i32, %c0_i32_0 : i32, i32
  }
  func.func @transform_3(%arg0: i32) -> (i32, i32, i32) {
    %c0_i32 = arith.constant 0 : i32
    %c0_i32_0 = arith.constant 0 : i32
    %c0_i32_1 = arith.constant 0 : i32
    return %arg0, %c0_i32, %c0_i32_0 : i32, i32, i32
  }
}

module attributes {stable_mosaic.version = 11 : i64} {
  func.func @_conv2_mlp_kernel(%arg0: i32, %arg1: memref<1x200x800xf32, #tpu.memory_space<vmem>>, %arg2: memref<800x64xf32, #tpu.memory_space<vmem>>, %arg3: memref<1x64xf32, #tpu.memory_space<vmem>>, %arg4: memref<1600x120xf32, #tpu.memory_space<vmem>>, %arg5: memref<1x120xf32, #tpu.memory_space<vmem>>, %arg6: memref<120x128xf32, #tpu.memory_space<vmem>>, %arg7: memref<1x128xf32, #tpu.memory_space<vmem>>, %arg8: memref<1x2x128xf32, #tpu.memory_space<vmem>>) attributes {dimension_semantics = [#tpu.dimension_semantics<parallel>], iteration_bounds = array<i64: 1>, scalar_prefetch = 0 : i64, scratch_operands = 0 : i64, tpu.core_type = #tpu.core_type<tc>, window_params = [{transform_indices = @transform_0, window_bounds = array<i64: 1, 200, 800>}, {pipeline_mode = #tpu.pipeline_mode<synchronous>, transform_indices = @transform_1, window_bounds = array<i64: 800, 64>}, {pipeline_mode = #tpu.pipeline_mode<synchronous>, transform_indices = @transform_2, window_bounds = array<i64: 1, 64>}, {pipeline_mode = #tpu.pipeline_mode<synchronous>, transform_indices = @transform_3, window_bounds = array<i64: 1600, 120>}, {pipeline_mode = #tpu.pipeline_mode<synchronous>, transform_indices = @transform_4, window_bounds = array<i64: 1, 120>}, {pipeline_mode = #tpu.pipeline_mode<synchronous>, transform_indices = @transform_5, window_bounds = array<i64: 120, 128>}, {pipeline_mode = #tpu.pipeline_mode<synchronous>, transform_indices = @transform_6, window_bounds = array<i64: 1, 128>}, {transform_indices = @transform_7, window_bounds = array<i64: 1, 2, 128>}]} {
    %c0 = arith.constant 0 : index
    %c0_0 = arith.constant 0 : index
    %c0_1 = arith.constant 0 : index
    %0 = vector.load %arg1[%c0, %c0_0, %c0_1] : memref<1x200x800xf32, #tpu.memory_space<vmem>>, vector<1x200x800xf32>
    %1 = vector.shape_cast %0 : vector<1x200x800xf32> to vector<200x800xf32>
    %c0_2 = arith.constant 0 : index
    %c0_3 = arith.constant 0 : index
    %2 = vector.load %arg2[%c0_2, %c0_3] : memref<800x64xf32, #tpu.memory_space<vmem>>, vector<800x64xf32>
    %cst = arith.constant dense<0.000000e+00> : vector<200x64xf32>
    %3 = tpu.matmul %1, %2, %cst {dimension_numbers = #tpu.dot_dimension_numbers<[1], [0], [0], [1], [0, 0, 1, 1], [], []>} : vector<200x800xf32>, vector<800x64xf32>, vector<200x64xf32> -> vector<200x64xf32>
    %4 = vector.extract_strided_slice %3 {offsets = [0, 0], sizes = [50, 64], strides = [1, 1]} : vector<200x64xf32> to vector<50x64xf32>
    %5 = vector.extract_strided_slice %3 {offsets = [50, 0], sizes = [50, 64], strides = [1, 1]} : vector<200x64xf32> to vector<50x64xf32>
    %6 = arith.maximumf %4, %5 : vector<50x64xf32>
    %7 = vector.extract_strided_slice %3 {offsets = [100, 0], sizes = [50, 64], strides = [1, 1]} : vector<200x64xf32> to vector<50x64xf32>
    %8 = arith.maximumf %6, %7 : vector<50x64xf32>
    %9 = vector.extract_strided_slice %3 {offsets = [150, 0], sizes = [50, 64], strides = [1, 1]} : vector<200x64xf32> to vector<50x64xf32>
    %10 = arith.maximumf %8, %9 : vector<50x64xf32>
    %c0_4 = arith.constant 0 : index
    %c0_5 = arith.constant 0 : index
    %11 = vector.load %arg3[%c0_4, %c0_5] : memref<1x64xf32, #tpu.memory_space<vmem>>, vector<1x64xf32>
    %12 = vector.broadcast %11 : vector<1x64xf32> to vector<50x64xf32>
    %13 = arith.addf %10, %12 : vector<50x64xf32>
    %cst_6 = arith.constant 0.000000e+00 : f32
    %14 = vector.broadcast %cst_6 : f32 to vector<50x64xf32>
    %15 = arith.maximumf %13, %14 : vector<50x64xf32>
    %cst_7 = arith.constant 0.000000e+00 : f32
    %16 = vector.broadcast %cst_7 : f32 to vector<2x120xf32>
    %17 = vector.extract_strided_slice %15 {offsets = [0, 0], sizes = [2, 64], strides = [1, 1]} : vector<50x64xf32> to vector<2x64xf32>
    %c0_8 = arith.constant 0 : index
    %c0_9 = arith.constant 0 : index
    %18 = vector.load %arg4[%c0_8, %c0_9] : memref<1600x120xf32, #tpu.memory_space<vmem>>, vector<64x120xf32>
    %cst_10 = arith.constant dense<0.000000e+00> : vector<2x120xf32>
    %19 = tpu.matmul %17, %18, %cst_10 {dimension_numbers = #tpu.dot_dimension_numbers<[1], [0], [0], [1], [0, 0, 1, 1], [], []>} : vector<2x64xf32>, vector<64x120xf32>, vector<2x120xf32> -> vector<2x120xf32>
    %20 = arith.addf %16, %19 : vector<2x120xf32>
    %21 = vector.extract_strided_slice %15 {offsets = [2, 0], sizes = [2, 64], strides = [1, 1]} : vector<50x64xf32> to vector<2x64xf32>
    %c64 = arith.constant 64 : index
    %c0_11 = arith.constant 0 : index
    %22 = vector.load %arg4[%c64, %c0_11] : memref<1600x120xf32, #tpu.memory_space<vmem>>, vector<64x120xf32>
    %cst_12 = arith.constant dense<0.000000e+00> : vector<2x120xf32>
    %23 = tpu.matmul %21, %22, %cst_12 {dimension_numbers = #tpu.dot_dimension_numbers<[1], [0], [0], [1], [0, 0, 1, 1], [], []>} : vector<2x64xf32>, vector<64x120xf32>, vector<2x120xf32> -> vector<2x120xf32>
    %24 = arith.addf %20, %23 : vector<2x120xf32>
    %25 = vector.extract_strided_slice %15 {offsets = [4, 0], sizes = [2, 64], strides = [1, 1]} : vector<50x64xf32> to vector<2x64xf32>
    %c128 = arith.constant 128 : index
    %c0_13 = arith.constant 0 : index
    %26 = vector.load %arg4[%c128, %c0_13] : memref<1600x120xf32, #tpu.memory_space<vmem>>, vector<64x120xf32>
    %cst_14 = arith.constant dense<0.000000e+00> : vector<2x120xf32>
    %27 = tpu.matmul %25, %26, %cst_14 {dimension_numbers = #tpu.dot_dimension_numbers<[1], [0], [0], [1], [0, 0, 1, 1], [], []>} : vector<2x64xf32>, vector<64x120xf32>, vector<2x120xf32> -> vector<2x120xf32>
    %28 = arith.addf %24, %27 : vector<2x120xf32>
    %29 = vector.extract_strided_slice %15 {offsets = [6, 0], sizes = [2, 64], strides = [1, 1]} : vector<50x64xf32> to vector<2x64xf32>
    %c192 = arith.constant 192 : index
    %c0_15 = arith.constant 0 : index
    %30 = vector.load %arg4[%c192, %c0_15] : memref<1600x120xf32, #tpu.memory_space<vmem>>, vector<64x120xf32>
    %cst_16 = arith.constant dense<0.000000e+00> : vector<2x120xf32>
    %31 = tpu.matmul %29, %30, %cst_16 {dimension_numbers = #tpu.dot_dimension_numbers<[1], [0], [0], [1], [0, 0, 1, 1], [], []>} : vector<2x64xf32>, vector<64x120xf32>, vector<2x120xf32> -> vector<2x120xf32>
    %32 = arith.addf %28, %31 : vector<2x120xf32>
    %33 = vector.extract_strided_slice %15 {offsets = [8, 0], sizes = [2, 64], strides = [1, 1]} : vector<50x64xf32> to vector<2x64xf32>
    %c256 = arith.constant 256 : index
    %c0_17 = arith.constant 0 : index
    %34 = vector.load %arg4[%c256, %c0_17] : memref<1600x120xf32, #tpu.memory_space<vmem>>, vector<64x120xf32>
    %cst_18 = arith.constant dense<0.000000e+00> : vector<2x120xf32>
    %35 = tpu.matmul %33, %34, %cst_18 {dimension_numbers = #tpu.dot_dimension_numbers<[1], [0], [0], [1], [0, 0, 1, 1], [], []>} : vector<2x64xf32>, vector<64x120xf32>, vector<2x120xf32> -> vector<2x120xf32>
    %36 = arith.addf %32, %35 : vector<2x120xf32>
    %37 = vector.extract_strided_slice %15 {offsets = [10, 0], sizes = [2, 64], strides = [1, 1]} : vector<50x64xf32> to vector<2x64xf32>
    %c320 = arith.constant 320 : index
    %c0_19 = arith.constant 0 : index
    %38 = vector.load %arg4[%c320, %c0_19] : memref<1600x120xf32, #tpu.memory_space<vmem>>, vector<64x120xf32>
    %cst_20 = arith.constant dense<0.000000e+00> : vector<2x120xf32>
    %39 = tpu.matmul %37, %38, %cst_20 {dimension_numbers = #tpu.dot_dimension_numbers<[1], [0], [0], [1], [0, 0, 1, 1], [], []>} : vector<2x64xf32>, vector<64x120xf32>, vector<2x120xf32> -> vector<2x120xf32>
    %40 = arith.addf %36, %39 : vector<2x120xf32>
    %41 = vector.extract_strided_slice %15 {offsets = [12, 0], sizes = [2, 64], strides = [1, 1]} : vector<50x64xf32> to vector<2x64xf32>
    %c384 = arith.constant 384 : index
    %c0_21 = arith.constant 0 : index
    %42 = vector.load %arg4[%c384, %c0_21] : memref<1600x120xf32, #tpu.memory_space<vmem>>, vector<64x120xf32>
    %cst_22 = arith.constant dense<0.000000e+00> : vector<2x120xf32>
    %43 = tpu.matmul %41, %42, %cst_22 {dimension_numbers = #tpu.dot_dimension_numbers<[1], [0], [0], [1], [0, 0, 1, 1], [], []>} : vector<2x64xf32>, vector<64x120xf32>, vector<2x120xf32> -> vector<2x120xf32>
    %44 = arith.addf %40, %43 : vector<2x120xf32>
    %45 = vector.extract_strided_slice %15 {offsets = [14, 0], sizes = [2, 64], strides = [1, 1]} : vector<50x64xf32> to vector<2x64xf32>
    %c448 = arith.constant 448 : index
    %c0_23 = arith.constant 0 : index
    %46 = vector.load %arg4[%c448, %c0_23] : memref<1600x120xf32, #tpu.memory_space<vmem>>, vector<64x120xf32>
    %cst_24 = arith.constant dense<0.000000e+00> : vector<2x120xf32>
    %47 = tpu.matmul %45, %46, %cst_24 {dimension_numbers = #tpu.dot_dimension_numbers<[1], [0], [0], [1], [0, 0, 1, 1], [], []>} : vector<2x64xf32>, vector<64x120xf32>, vector<2x120xf32> -> vector<2x120xf32>
    %48 = arith.addf %44, %47 : vector<2x120xf32>
    %49 = vector.extract_strided_slice %15 {offsets = [16, 0], sizes = [2, 64], strides = [1, 1]} : vector<50x64xf32> to vector<2x64xf32>
    %c512 = arith.constant 512 : index
    %c0_25 = arith.constant 0 : index
    %50 = vector.load %arg4[%c512, %c0_25] : memref<1600x120xf32, #tpu.memory_space<vmem>>, vector<64x120xf32>
    %cst_26 = arith.constant dense<0.000000e+00> : vector<2x120xf32>
    %51 = tpu.matmul %49, %50, %cst_26 {dimension_numbers = #tpu.dot_dimension_numbers<[1], [0], [0], [1], [0, 0, 1, 1], [], []>} : vector<2x64xf32>, vector<64x120xf32>, vector<2x120xf32> -> vector<2x120xf32>
    %52 = arith.addf %48, %51 : vector<2x120xf32>
    %53 = vector.extract_strided_slice %15 {offsets = [18, 0], sizes = [2, 64], strides = [1, 1]} : vector<50x64xf32> to vector<2x64xf32>
    %c576 = arith.constant 576 : index
    %c0_27 = arith.constant 0 : index
    %54 = vector.load %arg4[%c576, %c0_27] : memref<1600x120xf32, #tpu.memory_space<vmem>>, vector<64x120xf32>
    %cst_28 = arith.constant dense<0.000000e+00> : vector<2x120xf32>
    %55 = tpu.matmul %53, %54, %cst_28 {dimension_numbers = #tpu.dot_dimension_numbers<[1], [0], [0], [1], [0, 0, 1, 1], [], []>} : vector<2x64xf32>, vector<64x120xf32>, vector<2x120xf32> -> vector<2x120xf32>
    %56 = arith.addf %52, %55 : vector<2x120xf32>
    %57 = vector.extract_strided_slice %15 {offsets = [20, 0], sizes = [2, 64], strides = [1, 1]} : vector<50x64xf32> to vector<2x64xf32>
    %c640 = arith.constant 640 : index
    %c0_29 = arith.constant 0 : index
    %58 = vector.load %arg4[%c640, %c0_29] : memref<1600x120xf32, #tpu.memory_space<vmem>>, vector<64x120xf32>
    %cst_30 = arith.constant dense<0.000000e+00> : vector<2x120xf32>
    %59 = tpu.matmul %57, %58, %cst_30 {dimension_numbers = #tpu.dot_dimension_numbers<[1], [0], [0], [1], [0, 0, 1, 1], [], []>} : vector<2x64xf32>, vector<64x120xf32>, vector<2x120xf32> -> vector<2x120xf32>
    %60 = arith.addf %56, %59 : vector<2x120xf32>
    %61 = vector.extract_strided_slice %15 {offsets = [22, 0], sizes = [2, 64], strides = [1, 1]} : vector<50x64xf32> to vector<2x64xf32>
    %c704 = arith.constant 704 : index
    %c0_31 = arith.constant 0 : index
    %62 = vector.load %arg4[%c704, %c0_31] : memref<1600x120xf32, #tpu.memory_space<vmem>>, vector<64x120xf32>
    %cst_32 = arith.constant dense<0.000000e+00> : vector<2x120xf32>
    %63 = tpu.matmul %61, %62, %cst_32 {dimension_numbers = #tpu.dot_dimension_numbers<[1], [0], [0], [1], [0, 0, 1, 1], [], []>} : vector<2x64xf32>, vector<64x120xf32>, vector<2x120xf32> -> vector<2x120xf32>
    %64 = arith.addf %60, %63 : vector<2x120xf32>
    %65 = vector.extract_strided_slice %15 {offsets = [24, 0], sizes = [2, 64], strides = [1, 1]} : vector<50x64xf32> to vector<2x64xf32>
    %c768 = arith.constant 768 : index
    %c0_33 = arith.constant 0 : index
    %66 = vector.load %arg4[%c768, %c0_33] : memref<1600x120xf32, #tpu.memory_space<vmem>>, vector<64x120xf32>
    %cst_34 = arith.constant dense<0.000000e+00> : vector<2x120xf32>
    %67 = tpu.matmul %65, %66, %cst_34 {dimension_numbers = #tpu.dot_dimension_numbers<[1], [0], [0], [1], [0, 0, 1, 1], [], []>} : vector<2x64xf32>, vector<64x120xf32>, vector<2x120xf32> -> vector<2x120xf32>
    %68 = arith.addf %64, %67 : vector<2x120xf32>
    %69 = vector.extract_strided_slice %15 {offsets = [26, 0], sizes = [2, 64], strides = [1, 1]} : vector<50x64xf32> to vector<2x64xf32>
    %c832 = arith.constant 832 : index
    %c0_35 = arith.constant 0 : index
    %70 = vector.load %arg4[%c832, %c0_35] : memref<1600x120xf32, #tpu.memory_space<vmem>>, vector<64x120xf32>
    %cst_36 = arith.constant dense<0.000000e+00> : vector<2x120xf32>
    %71 = tpu.matmul %69, %70, %cst_36 {dimension_numbers = #tpu.dot_dimension_numbers<[1], [0], [0], [1], [0, 0, 1, 1], [], []>} : vector<2x64xf32>, vector<64x120xf32>, vector<2x120xf32> -> vector<2x120xf32>
    %72 = arith.addf %68, %71 : vector<2x120xf32>
    %73 = vector.extract_strided_slice %15 {offsets = [28, 0], sizes = [2, 64], strides = [1, 1]} : vector<50x64xf32> to vector<2x64xf32>
    %c896 = arith.constant 896 : index
    %c0_37 = arith.constant 0 : index
    %74 = vector.load %arg4[%c896, %c0_37] : memref<1600x120xf32, #tpu.memory_space<vmem>>, vector<64x120xf32>
    %cst_38 = arith.constant dense<0.000000e+00> : vector<2x120xf32>
    %75 = tpu.matmul %73, %74, %cst_38 {dimension_numbers = #tpu.dot_dimension_numbers<[1], [0], [0], [1], [0, 0, 1, 1], [], []>} : vector<2x64xf32>, vector<64x120xf32>, vector<2x120xf32> -> vector<2x120xf32>
    %76 = arith.addf %72, %75 : vector<2x120xf32>
    %77 = vector.extract_strided_slice %15 {offsets = [30, 0], sizes = [2, 64], strides = [1, 1]} : vector<50x64xf32> to vector<2x64xf32>
    %c960 = arith.constant 960 : index
    %c0_39 = arith.constant 0 : index
    %78 = vector.load %arg4[%c960, %c0_39] : memref<1600x120xf32, #tpu.memory_space<vmem>>, vector<64x120xf32>
    %cst_40 = arith.constant dense<0.000000e+00> : vector<2x120xf32>
    %79 = tpu.matmul %77, %78, %cst_40 {dimension_numbers = #tpu.dot_dimension_numbers<[1], [0], [0], [1], [0, 0, 1, 1], [], []>} : vector<2x64xf32>, vector<64x120xf32>, vector<2x120xf32> -> vector<2x120xf32>
    %80 = arith.addf %76, %79 : vector<2x120xf32>
    %81 = vector.extract_strided_slice %15 {offsets = [32, 0], sizes = [2, 64], strides = [1, 1]} : vector<50x64xf32> to vector<2x64xf32>
    %c1024 = arith.constant 1024 : index
    %c0_41 = arith.constant 0 : index
    %82 = vector.load %arg4[%c1024, %c0_41] : memref<1600x120xf32, #tpu.memory_space<vmem>>, vector<64x120xf32>
    %cst_42 = arith.constant dense<0.000000e+00> : vector<2x120xf32>
    %83 = tpu.matmul %81, %82, %cst_42 {dimension_numbers = #tpu.dot_dimension_numbers<[1], [0], [0], [1], [0, 0, 1, 1], [], []>} : vector<2x64xf32>, vector<64x120xf32>, vector<2x120xf32> -> vector<2x120xf32>
    %84 = arith.addf %80, %83 : vector<2x120xf32>
    %85 = vector.extract_strided_slice %15 {offsets = [34, 0], sizes = [2, 64], strides = [1, 1]} : vector<50x64xf32> to vector<2x64xf32>
    %c1088 = arith.constant 1088 : index
    %c0_43 = arith.constant 0 : index
    %86 = vector.load %arg4[%c1088, %c0_43] : memref<1600x120xf32, #tpu.memory_space<vmem>>, vector<64x120xf32>
    %cst_44 = arith.constant dense<0.000000e+00> : vector<2x120xf32>
    %87 = tpu.matmul %85, %86, %cst_44 {dimension_numbers = #tpu.dot_dimension_numbers<[1], [0], [0], [1], [0, 0, 1, 1], [], []>} : vector<2x64xf32>, vector<64x120xf32>, vector<2x120xf32> -> vector<2x120xf32>
    %88 = arith.addf %84, %87 : vector<2x120xf32>
    %89 = vector.extract_strided_slice %15 {offsets = [36, 0], sizes = [2, 64], strides = [1, 1]} : vector<50x64xf32> to vector<2x64xf32>
    %c1152 = arith.constant 1152 : index
    %c0_45 = arith.constant 0 : index
    %90 = vector.load %arg4[%c1152, %c0_45] : memref<1600x120xf32, #tpu.memory_space<vmem>>, vector<64x120xf32>
    %cst_46 = arith.constant dense<0.000000e+00> : vector<2x120xf32>
    %91 = tpu.matmul %89, %90, %cst_46 {dimension_numbers = #tpu.dot_dimension_numbers<[1], [0], [0], [1], [0, 0, 1, 1], [], []>} : vector<2x64xf32>, vector<64x120xf32>, vector<2x120xf32> -> vector<2x120xf32>
    %92 = arith.addf %88, %91 : vector<2x120xf32>
    %93 = vector.extract_strided_slice %15 {offsets = [38, 0], sizes = [2, 64], strides = [1, 1]} : vector<50x64xf32> to vector<2x64xf32>
    %c1216 = arith.constant 1216 : index
    %c0_47 = arith.constant 0 : index
    %94 = vector.load %arg4[%c1216, %c0_47] : memref<1600x120xf32, #tpu.memory_space<vmem>>, vector<64x120xf32>
    %cst_48 = arith.constant dense<0.000000e+00> : vector<2x120xf32>
    %95 = tpu.matmul %93, %94, %cst_48 {dimension_numbers = #tpu.dot_dimension_numbers<[1], [0], [0], [1], [0, 0, 1, 1], [], []>} : vector<2x64xf32>, vector<64x120xf32>, vector<2x120xf32> -> vector<2x120xf32>
    %96 = arith.addf %92, %95 : vector<2x120xf32>
    %97 = vector.extract_strided_slice %15 {offsets = [40, 0], sizes = [2, 64], strides = [1, 1]} : vector<50x64xf32> to vector<2x64xf32>
    %c1280 = arith.constant 1280 : index
    %c0_49 = arith.constant 0 : index
    %98 = vector.load %arg4[%c1280, %c0_49] : memref<1600x120xf32, #tpu.memory_space<vmem>>, vector<64x120xf32>
    %cst_50 = arith.constant dense<0.000000e+00> : vector<2x120xf32>
    %99 = tpu.matmul %97, %98, %cst_50 {dimension_numbers = #tpu.dot_dimension_numbers<[1], [0], [0], [1], [0, 0, 1, 1], [], []>} : vector<2x64xf32>, vector<64x120xf32>, vector<2x120xf32> -> vector<2x120xf32>
    %100 = arith.addf %96, %99 : vector<2x120xf32>
    %101 = vector.extract_strided_slice %15 {offsets = [42, 0], sizes = [2, 64], strides = [1, 1]} : vector<50x64xf32> to vector<2x64xf32>
    %c1344 = arith.constant 1344 : index
    %c0_51 = arith.constant 0 : index
    %102 = vector.load %arg4[%c1344, %c0_51] : memref<1600x120xf32, #tpu.memory_space<vmem>>, vector<64x120xf32>
    %cst_52 = arith.constant dense<0.000000e+00> : vector<2x120xf32>
    %103 = tpu.matmul %101, %102, %cst_52 {dimension_numbers = #tpu.dot_dimension_numbers<[1], [0], [0], [1], [0, 0, 1, 1], [], []>} : vector<2x64xf32>, vector<64x120xf32>, vector<2x120xf32> -> vector<2x120xf32>
    %104 = arith.addf %100, %103 : vector<2x120xf32>
    %105 = vector.extract_strided_slice %15 {offsets = [44, 0], sizes = [2, 64], strides = [1, 1]} : vector<50x64xf32> to vector<2x64xf32>
    %c1408 = arith.constant 1408 : index
    %c0_53 = arith.constant 0 : index
    %106 = vector.load %arg4[%c1408, %c0_53] : memref<1600x120xf32, #tpu.memory_space<vmem>>, vector<64x120xf32>
    %cst_54 = arith.constant dense<0.000000e+00> : vector<2x120xf32>
    %107 = tpu.matmul %105, %106, %cst_54 {dimension_numbers = #tpu.dot_dimension_numbers<[1], [0], [0], [1], [0, 0, 1, 1], [], []>} : vector<2x64xf32>, vector<64x120xf32>, vector<2x120xf32> -> vector<2x120xf32>
    %108 = arith.addf %104, %107 : vector<2x120xf32>
    %109 = vector.extract_strided_slice %15 {offsets = [46, 0], sizes = [2, 64], strides = [1, 1]} : vector<50x64xf32> to vector<2x64xf32>
    %c1472 = arith.constant 1472 : index
    %c0_55 = arith.constant 0 : index
    %110 = vector.load %arg4[%c1472, %c0_55] : memref<1600x120xf32, #tpu.memory_space<vmem>>, vector<64x120xf32>
    %cst_56 = arith.constant dense<0.000000e+00> : vector<2x120xf32>
    %111 = tpu.matmul %109, %110, %cst_56 {dimension_numbers = #tpu.dot_dimension_numbers<[1], [0], [0], [1], [0, 0, 1, 1], [], []>} : vector<2x64xf32>, vector<64x120xf32>, vector<2x120xf32> -> vector<2x120xf32>
    %112 = arith.addf %108, %111 : vector<2x120xf32>
    %113 = vector.extract_strided_slice %15 {offsets = [48, 0], sizes = [2, 64], strides = [1, 1]} : vector<50x64xf32> to vector<2x64xf32>
    %c1536 = arith.constant 1536 : index
    %c0_57 = arith.constant 0 : index
    %114 = vector.load %arg4[%c1536, %c0_57] : memref<1600x120xf32, #tpu.memory_space<vmem>>, vector<64x120xf32>
    %cst_58 = arith.constant dense<0.000000e+00> : vector<2x120xf32>
    %115 = tpu.matmul %113, %114, %cst_58 {dimension_numbers = #tpu.dot_dimension_numbers<[1], [0], [0], [1], [0, 0, 1, 1], [], []>} : vector<2x64xf32>, vector<64x120xf32>, vector<2x120xf32> -> vector<2x120xf32>
    %116 = arith.addf %112, %115 : vector<2x120xf32>
    %c0_59 = arith.constant 0 : index
    %c0_60 = arith.constant 0 : index
    %117 = vector.load %arg5[%c0_59, %c0_60] : memref<1x120xf32, #tpu.memory_space<vmem>>, vector<1x120xf32>
    %118 = vector.broadcast %117 : vector<1x120xf32> to vector<2x120xf32>
    %119 = arith.addf %116, %118 : vector<2x120xf32>
    %c0_61 = arith.constant 0 : index
    %c0_62 = arith.constant 0 : index
    %120 = vector.load %arg6[%c0_61, %c0_62] : memref<120x128xf32, #tpu.memory_space<vmem>>, vector<120x128xf32>
    %cst_63 = arith.constant dense<0.000000e+00> : vector<2x128xf32>
    %121 = tpu.matmul %119, %120, %cst_63 {dimension_numbers = #tpu.dot_dimension_numbers<[1], [0], [0], [1], [0, 0, 1, 1], [], []>} : vector<2x120xf32>, vector<120x128xf32>, vector<2x128xf32> -> vector<2x128xf32>
    %c0_64 = arith.constant 0 : index
    %c0_65 = arith.constant 0 : index
    %122 = vector.load %arg7[%c0_64, %c0_65] : memref<1x128xf32, #tpu.memory_space<vmem>>, vector<1x128xf32>
    %123 = vector.broadcast %122 : vector<1x128xf32> to vector<2x128xf32>
    %124 = arith.addf %121, %123 : vector<2x128xf32>
    %cst_66 = arith.constant dense<0xFF800000> : vector<2xf32>
    %125 = vector.multi_reduction <maximumf>, %124, %cst_66 [1] : vector<2x128xf32> to vector<2xf32>
    %126 = vector.shape_cast %125 : vector<2xf32> to vector<2x1xf32>
    %127 = vector.broadcast %126 : vector<2x1xf32> to vector<2x128xf32>
    %128 = arith.subf %124, %127 : vector<2x128xf32>
    %129 = math.exp %128 : vector<2x128xf32>
    %cst_67 = arith.constant dense<0.000000e+00> : vector<2xf32>
    %130 = vector.multi_reduction <add>, %129, %cst_67 [1] : vector<2x128xf32> to vector<2xf32>
    %131 = vector.shape_cast %130 : vector<2xf32> to vector<2x1xf32>
    %132 = math.log %131 : vector<2x1xf32>
    %133 = vector.broadcast %132 : vector<2x1xf32> to vector<2x128xf32>
    %134 = arith.subf %128, %133 : vector<2x128xf32>
    %c0_68 = arith.constant 0 : index
    %c0_69 = arith.constant 0 : index
    %c0_70 = arith.constant 0 : index
    %135 = vector.load %arg8[%c0_68, %c0_69, %c0_70] : memref<1x2x128xf32, #tpu.memory_space<vmem>>, vector<1x2x128xf32>
    %136 = vector.shape_cast %135 : vector<1x2x128xf32> to vector<2x128xf32>
    %137 = vector.shape_cast %134 : vector<2x128xf32> to vector<1x2x128xf32>
    tpu.vector_store %arg8[%c0_68, %c0_69, %c0_70], %137 {strides = array<i32>} : memref<1x2x128xf32, #tpu.memory_space<vmem>>, vector<1x2x128xf32>,
    return
  }
  func.func @transform_0(%arg0: i32) -> (i32, i32, i32) {
    %c0_i32 = arith.constant 0 : i32
    %c0_i32_0 = arith.constant 0 : i32
    %c0_i32_1 = arith.constant 0 : i32
    return %arg0, %c0_i32, %c0_i32_0 : i32, i32, i32
  }
  func.func @transform_1(%arg0: i32) -> (i32, i32) {
    %c0_i32 = arith.constant 0 : i32
    %c0_i32_0 = arith.constant 0 : i32
    %c0_i32_1 = arith.constant 0 : i32
    return %c0_i32, %c0_i32_0 : i32, i32
  }
  func.func @transform_2(%arg0: i32) -> (i32, i32) {
    %c0_i32 = arith.constant 0 : i32
    %c0_i32_0 = arith.constant 0 : i32
    %c0_i32_1 = arith.constant 0 : i32
    return %c0_i32, %c0_i32_0 : i32, i32
  }
  func.func @transform_3(%arg0: i32) -> (i32, i32) {
    %c0_i32 = arith.constant 0 : i32
    %c0_i32_0 = arith.constant 0 : i32
    %c0_i32_1 = arith.constant 0 : i32
    return %c0_i32, %c0_i32_0 : i32, i32
  }
  func.func @transform_4(%arg0: i32) -> (i32, i32) {
    %c0_i32 = arith.constant 0 : i32
    %c0_i32_0 = arith.constant 0 : i32
    %c0_i32_1 = arith.constant 0 : i32
    return %c0_i32, %c0_i32_0 : i32, i32
  }
  func.func @transform_5(%arg0: i32) -> (i32, i32) {
    %c0_i32 = arith.constant 0 : i32
    %c0_i32_0 = arith.constant 0 : i32
    %c0_i32_1 = arith.constant 0 : i32
    return %c0_i32, %c0_i32_0 : i32, i32
  }
  func.func @transform_6(%arg0: i32) -> (i32, i32) {
    %c0_i32 = arith.constant 0 : i32
    %c0_i32_0 = arith.constant 0 : i32
    %c0_i32_1 = arith.constant 0 : i32
    return %c0_i32, %c0_i32_0 : i32, i32
  }
  func.func @transform_7(%arg0: i32) -> (i32, i32, i32) {
    %c0_i32 = arith.constant 0 : i32
    %c0_i32_0 = arith.constant 0 : i32
    %c0_i32_1 = arith.constant 0 : i32
    return %arg0, %c0_i32, %c0_i32_0 : i32, i32, i32
  }
}

</mosaic_0001>

<llo_original>
// kernel: net_forward.2
$region0: #{net_forward.2}
  #allocation0 [shape = 'u32[]', space=smem, size = 0x4, offset = 0x4, fixed_abs, tag = 'smem constant byte address 0x4 - core index']
  #allocation1 [shape = 'u32[72,128]{1,0:T(1,128)}', space=vmem, size = 0x9000, scoped, tag = 'internal scratch']
  %s0 = inlined_call_operand.vmem [shape: f32[1,1568,75], index: 0, kind: input, shape index: {}]
  %s1 = inlined_call_operand.vmem [shape: f32[75,32], index: 1, kind: input, shape index: {}]
  %s2 = inlined_call_operand.vmem [shape: f32[1,32], index: 2, kind: input, shape index: {}]
  %s3 = inlined_call_operand.vmem [shape: f32[1,392,32], index: 3, kind: output, shape index: {}]
  %s4 = sld [smem:[#allocation0]]
  $region22: #{net_forward.2} parent=0
    _
  %s6 = ssub.s32 1, %s4
  %s7 = scalar_select 0, %s6, %s4
  // Predicated region
  $region2: #{net_forward.2} parent=0 // pred_check
    _
  $region3: #{net_forward.2} parent=0 // pred_check_branch
    %9 = sbr.rel (0) target = $region5
  $region4: #{net_forward.2} parent=0 // pred_region
    _
  $region5: #{net_forward.2} parent=0 // pred_fallthru
    _
  // Predicated region
  $region6: #{net_forward.2} parent=0 // pred_check
    _
  $region7: #{net_forward.2} parent=0 // pred_check_branch
    %11 = sbr.rel (0) target = $region9
  $region8: #{net_forward.2} parent=0 // pred_region
    _
  $region9: #{net_forward.2} parent=0 // pred_fallthru
    _
  // Predicated region
  $region10: #{net_forward.2} parent=0 // pred_check
    _
  $region11: #{net_forward.2} parent=0 // pred_check_branch
    %13 = sbr.rel (0) target = $region13
  $region12: #{net_forward.2} parent=0 // pred_region
    _
  $region13: #{net_forward.2} parent=0 // pred_fallthru
    _
  %v14 = vld [vmem:[%s0] sm:$0xff]
  %v15 = vld [vmem:[%s0 + $0x8] sm:$0xff]
  %v16 = vld [vmem:[%s0 + $0x10] sm:$0xff]
  %v17 = vld [vmem:[%s0 + $0x18] sm:$0xff]
  %v18 = vld [vmem:[%s0 + $0x20] sm:$0xff]
  %v19 = vld [vmem:[%s0 + $0x28] sm:$0xff]
  %v20 = vld [vmem:[%s0 + $0x30] sm:$0xff]
  %v21 = vld [vmem:[%s0 + $0x38] sm:$0xff]
  %v22 = vld [vmem:[%s0 + $0x40] sm:$0xff]
  %v23 = vld [vmem:[%s0 + $0x48] sm:$0xff]
  %v24 = vld [vmem:[%s0 + $0x50] sm:$0xff]
  %v25 = vld [vmem:[%s0 + $0x58] sm:$0xff]
  %v26 = vld [vmem:[%s0 + $0x60] sm:$0xff]
  %v27 = vld [vmem:[%s0 + $0x68] sm:$0xff]
  %v28 = vld [vmem:[%s0 + $0x70] sm:$0xff]
  %v29 = vld [vmem:[%s0 + $0x78] sm:$0xff]
  %v30 = vld [vmem:[%s0 + $0x80] sm:$0xff]
  %v31 = vld [vmem:[%s0 + $0x88] sm:$0xff]
  %v32 = vld [vmem:[%s0 + $0x90] sm:$0xff]
  %v33 = vld [vmem:[%s0 + $0x98] sm:$0xff]
  %v34 = vld [vmem:[%s0 + $0xa0] sm:$0xff]
  %v35 = vld [vmem:[%s0 + $0xa8] sm:$0xff]
  %v36 = vld [vmem:[%s0 + $0xb0] sm:$0xff]
  %v37 = vld [vmem:[%s0 + $0xb8] sm:$0xff]
  %v38 = vld [vmem:[%s0 + $0xc0] sm:$0xff]
  %v39 = vld [vmem:[%s0 + $0xc8] sm:$0xff]
  %v40 = vld [vmem:[%s0 + $0xd0] sm:$0xff]
  %v41 = vld [vmem:[%s0 + $0xd8] sm:$0xff]
  %v42 = vld [vmem:[%s0 + $0xe0] sm:$0xff]
  %v43 = vld [vmem:[%s0 + $0xe8] sm:$0xff]
  %v44 = vld [vmem:[%s0 + $0xf0] sm:$0xff]
  %v45 = vld [vmem:[%s0 + $0xf8] sm:$0xff]
  %v46 = vld [vmem:[%s0 + $0x100] sm:$0xff]
  %v47 = vld [vmem:[%s0 + $0x108] sm:$0xff]
  %v48 = vld [vmem:[%s0 + $0x110] sm:$0xff]
  %v49 = vld [vmem:[%s0 + $0x118] sm:$0xff]
  %v50 = vld [vmem:[%s0 + $0x120] sm:$0xff]
  %v51 = vld [vmem:[%s0 + $0x128] sm:$0xff]
  %v52 = vld [vmem:[%s0 + $0x130] sm:$0xff]
  %v53 = vld [vmem:[%s0 + $0x138] sm:$0xff]
  %v54 = vld [vmem:[%s0 + $0x140] sm:$0xff]
  %v55 = vld [vmem:[%s0 + $0x148] sm:$0xff]
  %v56 = vld [vmem:[%s0 + $0x150] sm:$0xff]
  %v57 = vld [vmem:[%s0 + $0x158] sm:$0xff]
  %v58 = vld [vmem:[%s0 + $0x160] sm:$0xff]
  %v59 = vld [vmem:[%s0 + $0x168] sm:$0xff]
  %v60 = vld [vmem:[%s0 + $0x170] sm:$0xff]
  %v61 = vld [vmem:[%s0 + $0x178] sm:$0xff]
  %v62 = vld [vmem:[%s0 + $0x180] sm:$0xff]
  %v63 = vld [vmem:[%s0 + $0x188] sm:$0xff]
  %v64 = vld [vmem:[%s0 + $0x190] sm:$0xff]
  %v65 = vld [vmem:[%s0 + $0x198] sm:$0xff]
  %v66 = vld [vmem:[%s0 + $0x1a0] sm:$0xff]
  %v67 = vld [vmem:[%s0 + $0x1a8] sm:$0xff]
  %v68 = vld [vmem:[%s0 + $0x1b0] sm:$0xff]
  %v69 = vld [vmem:[%s0 + $0x1b8] sm:$0xff]
  %v70 = vld [vmem:[%s0 + $0x1c0] sm:$0xff]
  %v71 = vld [vmem:[%s0 + $0x1c8] sm:$0xff]
  %v72 = vld [vmem:[%s0 + $0x1d0] sm:$0xff]
  %v73 = vld [vmem:[%s0 + $0x1d8] sm:$0xff]
  %v74 = vld [vmem:[%s0 + $0x1e0] sm:$0xff]
  %v75 = vld [vmem:[%s0 + $0x1e8] sm:$0xff]
  %v76 = vld [vmem:[%s0 + $0x1f0] sm:$0xff]
  %v77 = vld [vmem:[%s0 + $0x1f8] sm:$0xff]
  %v78 = vld [vmem:[%s0 + $0x200] sm:$0xff]
  %v79 = vld [vmem:[%s0 + $0x208] sm:$0xff]
  %v80 = vld [vmem:[%s0 + $0x210] sm:$0xff]
  %v81 = vld [vmem:[%s0 + $0x218] sm:$0xff]
  %v82 = vld [vmem:[%s0 + $0x220] sm:$0xff]
  %v83 = vld [vmem:[%s0 + $0x228] sm:$0xff]
  %v84 = vld [vmem:[%s0 + $0x230] sm:$0xff]
  %v85 = vld [vmem:[%s0 + $0x238] sm:$0xff]
  %v86 = vld [vmem:[%s0 + $0x240] sm:$0xff]
  %v87 = vld [vmem:[%s0 + $0x248] sm:$0xff]
  %v88 = vld [vmem:[%s0 + $0x250] sm:$0xff]
  %v89 = vld [vmem:[%s0 + $0x258] sm:$0xff]
  %v90 = vld [vmem:[%s0 + $0x260] sm:$0xff]
  %v91 = vld [vmem:[%s0 + $0x268] sm:$0xff]
  %v92 = vld [vmem:[%s0 + $0x270] sm:$0xff]
  %v93 = vld [vmem:[%s0 + $0x278] sm:$0xff]
  %v94 = vld [vmem:[%s0 + $0x280] sm:$0xff]
  %v95 = vld [vmem:[%s0 + $0x288] sm:$0xff]
  %v96 = vld [vmem:[%s0 + $0x290] sm:$0xff]
  %v97 = vld [vmem:[%s0 + $0x298] sm:$0xff]
  %v98 = vld [vmem:[%s0 + $0x2a0] sm:$0xff]
  %v99 = vld [vmem:[%s0 + $0x2a8] sm:$0xff]
  %v100 = vld [vmem:[%s0 + $0x2b0] sm:$0xff]
  %v101 = vld [vmem:[%s0 + $0x2b8] sm:$0xff]
  %v102 = vld [vmem:[%s0 + $0x2c0] sm:$0xff]
  %v103 = vld [vmem:[%s0 + $0x2c8] sm:$0xff]
  %v104 = vld [vmem:[%s0 + $0x2d0] sm:$0xff]
  %v105 = vld [vmem:[%s0 + $0x2d8] sm:$0xff]
  %v106 = vld [vmem:[%s0 + $0x2e0] sm:$0xff]
  %v107 = vld [vmem:[%s0 + $0x2e8] sm:$0xff]
  %v108 = vld [vmem:[%s0 + $0x2f0] sm:$0xff]
  %v109 = vld [vmem:[%s0 + $0x2f8] sm:$0xff]
  %v110 = vld [vmem:[%s0 + $0x300] sm:$0xff]
  %v111 = vld [vmem:[%s0 + $0x308] sm:$0xff]
  %v112 = vld [vmem:[%s0 + $0x310] sm:$0xff]
  %v113 = vld [vmem:[%s0 + $0x318] sm:$0xff]
  %v114 = vld [vmem:[%s0 + $0x320] sm:$0xff]
  %v115 = vld [vmem:[%s0 + $0x328] sm:$0xff]
  %v116 = vld [vmem:[%s0 + $0x330] sm:$0xff]
  %v117 = vld [vmem:[%s0 + $0x338] sm:$0xff]
  %v118 = vld [vmem:[%s0 + $0x340] sm:$0xff]
  %v119 = vld [vmem:[%s0 + $0x348] sm:$0xff]
  %v120 = vld [vmem:[%s0 + $0x350] sm:$0xff]
  %v121 = vld [vmem:[%s0 + $0x358] sm:$0xff]
  %v122 = vld [vmem:[%s0 + $0x360] sm:$0xff]
  %v123 = vld [vmem:[%s0 + $0x368] sm:$0xff]
  %v124 = vld [vmem:[%s0 + $0x370] sm:$0xff]
  %v125 = vld [vmem:[%s0 + $0x378] sm:$0xff]
  %v126 = vld [vmem:[%s0 + $0x380] sm:$0xff]
  %v127 = vld [vmem:[%s0 + $0x388] sm:$0xff]
  %v128 = vld [vmem:[%s0 + $0x390] sm:$0xff]
  %v129 = vld [vmem:[%s0 + $0x398] sm:$0xff]
  %v130 = vld [vmem:[%s0 + $0x3a0] sm:$0xff]
  %v131 = vld [vmem:[%s0 + $0x3a8] sm:$0xff]
  %v132 = vld [vmem:[%s0 + $0x3b0] sm:$0xff]
  %v133 = vld [vmem:[%s0 + $0x3b8] sm:$0xff]
  %v134 = vld [vmem:[%s0 + $0x3c0] sm:$0xff]
  %v135 = vld [vmem:[%s0 + $0x3c8] sm:$0xff]
  %v136 = vld [vmem:[%s0 + $0x3d0] sm:$0xff]
  %v137 = vld [vmem:[%s0 + $0x3d8] sm:$0xff]
  %v138 = vld [vmem:[%s0 + $0x3e0] sm:$0xff]
  %v139 = vld [vmem:[%s0 + $0x3e8] sm:$0xff]
  %v140 = vld [vmem:[%s0 + $0x3f0] sm:$0xff]
  %v141 = vld [vmem:[%s0 + $0x3f8] sm:$0xff]
  %v142 = vld [vmem:[%s0 + $0x400] sm:$0xff]
  %v143 = vld [vmem:[%s0 + $0x408] sm:$0xff]
  %v144 = vld [vmem:[%s0 + $0x410] sm:$0xff]
  %v145 = vld [vmem:[%s0 + $0x418] sm:$0xff]
  %v146 = vld [vmem:[%s0 + $0x420] sm:$0xff]
  %v147 = vld [vmem:[%s0 + $0x428] sm:$0xff]
  %v148 = vld [vmem:[%s0 + $0x430] sm:$0xff]
  %v149 = vld [vmem:[%s0 + $0x438] sm:$0xff]
  %v150 = vld [vmem:[%s0 + $0x440] sm:$0xff]
  %v151 = vld [vmem:[%s0 + $0x448] sm:$0xff]
  %v152 = vld [vmem:[%s0 + $0x450] sm:$0xff]
  %v153 = vld [vmem:[%s0 + $0x458] sm:$0xff]
  %v154 = vld [vmem:[%s0 + $0x460] sm:$0xff]
  %v155 = vld [vmem:[%s0 + $0x468] sm:$0xff]
  %v156 = vld [vmem:[%s0 + $0x470] sm:$0xff]
  %v157 = vld [vmem:[%s0 + $0x478] sm:$0xff]
  %v158 = vld [vmem:[%s0 + $0x480] sm:$0xff]
  %v159 = vld [vmem:[%s0 + $0x488] sm:$0xff]
  %v160 = vld [vmem:[%s0 + $0x490] sm:$0xff]
  %v161 = vld [vmem:[%s0 + $0x498] sm:$0xff]
  %v162 = vld [vmem:[%s0 + $0x4a0] sm:$0xff]
  %v163 = vld [vmem:[%s0 + $0x4a8] sm:$0xff]
  %v164 = vld [vmem:[%s0 + $0x4b0] sm:$0xff]
  %v165 = vld [vmem:[%s0 + $0x4b8] sm:$0xff]
  %v166 = vld [vmem:[%s0 + $0x4c0] sm:$0xff]
  %v167 = vld [vmem:[%s0 + $0x4c8] sm:$0xff]
  %v168 = vld [vmem:[%s0 + $0x4d0] sm:$0xff]
  %v169 = vld [vmem:[%s0 + $0x4d8] sm:$0xff]
  %v170 = vld [vmem:[%s0 + $0x4e0] sm:$0xff]
  %v171 = vld [vmem:[%s0 + $0x4e8] sm:$0xff]
  %v172 = vld [vmem:[%s0 + $0x4f0] sm:$0xff]
  %v173 = vld [vmem:[%s0 + $0x4f8] sm:$0xff]
  %v174 = vld [vmem:[%s0 + $0x500] sm:$0xff]
  %v175 = vld [vmem:[%s0 + $0x508] sm:$0xff]
  %v176 = vld [vmem:[%s0 + $0x510] sm:$0xff]
  %v177 = vld [vmem:[%s0 + $0x518] sm:$0xff]
  %v178 = vld [vmem:[%s0 + $0x520] sm:$0xff]
  %v179 = vld [vmem:[%s0 + $0x528] sm:$0xff]
  %v180 = vld [vmem:[%s0 + $0x530] sm:$0xff]
  %v181 = vld [vmem:[%s0 + $0x538] sm:$0xff]
  %v182 = vld [vmem:[%s0 + $0x540] sm:$0xff]
  %v183 = vld [vmem:[%s0 + $0x548] sm:$0xff]
  %v184 = vld [vmem:[%s0 + $0x550] sm:$0xff]
  %v185 = vld [vmem:[%s0 + $0x558] sm:$0xff]
  %v186 = vld [vmem:[%s0 + $0x560] sm:$0xff]
  %v187 = vld [vmem:[%s0 + $0x568] sm:$0xff]
  %v188 = vld [vmem:[%s0 + $0x570] sm:$0xff]
  %v189 = vld [vmem:[%s0 + $0x578] sm:$0xff]
  %v190 = vld [vmem:[%s0 + $0x580] sm:$0xff]
  %v191 = vld [vmem:[%s0 + $0x588] sm:$0xff]
  %v192 = vld [vmem:[%s0 + $0x590] sm:$0xff]
  %v193 = vld [vmem:[%s0 + $0x598] sm:$0xff]
  %v194 = vld [vmem:[%s0 + $0x5a0] sm:$0xff]
  %v195 = vld [vmem:[%s0 + $0x5a8] sm:$0xff]
  %v196 = vld [vmem:[%s0 + $0x5b0] sm:$0xff]
  %v197 = vld [vmem:[%s0 + $0x5b8] sm:$0xff]
  %v198 = vld [vmem:[%s0 + $0x5c0] sm:$0xff]
  %v199 = vld [vmem:[%s0 + $0x5c8] sm:$0xff]
  %v200 = vld [vmem:[%s0 + $0x5d0] sm:$0xff]
  %v201 = vld [vmem:[%s0 + $0x5d8] sm:$0xff]
  %v202 = vld [vmem:[%s0 + $0x5e0] sm:$0xff]
  %v203 = vld [vmem:[%s0 + $0x5e8] sm:$0xff]
  %v204 = vld [vmem:[%s0 + $0x5f0] sm:$0xff]
  %v205 = vld [vmem:[%s0 + $0x5f8] sm:$0xff]
  %v206 = vld [vmem:[%s0 + $0x600] sm:$0xff]
  %v207 = vld [vmem:[%s0 + $0x608] sm:$0xff]
  %v208 = vld [vmem:[%s0 + $0x610] sm:$0xff]
  %v209 = vld [vmem:[%s0 + $0x618] sm:$0xff]
  %v210 = vld [vmem:[%s1] sm:$0xff]
  %v211 = vld [vmem:[%s1 + $0x8] sm:$0xff]
  %v212 = vld [vmem:[%s1 + $0x10] sm:$0xff]
  %v213 = vld [vmem:[%s1 + $0x18] sm:$0xff]
  %v214 = vld [vmem:[%s1 + $0x20] sm:$0xff]
  %v215 = vld [vmem:[%s1 + $0x28] sm:$0xff]
  %v216 = vld [vmem:[%s1 + $0x30] sm:$0xff]
  %v217 = vld [vmem:[%s1 + $0x38] sm:$0xff]
  %v218 = vld [vmem:[%s1 + $0x40] sm:$0xff]
  %v219 = vld [vmem:[%s1 + $0x48] sm:$0x7]
  %vm220 = vcmask 613376
  %v222 = vsel %vm220, %v14, 0
  %v225 = vsel %vm220, %v15, 0
  %v228 = vsel %vm220, %v16, 0
  %v231 = vsel %vm220, %v17, 0
  %v234 = vsel %vm220, %v18, 0
  %v237 = vsel %vm220, %v19, 0
  %v240 = vsel %vm220, %v20, 0
  %v243 = vsel %vm220, %v21, 0
  %v246 = vsel %vm220, %v22, 0
  %v249 = vsel %vm220, %v23, 0
  %v252 = vsel %vm220, %v24, 0
  %v255 = vsel %vm220, %v25, 0
  %v258 = vsel %vm220, %v26, 0
  %v261 = vsel %vm220, %v27, 0
  %v264 = vsel %vm220, %v28, 0
  %v267 = vsel %vm220, %v29, 0
  %v270 = vsel %vm220, %v30, 0
  %v273 = vsel %vm220, %v31, 0
  %v276 = vsel %vm220, %v32, 0
  %v279 = vsel %vm220, %v33, 0
  %v282 = vsel %vm220, %v34, 0
  %v285 = vsel %vm220, %v35, 0
  %v288 = vsel %vm220, %v36, 0
  %v291 = vsel %vm220, %v37, 0
  %v294 = vsel %vm220, %v38, 0
  %v297 = vsel %vm220, %v39, 0
  %v300 = vsel %vm220, %v40, 0
  %v303 = vsel %vm220, %v41, 0
  %v306 = vsel %vm220, %v42, 0
  %v309 = vsel %vm220, %v43, 0
  %v312 = vsel %vm220, %v44, 0
  %v315 = vsel %vm220, %v45, 0
  %v318 = vsel %vm220, %v46, 0
  %v321 = vsel %vm220, %v47, 0
  %v324 = vsel %vm220, %v48, 0
  %v327 = vsel %vm220, %v49, 0
  %v330 = vsel %vm220, %v50, 0
  %v333 = vsel %vm220, %v51, 0
  %v336 = vsel %vm220, %v52, 0
  %v339 = vsel %vm220, %v53, 0
  %v342 = vsel %vm220, %v54, 0
  %v345 = vsel %vm220, %v55, 0
  %v348 = vsel %vm220, %v56, 0
  %v351 = vsel %vm220, %v57, 0
  %v354 = vsel %vm220, %v58, 0
  %v357 = vsel %vm220, %v59, 0
  %v360 = vsel %vm220, %v60, 0
  %v363 = vsel %vm220, %v61, 0
  %v366 = vsel %vm220, %v62, 0
  %v369 = vsel %vm220, %v63, 0
  %v372 = vsel %vm220, %v64, 0
  %v375 = vsel %vm220, %v65, 0
  %v378 = vsel %vm220, %v66, 0
  %v381 = vsel %vm220, %v67, 0
  %v384 = vsel %vm220, %v68, 0
  %v387 = vsel %vm220, %v69, 0
  %v390 = vsel %vm220, %v70, 0
  %v393 = vsel %vm220, %v71, 0
  %v396 = vsel %vm220, %v72, 0
  %v399 = vsel %vm220, %v73, 0
  %v402 = vsel %vm220, %v74, 0
  %v405 = vsel %vm220, %v75, 0
  %v408 = vsel %vm220, %v76, 0
  %v411 = vsel %vm220, %v77, 0
  %v414 = vsel %vm220, %v78, 0
  %v417 = vsel %vm220, %v79, 0
  %v420 = vsel %vm220, %v80, 0
  %v423 = vsel %vm220, %v81, 0
  %v426 = vsel %vm220, %v82, 0
  %v429 = vsel %vm220, %v83, 0
  %v432 = vsel %vm220, %v84, 0
  %v435 = vsel %vm220, %v85, 0
  %v438 = vsel %vm220, %v86, 0
  %v441 = vsel %vm220, %v87, 0
  %v444 = vsel %vm220, %v88, 0
  %v447 = vsel %vm220, %v89, 0
  %v450 = vsel %vm220, %v90, 0
  %v453 = vsel %vm220, %v91, 0
  %v456 = vsel %vm220, %v92, 0
  %v459 = vsel %vm220, %v93, 0
  %v462 = vsel %vm220, %v94, 0
  %v465 = vsel %vm220, %v95, 0
  %v468 = vsel %vm220, %v96, 0
  %v471 = vsel %vm220, %v97, 0
  %v474 = vsel %vm220, %v98, 0
  %v477 = vsel %vm220, %v99, 0
  %v480 = vsel %vm220, %v100, 0
  %v483 = vsel %vm220, %v101, 0
  %v486 = vsel %vm220, %v102, 0
  %v489 = vsel %vm220, %v103, 0
  %v492 = vsel %vm220, %v104, 0
  %v495 = vsel %vm220, %v105, 0
  %v498 = vsel %vm220, %v106, 0
  %v501 = vsel %vm220, %v107, 0
  %v504 = vsel %vm220, %v108, 0
  %v507 = vsel %vm220, %v109, 0
  %v510 = vsel %vm220, %v110, 0
  %v513 = vsel %vm220, %v111, 0
  %v516 = vsel %vm220, %v112, 0
  %v519 = vsel %vm220, %v113, 0
  %v522 = vsel %vm220, %v114, 0
  %v525 = vsel %vm220, %v115, 0
  %v528 = vsel %vm220, %v116, 0
  %v531 = vsel %vm220, %v117, 0
  %v534 = vsel %vm220, %v118, 0
  %v537 = vsel %vm220, %v119, 0
  %v540 = vsel %vm220, %v120, 0
  %v543 = vsel %vm220, %v121, 0
  %v546 = vsel %vm220, %v122, 0
  %v549 = vsel %vm220, %v123, 0
  %v552 = vsel %vm220, %v124, 0
  %v555 = vsel %vm220, %v125, 0
  %v558 = vsel %vm220, %v126, 0
  %v561 = vsel %vm220, %v127, 0
  %v564 = vsel %vm220, %v128, 0
  %v567 = vsel %vm220, %v129, 0
  %v570 = vsel %vm220, %v130, 0
  %v573 = vsel %vm220, %v131, 0
  %v576 = vsel %vm220, %v132, 0
  %v579 = vsel %vm220, %v133, 0
  %v582 = vsel %vm220, %v134, 0
  %v585 = vsel %vm220, %v135, 0
  %v588 = vsel %vm220, %v136, 0
  %v591 = vsel %vm220, %v137, 0
  %v594 = vsel %vm220, %v138, 0
  %v597 = vsel %vm220, %v139, 0
  %v600 = vsel %vm220, %v140, 0
  %v603 = vsel %vm220, %v141, 0
  %v606 = vsel %vm220, %v142, 0
  %v609 = vsel %vm220, %v143, 0
  %v612 = vsel %vm220, %v144, 0
  %v615 = vsel %vm220, %v145, 0
  %v618 = vsel %vm220, %v146, 0
  %v621 = vsel %vm220, %v147, 0
  %v624 = vsel %vm220, %v148, 0
  %v627 = vsel %vm220, %v149, 0
  %v630 = vsel %vm220, %v150, 0
  %v633 = vsel %vm220, %v151, 0
  %v636 = vsel %vm220, %v152, 0
  %v639 = vsel %vm220, %v153, 0
  %v642 = vsel %vm220, %v154, 0
  %v645 = vsel %vm220, %v155, 0
  %v648 = vsel %vm220, %v156, 0
  %v651 = vsel %vm220, %v157, 0
  %v654 = vsel %vm220, %v158, 0
  %v657 = vsel %vm220, %v159, 0
  %v660 = vsel %vm220, %v160, 0
  %v663 = vsel %vm220, %v161, 0
  %v666 = vsel %vm220, %v162, 0
  %v669 = vsel %vm220, %v163, 0
  %v672 = vsel %vm220, %v164, 0
  %v675 = vsel %vm220, %v165, 0
  %v678 = vsel %vm220, %v166, 0
  %v681 = vsel %vm220, %v167, 0
  %v684 = vsel %vm220, %v168, 0
  %v687 = vsel %vm220, %v169, 0
  %v690 = vsel %vm220, %v170, 0
  %v693 = vsel %vm220, %v171, 0
  %v696 = vsel %vm220, %v172, 0
  %v699 = vsel %vm220, %v173, 0
  %v702 = vsel %vm220, %v174, 0
  %v705 = vsel %vm220, %v175, 0
  %v708 = vsel %vm220, %v176, 0
  %v711 = vsel %vm220, %v177, 0
  %v714 = vsel %vm220, %v178, 0
  %v717 = vsel %vm220, %v179, 0
  %v720 = vsel %vm220, %v180, 0
  %v723 = vsel %vm220, %v181, 0
  %v726 = vsel %vm220, %v182, 0
  %v729 = vsel %vm220, %v183, 0
  %v732 = vsel %vm220, %v184, 0
  %v735 = vsel %vm220, %v185, 0
  %v738 = vsel %vm220, %v186, 0
  %v741 = vsel %vm220, %v187, 0
  %v744 = vsel %vm220, %v188, 0
  %v747 = vsel %vm220, %v189, 0
  %v750 = vsel %vm220, %v190, 0
  %v753 = vsel %vm220, %v191, 0
  %v756 = vsel %vm220, %v192, 0
  %v759 = vsel %vm220, %v193, 0
  %v762 = vsel %vm220, %v194, 0
  %v765 = vsel %vm220, %v195, 0
  %v768 = vsel %vm220, %v196, 0
  %v771 = vsel %vm220, %v197, 0
  %v774 = vsel %vm220, %v198, 0
  %v777 = vsel %vm220, %v199, 0
  %v780 = vsel %vm220, %v200, 0
  %v783 = vsel %vm220, %v201, 0
  %v786 = vsel %vm220, %v202, 0
  %v789 = vsel %vm220, %v203, 0
  %v792 = vsel %vm220, %v204, 0
  %v795 = vsel %vm220, %v205, 0
  %v798 = vsel %vm220, %v206, 0
  %v801 = vsel %vm220, %v207, 0
  %v804 = vsel %vm220, %v208, 0
  %v807 = vsel %vm220, %v209, 0
  %vm809 = vcmask 1042432
  %v811 = vsel %vm809, %v219, 0
  %813 = vmatpush.msra.mxu0 0.0
  %814 = vmatpush.msra.mxu0 0.0
  %815 = vmatpush.msra.mxu0 0.0
  %816 = vmatpush.msra.mxu0 0.0
  %817 = vmatpush.msra.mxu0 0.0
  %818 = vmatpush.msra.mxu0 0.0
  %819 = vmatpush.msra.mxu0 %v811
  %820 = vmatpush.msra.mxu0 %v218
  %821 = vmatpush.msra.mxu0 %v217
  %822 = vmatpush.msra.mxu0 %v216
  %823 = vmatpush.msra.mxu0 %v215
  %824 = vmatpush.msra.mxu0 %v214
  %825 = vmatpush.msra.mxu0 %v213
  %826 = vmatpush.msra.mxu0 %v212
  %827 = vmatpush.msra.mxu0 %v211
  %828 = vmatpush.msra.mxu0 %v210
  %829 = vmatmul.f32.gmra.mxu0 %v222
  %v830 = vpop.f32.mrf.mxu0
  %v831 = vadd.f32 0.0, %v830
  %832 = vmatmul.f32.gmra.mxu0 %v225
  %v833 = vpop.f32.mrf.mxu0
  %v834 = vadd.f32 0.0, %v833
  %835 = vmatmul.f32.gmra.mxu0 %v228
  %v836 = vpop.f32.mrf.mxu0
  %v837 = vadd.f32 0.0, %v836
  %838 = vmatmul.f32.gmra.mxu0 %v231
  %v839 = vpop.f32.mrf.mxu0
  %v840 = vadd.f32 0.0, %v839
  %841 = vmatmul.f32.gmra.mxu0 %v234
  %v842 = vpop.f32.mrf.mxu0
  %v843 = vadd.f32 0.0, %v842
  %844 = vmatmul.f32.gmra.mxu0 %v237
  %v845 = vpop.f32.mrf.mxu0
  %v846 = vadd.f32 0.0, %v845
  %847 = vmatmul.f32.gmra.mxu0 %v240
  %v848 = vpop.f32.mrf.mxu0
  %v849 = vadd.f32 0.0, %v848
  %850 = vmatmul.f32.gmra.mxu0 %v243
  %v851 = vpop.f32.mrf.mxu0
  %v852 = vadd.f32 0.0, %v851
  %853 = vmatmul.f32.gmra.mxu0 %v246
  %v854 = vpop.f32.mrf.mxu0
  %v855 = vadd.f32 0.0, %v854
  %856 = vmatmul.f32.gmra.mxu0 %v249
  %v857 = vpop.f32.mrf.mxu0
  %v858 = vadd.f32 0.0, %v857
  %859 = vmatmul.f32.gmra.mxu0 %v252
  %v860 = vpop.f32.mrf.mxu0
  %v861 = vadd.f32 0.0, %v860
  %862 = vmatmul.f32.gmra.mxu0 %v255
  %v863 = vpop.f32.mrf.mxu0
  %v864 = vadd.f32 0.0, %v863
  %865 = vmatmul.f32.gmra.mxu0 %v258
  %v866 = vpop.f32.mrf.mxu0
  %v867 = vadd.f32 0.0, %v866
  %868 = vmatmul.f32.gmra.mxu0 %v261
  %v869 = vpop.f32.mrf.mxu0
  %v870 = vadd.f32 0.0, %v869
  %871 = vmatmul.f32.gmra.mxu0 %v264
  %v872 = vpop.f32.mrf.mxu0
  %v873 = vadd.f32 0.0, %v872
  %874 = vmatmul.f32.gmra.mxu0 %v267
  %v875 = vpop.f32.mrf.mxu0
  %v876 = vadd.f32 0.0, %v875
  %877 = vmatmul.f32.gmra.mxu0 %v270
  %v878 = vpop.f32.mrf.mxu0
  %v879 = vadd.f32 0.0, %v878
  %880 = vmatmul.f32.gmra.mxu0 %v273
  %v881 = vpop.f32.mrf.mxu0
  %v882 = vadd.f32 0.0, %v881
  %883 = vmatmul.f32.gmra.mxu0 %v276
  %v884 = vpop.f32.mrf.mxu0
  %v885 = vadd.f32 0.0, %v884
  %886 = vmatmul.f32.gmra.mxu0 %v279
  %v887 = vpop.f32.mrf.mxu0
  %v888 = vadd.f32 0.0, %v887
  %889 = vmatmul.f32.gmra.mxu0 %v282
  %v890 = vpop.f32.mrf.mxu0
  %v891 = vadd.f32 0.0, %v890
  %892 = vmatmul.f32.gmra.mxu0 %v285
  %v893 = vpop.f32.mrf.mxu0
  %v894 = vadd.f32 0.0, %v893
  %895 = vmatmul.f32.gmra.mxu0 %v288
  %v896 = vpop.f32.mrf.mxu0
  %v897 = vadd.f32 0.0, %v896
  %898 = vmatmul.f32.gmra.mxu0 %v291
  %v899 = vpop.f32.mrf.mxu0
  %v900 = vadd.f32 0.0, %v899
  %901 = vmatmul.f32.gmra.mxu0 %v294
  %v902 = vpop.f32.mrf.mxu0
  %v903 = vadd.f32 0.0, %v902
  %904 = vmatmul.f32.gmra.mxu0 %v297
  %v905 = vpop.f32.mrf.mxu0
  %v906 = vadd.f32 0.0, %v905
  %907 = vmatmul.f32.gmra.mxu0 %v300
  %v908 = vpop.f32.mrf.mxu0
  %v909 = vadd.f32 0.0, %v908
  %910 = vmatmul.f32.gmra.mxu0 %v303
  %v911 = vpop.f32.mrf.mxu0
  %v912 = vadd.f32 0.0, %v911
  %913 = vmatmul.f32.gmra.mxu0 %v306
  %v914 = vpop.f32.mrf.mxu0
  %v915 = vadd.f32 0.0, %v914
  %916 = vmatmul.f32.gmra.mxu0 %v309
  %v917 = vpop.f32.mrf.mxu0
  %v918 = vadd.f32 0.0, %v917
  %919 = vmatmul.f32.gmra.mxu0 %v312
  %v920 = vpop.f32.mrf.mxu0
  %v921 = vadd.f32 0.0, %v920
  %922 = vmatmul.f32.gmra.mxu0 %v315
  %v923 = vpop.f32.mrf.mxu0
  %v924 = vadd.f32 0.0, %v923
  %925 = vmatmul.f32.gmra.mxu0 %v318
  %v926 = vpop.f32.mrf.mxu0
  %v927 = vadd.f32 0.0, %v926
  %928 = vmatmul.f32.gmra.mxu0 %v321
  %v929 = vpop.f32.mrf.mxu0
  %v930 = vadd.f32 0.0, %v929
  %931 = vmatmul.f32.gmra.mxu0 %v324
  %v932 = vpop.f32.mrf.mxu0
  %v933 = vadd.f32 0.0, %v932
  %934 = vmatmul.f32.gmra.mxu0 %v327
  %v935 = vpop.f32.mrf.mxu0
  %v936 = vadd.f32 0.0, %v935
  %937 = vmatmul.f32.gmra.mxu0 %v330
  %v938 = vpop.f32.mrf.mxu0
  %v939 = vadd.f32 0.0, %v938
  %940 = vmatmul.f32.gmra.mxu0 %v333
  %v941 = vpop.f32.mrf.mxu0
  %v942 = vadd.f32 0.0, %v941
  %943 = vmatmul.f32.gmra.mxu0 %v336
  %v944 = vpop.f32.mrf.mxu0
  %v945 = vadd.f32 0.0, %v944
  %946 = vmatmul.f32.gmra.mxu0 %v339
  %v947 = vpop.f32.mrf.mxu0
  %v948 = vadd.f32 0.0, %v947
  %949 = vmatmul.f32.gmra.mxu0 %v342
  %v950 = vpop.f32.mrf.mxu0
  %v951 = vadd.f32 0.0, %v950
  %952 = vmatmul.f32.gmra.mxu0 %v345
  %v953 = vpop.f32.mrf.mxu0
  %v954 = vadd.f32 0.0, %v953
  %955 = vmatmul.f32.gmra.mxu0 %v348
  %v956 = vpop.f32.mrf.mxu0
  %v957 = vadd.f32 0.0, %v956
  %958 = vmatmul.f32.gmra.mxu0 %v351
  %v959 = vpop.f32.mrf.mxu0
  %v960 = vadd.f32 0.0, %v959
  %961 = vmatmul.f32.gmra.mxu0 %v354
  %v962 = vpop.f32.mrf.mxu0
  %v963 = vadd.f32 0.0, %v962
  %964 = vmatmul.f32.gmra.mxu0 %v357
  %v965 = vpop.f32.mrf.mxu0
  %v966 = vadd.f32 0.0, %v965
  %967 = vmatmul.f32.gmra.mxu0 %v360
  %v968 = vpop.f32.mrf.mxu0
  %v969 = vadd.f32 0.0, %v968
  %970 = vmatmul.f32.gmra.mxu0 %v363
  %v971 = vpop.f32.mrf.mxu0
  %v972 = vadd.f32 0.0, %v971
  %973 = vmatmul.f32.gmra.mxu0 %v366
  %v974 = vpop.f32.mrf.mxu0
  %v975 = vadd.f32 0.0, %v974
  %976 = vmatmul.f32.gmra.mxu0 %v369
  %v977 = vpop.f32.mrf.mxu0
  %v978 = vadd.f32 0.0, %v977
  %979 = vmatmul.f32.gmra.mxu0 %v372
  %v980 = vpop.f32.mrf.mxu0
  %v981 = vadd.f32 0.0, %v980
  %982 = vmatmul.f32.gmra.mxu0 %v375
  %v983 = vpop.f32.mrf.mxu0
  %v984 = vadd.f32 0.0, %v983
  %985 = vmatmul.f32.gmra.mxu0 %v378
  %v986 = vpop.f32.mrf.mxu0
  %v987 = vadd.f32 0.0, %v986
  %988 = vmatmul.f32.gmra.mxu0 %v381
  %v989 = vpop.f32.mrf.mxu0
  %v990 = vadd.f32 0.0, %v989
  %991 = vmatmul.f32.gmra.mxu0 %v384
  %v992 = vpop.f32.mrf.mxu0
  %v993 = vadd.f32 0.0, %v992
  %994 = vmatmul.f32.gmra.mxu0 %v387
  %v995 = vpop.f32.mrf.mxu0
  %v996 = vadd.f32 0.0, %v995
  %997 = vmatmul.f32.gmra.mxu0 %v390
  %v998 = vpop.f32.mrf.mxu0
  %v999 = vadd.f32 0.0, %v998
  %1000 = vmatmul.f32.gmra.mxu0 %v393
  %v1001 = vpop.f32.mrf.mxu0
  %v1002 = vadd.f32 0.0, %v1001
  %1003 = vmatmul.f32.gmra.mxu0 %v396
  %v1004 = vpop.f32.mrf.mxu0
  %v1005 = vadd.f32 0.0, %v1004
  %1006 = vmatmul.f32.gmra.mxu0 %v399
  %v1007 = vpop.f32.mrf.mxu0
  %v1008 = vadd.f32 0.0, %v1007
  %1009 = vmatmul.f32.gmra.mxu0 %v402
  %v1010 = vpop.f32.mrf.mxu0
  %v1011 = vadd.f32 0.0, %v1010
  %1012 = vmatmul.f32.gmra.mxu0 %v405
  %v1013 = vpop.f32.mrf.mxu0
  %v1014 = vadd.f32 0.0, %v1013
  %1015 = vmatmul.f32.gmra.mxu0 %v408
  %v1016 = vpop.f32.mrf.mxu0
  %v1017 = vadd.f32 0.0, %v1016
  %1018 = vmatmul.f32.gmra.mxu0 %v411
  %v1019 = vpop.f32.mrf.mxu0
  %v1020 = vadd.f32 0.0, %v1019
  %1021 = vmatmul.f32.gmra.mxu0 %v414
  %v1022 = vpop.f32.mrf.mxu0
  %v1023 = vadd.f32 0.0, %v1022
  %1024 = vmatmul.f32.gmra.mxu0 %v417
  %v1025 = vpop.f32.mrf.mxu0
  %v1026 = vadd.f32 0.0, %v1025
  %1027 = vmatmul.f32.gmra.mxu0 %v420
  %v1028 = vpop.f32.mrf.mxu0
  %v1029 = vadd.f32 0.0, %v1028
  %1030 = vmatmul.f32.gmra.mxu0 %v423
  %v1031 = vpop.f32.mrf.mxu0
  %v1032 = vadd.f32 0.0, %v1031
  %1033 = vmatmul.f32.gmra.mxu0 %v426
  %v1034 = vpop.f32.mrf.mxu0
  %v1035 = vadd.f32 0.0, %v1034
  %1036 = vmatmul.f32.gmra.mxu0 %v429
  %v1037 = vpop.f32.mrf.mxu0
  %v1038 = vadd.f32 0.0, %v1037
  %1039 = vmatmul.f32.gmra.mxu0 %v432
  %v1040 = vpop.f32.mrf.mxu0
  %v1041 = vadd.f32 0.0, %v1040
  %1042 = vmatmul.f32.gmra.mxu0 %v435
  %v1043 = vpop.f32.mrf.mxu0
  %v1044 = vadd.f32 0.0, %v1043
  %1045 = vmatmul.f32.gmra.mxu0 %v438
  %v1046 = vpop.f32.mrf.mxu0
  %v1047 = vadd.f32 0.0, %v1046
  %1048 = vmatmul.f32.gmra.mxu0 %v441
  %v1049 = vpop.f32.mrf.mxu0
  %v1050 = vadd.f32 0.0, %v1049
  %1051 = vmatmul.f32.gmra.mxu0 %v444
  %v1052 = vpop.f32.mrf.mxu0
  %v1053 = vadd.f32 0.0, %v1052
  %1054 = vmatmul.f32.gmra.mxu0 %v447
  %v1055 = vpop.f32.mrf.mxu0
  %v1056 = vadd.f32 0.0, %v1055
  %1057 = vmatmul.f32.gmra.mxu0 %v450
  %v1058 = vpop.f32.mrf.mxu0
  %v1059 = vadd.f32 0.0, %v1058
  %1060 = vmatmul.f32.gmra.mxu0 %v453
  %v1061 = vpop.f32.mrf.mxu0
  %v1062 = vadd.f32 0.0, %v1061
  %1063 = vmatmul.f32.gmra.mxu0 %v456
  %v1064 = vpop.f32.mrf.mxu0
  %v1065 = vadd.f32 0.0, %v1064
  %1066 = vmatmul.f32.gmra.mxu0 %v459
  %v1067 = vpop.f32.mrf.mxu0
  %v1068 = vadd.f32 0.0, %v1067
  %1069 = vmatmul.f32.gmra.mxu0 %v462
  %v1070 = vpop.f32.mrf.mxu0
  %v1071 = vadd.f32 0.0, %v1070
  %1072 = vmatmul.f32.gmra.mxu0 %v465
  %v1073 = vpop.f32.mrf.mxu0
  %v1074 = vadd.f32 0.0, %v1073
  %1075 = vmatmul.f32.gmra.mxu0 %v468
  %v1076 = vpop.f32.mrf.mxu0
  %v1077 = vadd.f32 0.0, %v1076
  %1078 = vmatmul.f32.gmra.mxu0 %v471
  %v1079 = vpop.f32.mrf.mxu0
  %v1080 = vadd.f32 0.0, %v1079
  %1081 = vmatmul.f32.gmra.mxu0 %v474
  %v1082 = vpop.f32.mrf.mxu0
  %v1083 = vadd.f32 0.0, %v1082
  %1084 = vmatmul.f32.gmra.mxu0 %v477
  %v1085 = vpop.f32.mrf.mxu0
  %v1086 = vadd.f32 0.0, %v1085
  %1087 = vmatmul.f32.gmra.mxu0 %v480
  %v1088 = vpop.f32.mrf.mxu0
  %v1089 = vadd.f32 0.0, %v1088
  %1090 = vmatmul.f32.gmra.mxu0 %v483
  %v1091 = vpop.f32.mrf.mxu0
  %v1092 = vadd.f32 0.0, %v1091
  %1093 = vmatmul.f32.gmra.mxu0 %v486
  %v1094 = vpop.f32.mrf.mxu0
  %v1095 = vadd.f32 0.0, %v1094
  %1096 = vmatmul.f32.gmra.mxu0 %v489
  %v1097 = vpop.f32.mrf.mxu0
  %v1098 = vadd.f32 0.0, %v1097
  %1099 = vmatmul.f32.gmra.mxu0 %v492
  %v1100 = vpop.f32.mrf.mxu0
  %v1101 = vadd.f32 0.0, %v1100
  %1102 = vmatmul.f32.gmra.mxu0 %v495
  %v1103 = vpop.f32.mrf.mxu0
  %v1104 = vadd.f32 0.0, %v1103
  %1105 = vmatmul.f32.gmra.mxu0 %v498
  %v1106 = vpop.f32.mrf.mxu0
  %v1107 = vadd.f32 0.0, %v1106
  %1108 = vmatmul.f32.gmra.mxu0 %v501
  %v1109 = vpop.f32.mrf.mxu0
  %v1110 = vadd.f32 0.0, %v1109
  %1111 = vmatmul.f32.gmra.mxu0 %v504
  %v1112 = vpop.f32.mrf.mxu0
  %v1113 = vadd.f32 0.0, %v1112
  %1114 = vmatmul.f32.gmra.mxu0 %v507
  %v1115 = vpop.f32.mrf.mxu0
  %v1116 = vadd.f32 0.0, %v1115
  %1117 = vmatmul.f32.gmra.mxu0 %v510
  %v1118 = vpop.f32.mrf.mxu0
  %v1119 = vadd.f32 0.0, %v1118
  %1120 = vmatmul.f32.gmra.mxu0 %v513
  %v1121 = vpop.f32.mrf.mxu0
  %v1122 = vadd.f32 0.0, %v1121
  %1123 = vmatmul.f32.gmra.mxu0 %v516
  %v1124 = vpop.f32.mrf.mxu0
  %v1125 = vadd.f32 0.0, %v1124
  %1126 = vmatmul.f32.gmra.mxu0 %v519
  %v1127 = vpop.f32.mrf.mxu0
  %v1128 = vadd.f32 0.0, %v1127
  %1129 = vmatmul.f32.gmra.mxu0 %v522
  %v1130 = vpop.f32.mrf.mxu0
  %v1131 = vadd.f32 0.0, %v1130
  %1132 = vmatmul.f32.gmra.mxu0 %v525
  %v1133 = vpop.f32.mrf.mxu0
  %v1134 = vadd.f32 0.0, %v1133
  %1135 = vmatmul.f32.gmra.mxu0 %v528
  %v1136 = vpop.f32.mrf.mxu0
  %v1137 = vadd.f32 0.0, %v1136
  %1138 = vmatmul.f32.gmra.mxu0 %v531
  %v1139 = vpop.f32.mrf.mxu0
  %v1140 = vadd.f32 0.0, %v1139
  %1141 = vmatmul.f32.gmra.mxu0 %v534
  %v1142 = vpop.f32.mrf.mxu0
  %v1143 = vadd.f32 0.0, %v1142
  %1144 = vmatmul.f32.gmra.mxu0 %v537
  %v1145 = vpop.f32.mrf.mxu0
  %v1146 = vadd.f32 0.0, %v1145
  %1147 = vmatmul.f32.gmra.mxu0 %v540
  %v1148 = vpop.f32.mrf.mxu0
  %v1149 = vadd.f32 0.0, %v1148
  %1150 = vmatmul.f32.gmra.mxu0 %v543
  %v1151 = vpop.f32.mrf.mxu0
  %v1152 = vadd.f32 0.0, %v1151
  %1153 = vmatmul.f32.gmra.mxu0 %v546
  %v1154 = vpop.f32.mrf.mxu0
  %v1155 = vadd.f32 0.0, %v1154
  %1156 = vmatmul.f32.gmra.mxu0 %v549
  %v1157 = vpop.f32.mrf.mxu0
  %v1158 = vadd.f32 0.0, %v1157
  %1159 = vmatmul.f32.gmra.mxu0 %v552
  %v1160 = vpop.f32.mrf.mxu0
  %v1161 = vadd.f32 0.0, %v1160
  %1162 = vmatmul.f32.gmra.mxu0 %v555
  %v1163 = vpop.f32.mrf.mxu0
  %v1164 = vadd.f32 0.0, %v1163
  %1165 = vmatmul.f32.gmra.mxu0 %v558
  %v1166 = vpop.f32.mrf.mxu0
  %v1167 = vadd.f32 0.0, %v1166
  %1168 = vmatmul.f32.gmra.mxu0 %v561
  %v1169 = vpop.f32.mrf.mxu0
  %v1170 = vadd.f32 0.0, %v1169
  %1171 = vmatmul.f32.gmra.mxu0 %v564
  %v1172 = vpop.f32.mrf.mxu0
  %v1173 = vadd.f32 0.0, %v1172
  %1174 = vmatmul.f32.gmra.mxu0 %v567
  %v1175 = vpop.f32.mrf.mxu0
  %v1176 = vadd.f32 0.0, %v1175
  %1177 = vmatmul.f32.gmra.mxu0 %v570
  %v1178 = vpop.f32.mrf.mxu0
  %v1179 = vadd.f32 0.0, %v1178
  %1180 = vmatmul.f32.gmra.mxu0 %v573
  %v1181 = vpop.f32.mrf.mxu0
  %v1182 = vadd.f32 0.0, %v1181
  %1183 = vmatmul.f32.gmra.mxu0 %v576
  %v1184 = vpop.f32.mrf.mxu0
  %v1185 = vadd.f32 0.0, %v1184
  %1186 = vmatmul.f32.gmra.mxu0 %v579
  %v1187 = vpop.f32.mrf.mxu0
  %v1188 = vadd.f32 0.0, %v1187
  %1189 = vmatmul.f32.gmra.mxu0 %v582
  %v1190 = vpop.f32.mrf.mxu0
  %v1191 = vadd.f32 0.0, %v1190
  %1192 = vmatmul.f32.gmra.mxu0 %v585
  %v1193 = vpop.f32.mrf.mxu0
  %v1194 = vadd.f32 0.0, %v1193
  %1195 = vmatmul.f32.gmra.mxu0 %v588
  %v1196 = vpop.f32.mrf.mxu0
  %v1197 = vadd.f32 0.0, %v1196
  %1198 = vmatmul.f32.gmra.mxu0 %v591
  %v1199 = vpop.f32.mrf.mxu0
  %v1200 = vadd.f32 0.0, %v1199
  %1201 = vmatmul.f32.gmra.mxu0 %v594
  %v1202 = vpop.f32.mrf.mxu0
  %v1203 = vadd.f32 0.0, %v1202
  %1204 = vmatmul.f32.gmra.mxu0 %v597
  %v1205 = vpop.f32.mrf.mxu0
  %v1206 = vadd.f32 0.0, %v1205
  %1207 = vmatmul.f32.gmra.mxu0 %v600
  %v1208 = vpop.f32.mrf.mxu0
  %v1209 = vadd.f32 0.0, %v1208
  %1210 = vmatmul.f32.gmra.mxu0 %v603
  %v1211 = vpop.f32.mrf.mxu0
  %v1212 = vadd.f32 0.0, %v1211
  %1213 = vmatmul.f32.gmra.mxu0 %v606
  %v1214 = vpop.f32.mrf.mxu0
  %v1215 = vadd.f32 0.0, %v1214
  %1216 = vmatmul.f32.gmra.mxu0 %v609
  %v1217 = vpop.f32.mrf.mxu0
  %v1218 = vadd.f32 0.0, %v1217
  %1219 = vmatmul.f32.gmra.mxu0 %v612
  %v1220 = vpop.f32.mrf.mxu0
  %v1221 = vadd.f32 0.0, %v1220
  %1222 = vmatmul.f32.gmra.mxu0 %v615
  %v1223 = vpop.f32.mrf.mxu0
  %v1224 = vadd.f32 0.0, %v1223
  %1225 = vmatmul.f32.gmra.mxu0 %v618
  %v1226 = vpop.f32.mrf.mxu0
  %v1227 = vadd.f32 0.0, %v1226
  %1228 = vmatmul.f32.gmra.mxu0 %v621
  %v1229 = vpop.f32.mrf.mxu0
  %v1230 = vadd.f32 0.0, %v1229
  %1231 = vmatmul.f32.gmra.mxu0 %v624
  %v1232 = vpop.f32.mrf.mxu0
  %v1233 = vadd.f32 0.0, %v1232
  %1234 = vmatmul.f32.gmra.mxu0 %v627
  %v1235 = vpop.f32.mrf.mxu0
  %v1236 = vadd.f32 0.0, %v1235
  %1237 = vmatmul.f32.gmra.mxu0 %v630
  %v1238 = vpop.f32.mrf.mxu0
  %v1239 = vadd.f32 0.0, %v1238
  %1240 = vmatmul.f32.gmra.mxu0 %v633
  %v1241 = vpop.f32.mrf.mxu0
  %v1242 = vadd.f32 0.0, %v1241
  %1243 = vmatmul.f32.gmra.mxu0 %v636
  %v1244 = vpop.f32.mrf.mxu0
  %v1245 = vadd.f32 0.0, %v1244
  %1246 = vmatmul.f32.gmra.mxu0 %v639
  %v1247 = vpop.f32.mrf.mxu0
  %v1248 = vadd.f32 0.0, %v1247
  %1249 = vmatmul.f32.gmra.mxu0 %v642
  %v1250 = vpop.f32.mrf.mxu0
  %v1251 = vadd.f32 0.0, %v1250
  %1252 = vmatmul.f32.gmra.mxu0 %v645
  %v1253 = vpop.f32.mrf.mxu0
  %v1254 = vadd.f32 0.0, %v1253
  %1255 = vmatmul.f32.gmra.mxu0 %v648
  %v1256 = vpop.f32.mrf.mxu0
  %v1257 = vadd.f32 0.0, %v1256
  %1258 = vmatmul.f32.gmra.mxu0 %v651
  %v1259 = vpop.f32.mrf.mxu0
  %v1260 = vadd.f32 0.0, %v1259
  %1261 = vmatmul.f32.gmra.mxu0 %v654
  %v1262 = vpop.f32.mrf.mxu0
  %v1263 = vadd.f32 0.0, %v1262
  %1264 = vmatmul.f32.gmra.mxu0 %v657
  %v1265 = vpop.f32.mrf.mxu0
  %v1266 = vadd.f32 0.0, %v1265
  %1267 = vmatmul.f32.gmra.mxu0 %v660
  %v1268 = vpop.f32.mrf.mxu0
  %v1269 = vadd.f32 0.0, %v1268
  %1270 = vmatmul.f32.gmra.mxu0 %v663
  %v1271 = vpop.f32.mrf.mxu0
  %v1272 = vadd.f32 0.0, %v1271
  %1273 = vmatmul.f32.gmra.mxu0 %v666
  %v1274 = vpop.f32.mrf.mxu0
  %v1275 = vadd.f32 0.0, %v1274
  %1276 = vmatmul.f32.gmra.mxu0 %v669
  %v1277 = vpop.f32.mrf.mxu0
  %v1278 = vadd.f32 0.0, %v1277
  %1279 = vmatmul.f32.gmra.mxu0 %v672
  %v1280 = vpop.f32.mrf.mxu0
  %v1281 = vadd.f32 0.0, %v1280
  %1282 = vmatmul.f32.gmra.mxu0 %v675
  %v1283 = vpop.f32.mrf.mxu0
  %v1284 = vadd.f32 0.0, %v1283
  %1285 = vmatmul.f32.gmra.mxu0 %v678
  %v1286 = vpop.f32.mrf.mxu0
  %v1287 = vadd.f32 0.0, %v1286
  %1288 = vmatmul.f32.gmra.mxu0 %v681
  %v1289 = vpop.f32.mrf.mxu0
  %v1290 = vadd.f32 0.0, %v1289
  %1291 = vmatmul.f32.gmra.mxu0 %v684
  %v1292 = vpop.f32.mrf.mxu0
  %v1293 = vadd.f32 0.0, %v1292
  %1294 = vmatmul.f32.gmra.mxu0 %v687
  %v1295 = vpop.f32.mrf.mxu0
  %v1296 = vadd.f32 0.0, %v1295
  %1297 = vmatmul.f32.gmra.mxu0 %v690
  %v1298 = vpop.f32.mrf.mxu0
  %v1299 = vadd.f32 0.0, %v1298
  %1300 = vmatmul.f32.gmra.mxu0 %v693
  %v1301 = vpop.f32.mrf.mxu0
  %v1302 = vadd.f32 0.0, %v1301
  %1303 = vmatmul.f32.gmra.mxu0 %v696
  %v1304 = vpop.f32.mrf.mxu0
  %v1305 = vadd.f32 0.0, %v1304
  %1306 = vmatmul.f32.gmra.mxu0 %v699
  %v1307 = vpop.f32.mrf.mxu0
  %v1308 = vadd.f32 0.0, %v1307
  %1309 = vmatmul.f32.gmra.mxu0 %v702
  %v1310 = vpop.f32.mrf.mxu0
  %v1311 = vadd.f32 0.0, %v1310
  %1312 = vmatmul.f32.gmra.mxu0 %v705
  %v1313 = vpop.f32.mrf.mxu0
  %v1314 = vadd.f32 0.0, %v1313
  %1315 = vmatmul.f32.gmra.mxu0 %v708
  %v1316 = vpop.f32.mrf.mxu0
  %v1317 = vadd.f32 0.0, %v1316
  %1318 = vmatmul.f32.gmra.mxu0 %v711
  %v1319 = vpop.f32.mrf.mxu0
  %v1320 = vadd.f32 0.0, %v1319
  %1321 = vmatmul.f32.gmra.mxu0 %v714
  %v1322 = vpop.f32.mrf.mxu0
  %v1323 = vadd.f32 0.0, %v1322
  %1324 = vmatmul.f32.gmra.mxu0 %v717
  %v1325 = vpop.f32.mrf.mxu0
  %v1326 = vadd.f32 0.0, %v1325
  %1327 = vmatmul.f32.gmra.mxu0 %v720
  %v1328 = vpop.f32.mrf.mxu0
  %v1329 = vadd.f32 0.0, %v1328
  %1330 = vmatmul.f32.gmra.mxu0 %v723
  %v1331 = vpop.f32.mrf.mxu0
  %v1332 = vadd.f32 0.0, %v1331
  %1333 = vmatmul.f32.gmra.mxu0 %v726
  %v1334 = vpop.f32.mrf.mxu0
  %v1335 = vadd.f32 0.0, %v1334
  %1336 = vmatmul.f32.gmra.mxu0 %v729
  %v1337 = vpop.f32.mrf.mxu0
  %v1338 = vadd.f32 0.0, %v1337
  %1339 = vmatmul.f32.gmra.mxu0 %v732
  %v1340 = vpop.f32.mrf.mxu0
  %v1341 = vadd.f32 0.0, %v1340
  %1342 = vmatmul.f32.gmra.mxu0 %v735
  %v1343 = vpop.f32.mrf.mxu0
  %v1344 = vadd.f32 0.0, %v1343
  %1345 = vmatmul.f32.gmra.mxu0 %v738
  %v1346 = vpop.f32.mrf.mxu0
  %v1347 = vadd.f32 0.0, %v1346
  %1348 = vmatmul.f32.gmra.mxu0 %v741
  %v1349 = vpop.f32.mrf.mxu0
  %v1350 = vadd.f32 0.0, %v1349
  %1351 = vmatmul.f32.gmra.mxu0 %v744
  %v1352 = vpop.f32.mrf.mxu0
  %v1353 = vadd.f32 0.0, %v1352
  %1354 = vmatmul.f32.gmra.mxu0 %v747
  %v1355 = vpop.f32.mrf.mxu0
  %v1356 = vadd.f32 0.0, %v1355
  %1357 = vmatmul.f32.gmra.mxu0 %v750
  %v1358 = vpop.f32.mrf.mxu0
  %v1359 = vadd.f32 0.0, %v1358
  %1360 = vmatmul.f32.gmra.mxu0 %v753
  %v1361 = vpop.f32.mrf.mxu0
  %v1362 = vadd.f32 0.0, %v1361
  %1363 = vmatmul.f32.gmra.mxu0 %v756
  %v1364 = vpop.f32.mrf.mxu0
  %v1365 = vadd.f32 0.0, %v1364
  %1366 = vmatmul.f32.gmra.mxu0 %v759
  %v1367 = vpop.f32.mrf.mxu0
  %v1368 = vadd.f32 0.0, %v1367
  %1369 = vmatmul.f32.gmra.mxu0 %v762
  %v1370 = vpop.f32.mrf.mxu0
  %v1371 = vadd.f32 0.0, %v1370
  %1372 = vmatmul.f32.gmra.mxu0 %v765
  %v1373 = vpop.f32.mrf.mxu0
  %v1374 = vadd.f32 0.0, %v1373
  %1375 = vmatmul.f32.gmra.mxu0 %v768
  %v1376 = vpop.f32.mrf.mxu0
  %v1377 = vadd.f32 0.0, %v1376
  %1378 = vmatmul.f32.gmra.mxu0 %v771
  %v1379 = vpop.f32.mrf.mxu0
  %v1380 = vadd.f32 0.0, %v1379
  %1381 = vmatmul.f32.gmra.mxu0 %v774
  %v1382 = vpop.f32.mrf.mxu0
  %v1383 = vadd.f32 0.0, %v1382
  %1384 = vmatmul.f32.gmra.mxu0 %v777
  %v1385 = vpop.f32.mrf.mxu0
  %v1386 = vadd.f32 0.0, %v1385
  %1387 = vmatmul.f32.gmra.mxu0 %v780
  %v1388 = vpop.f32.mrf.mxu0
  %v1389 = vadd.f32 0.0, %v1388
  %1390 = vmatmul.f32.gmra.mxu0 %v783
  %v1391 = vpop.f32.mrf.mxu0
  %v1392 = vadd.f32 0.0, %v1391
  %1393 = vmatmul.f32.gmra.mxu0 %v786
  %v1394 = vpop.f32.mrf.mxu0
  %v1395 = vadd.f32 0.0, %v1394
  %1396 = vmatmul.f32.gmra.mxu0 %v789
  %v1397 = vpop.f32.mrf.mxu0
  %v1398 = vadd.f32 0.0, %v1397
  %1399 = vmatmul.f32.gmra.mxu0 %v792
  %v1400 = vpop.f32.mrf.mxu0
  %v1401 = vadd.f32 0.0, %v1400
  %1402 = vmatmul.f32.gmra.mxu0 %v795
  %v1403 = vpop.f32.mrf.mxu0
  %v1404 = vadd.f32 0.0, %v1403
  %1405 = vmatmul.f32.gmra.mxu0 %v798
  %v1406 = vpop.f32.mrf.mxu0
  %v1407 = vadd.f32 0.0, %v1406
  %1408 = vmatmul.f32.gmra.mxu0 %v801
  %v1409 = vpop.f32.mrf.mxu0
  %v1410 = vadd.f32 0.0, %v1409
  %1411 = vmatmul.f32.gmra.mxu0 %v804
  %v1412 = vpop.f32.mrf.mxu0
  %v1413 = vadd.f32 0.0, %v1412
  %1414 = vmatmul.f32.gmra.mxu0 %v807
  %v1415 = vpop.f32.mrf.mxu0
  %v1416 = vadd.f32 0.0, %v1415
  %1417 = vdwg.mxu0
  %v1418 = vmax.f32 %v831, %v978
  %v1419 = vmax.f32 %v834, %v981
  %v1420 = vmax.f32 %v837, %v984
  %v1421 = vmax.f32 %v840, %v987
  %v1422 = vmax.f32 %v843, %v990
  %v1423 = vmax.f32 %v846, %v993
  %v1424 = vmax.f32 %v849, %v996
  %v1425 = vmax.f32 %v852, %v999
  %v1426 = vmax.f32 %v855, %v1002
  %v1427 = vmax.f32 %v858, %v1005
  %v1428 = vmax.f32 %v861, %v1008
  %v1429 = vmax.f32 %v864, %v1011
  %v1430 = vmax.f32 %v867, %v1014
  %v1431 = vmax.f32 %v870, %v1017
  %v1432 = vmax.f32 %v873, %v1020
  %v1433 = vmax.f32 %v876, %v1023
  %v1434 = vmax.f32 %v879, %v1026
  %v1435 = vmax.f32 %v882, %v1029
  %v1436 = vmax.f32 %v885, %v1032
  %v1437 = vmax.f32 %v888, %v1035
  %v1438 = vmax.f32 %v891, %v1038
  %v1439 = vmax.f32 %v894, %v1041
  %v1440 = vmax.f32 %v897, %v1044
  %v1441 = vmax.f32 %v900, %v1047
  %v1442 = vmax.f32 %v903, %v1050
  %v1443 = vmax.f32 %v906, %v1053
  %v1444 = vmax.f32 %v909, %v1056
  %v1445 = vmax.f32 %v912, %v1059
  %v1446 = vmax.f32 %v915, %v1062
  %v1447 = vmax.f32 %v918, %v1065
  %v1448 = vmax.f32 %v921, %v1068
  %v1449 = vmax.f32 %v924, %v1071
  %v1450 = vmax.f32 %v927, %v1074
  %v1451 = vmax.f32 %v930, %v1077
  %v1452 = vmax.f32 %v933, %v1080
  %v1453 = vmax.f32 %v936, %v1083
  %v1454 = vmax.f32 %v939, %v1086
  %v1455 = vmax.f32 %v942, %v1089
  %v1456 = vmax.f32 %v945, %v1092
  %v1457 = vmax.f32 %v948, %v1095
  %v1458 = vmax.f32 %v951, %v1098
  %v1459 = vmax.f32 %v954, %v1101
  %v1460 = vmax.f32 %v957, %v1104
  %v1461 = vmax.f32 %v960, %v1107
  %v1462 = vmax.f32 %v963, %v1110
  %v1463 = vmax.f32 %v966, %v1113
  %v1464 = vmax.f32 %v969, %v1116
  %v1465 = vmax.f32 %v972, %v1119
  %v1466 = vmax.f32 %v975, %v1122
  %v1467 = vmax.f32 %v1418, %v1125
  %v1468 = vmax.f32 %v1419, %v1128
  %v1469 = vmax.f32 %v1420, %v1131
  %v1470 = vmax.f32 %v1421, %v1134
  %v1471 = vmax.f32 %v1422, %v1137
  %v1472 = vmax.f32 %v1423, %v1140
  %v1473 = vmax.f32 %v1424, %v1143
  %v1474 = vmax.f32 %v1425, %v1146
  %v1475 = vmax.f32 %v1426, %v1149
  %v1476 = vmax.f32 %v1427, %v1152
  %v1477 = vmax.f32 %v1428, %v1155
  %v1478 = vmax.f32 %v1429, %v1158
  %v1479 = vmax.f32 %v1430, %v1161
  %v1480 = vmax.f32 %v1431, %v1164
  %v1481 = vmax.f32 %v1432, %v1167
  %v1482 = vmax.f32 %v1433, %v1170
  %v1483 = vmax.f32 %v1434, %v1173
  %v1484 = vmax.f32 %v1435, %v1176
  %v1485 = vmax.f32 %v1436, %v1179
  %v1486 = vmax.f32 %v1437, %v1182
  %v1487 = vmax.f32 %v1438, %v1185
  %v1488 = vmax.f32 %v1439, %v1188
  %v1489 = vmax.f32 %v1440, %v1191
  %v1490 = vmax.f32 %v1441, %v1194
  %v1491 = vmax.f32 %v1442, %v1197
  %v1492 = vmax.f32 %v1443, %v1200
  %v1493 = vmax.f32 %v1444, %v1203
  %v1494 = vmax.f32 %v1445, %v1206
  %v1495 = vmax.f32 %v1446, %v1209
  %v1496 = vmax.f32 %v1447, %v1212
  %v1497 = vmax.f32 %v1448, %v1215
  %v1498 = vmax.f32 %v1449, %v1218
  %v1499 = vmax.f32 %v1450, %v1221
  %v1500 = vmax.f32 %v1451, %v1224
  %v1501 = vmax.f32 %v1452, %v1227
  %v1502 = vmax.f32 %v1453, %v1230
  %v1503 = vmax.f32 %v1454, %v1233
  %v1504 = vmax.f32 %v1455, %v1236
  %v1505 = vmax.f32 %v1456, %v1239
  %v1506 = vmax.f32 %v1457, %v1242
  %v1507 = vmax.f32 %v1458, %v1245
  %v1508 = vmax.f32 %v1459, %v1248
  %v1509 = vmax.f32 %v1460, %v1251
  %v1510 = vmax.f32 %v1461, %v1254
  %v1511 = vmax.f32 %v1462, %v1257
  %v1512 = vmax.f32 %v1463, %v1260
  %v1513 = vmax.f32 %v1464, %v1263
  %v1514 = vmax.f32 %v1465, %v1266
  %v1515 = vmax.f32 %v1466, %v1269
  %v1516 = vmax.f32 %v1467, %v1272
  %v1517 = vmax.f32 %v1468, %v1275
  %v1518 = vmax.f32 %v1469, %v1278
  %v1519 = vmax.f32 %v1470, %v1281
  %v1520 = vmax.f32 %v1471, %v1284
  %v1521 = vmax.f32 %v1472, %v1287
  %v1522 = vmax.f32 %v1473, %v1290
  %v1523 = vmax.f32 %v1474, %v1293
  %v1524 = vmax.f32 %v1475, %v1296
  %v1525 = vmax.f32 %v1476, %v1299
  %v1526 = vmax.f32 %v1477, %v1302
  %v1527 = vmax.f32 %v1478, %v1305
  %v1528 = vmax.f32 %v1479, %v1308
  %v1529 = vmax.f32 %v1480, %v1311
  %v1530 = vmax.f32 %v1481, %v1314
  %v1531 = vmax.f32 %v1482, %v1317
  %v1532 = vmax.f32 %v1483, %v1320
  %v1533 = vmax.f32 %v1484, %v1323
  %v1534 = vmax.f32 %v1485, %v1326
  %v1535 = vmax.f32 %v1486, %v1329
  %v1536 = vmax.f32 %v1487, %v1332
  %v1537 = vmax.f32 %v1488, %v1335
  %v1538 = vmax.f32 %v1489, %v1338
  %v1539 = vmax.f32 %v1490, %v1341
  %v1540 = vmax.f32 %v1491, %v1344
  %v1541 = vmax.f32 %v1492, %v1347
  %v1542 = vmax.f32 %v1493, %v1350
  %v1543 = vmax.f32 %v1494, %v1353
  %v1544 = vmax.f32 %v1495, %v1356
  %v1545 = vmax.f32 %v1496, %v1359
  %v1546 = vmax.f32 %v1497, %v1362
  %v1547 = vmax.f32 %v1498, %v1365
  %v1548 = vmax.f32 %v1499, %v1368
  %v1549 = vmax.f32 %v1500, %v1371
  %v1550 = vmax.f32 %v1501, %v1374
  %v1551 = vmax.f32 %v1502, %v1377
  %v1552 = vmax.f32 %v1503, %v1380
  %v1553 = vmax.f32 %v1504, %v1383
  %v1554 = vmax.f32 %v1505, %v1386
  %v1555 = vmax.f32 %v1506, %v1389
  %v1556 = vmax.f32 %v1507, %v1392
  %v1557 = vmax.f32 %v1508, %v1395
  %v1558 = vmax.f32 %v1509, %v1398
  %v1559 = vmax.f32 %v1510, %v1401
  %v1560 = vmax.f32 %v1511, %v1404
  %v1561 = vmax.f32 %v1512, %v1407
  %v1562 = vmax.f32 %v1513, %v1410
  %v1563 = vmax.f32 %v1514, %v1413
  %v1564 = vmax.f32 %v1515, %v1416
  %v1565 = vld [vmem:[%s2] sm:$0x1]
  %v1567 = vperm.slane %v1565, 0
  %v1569 = vadd.f32 %v1516, %v1567
  %v1570 = vadd.f32 %v1517, %v1567
  %v1571 = vadd.f32 %v1518, %v1567
  %v1572 = vadd.f32 %v1519, %v1567
  %v1573 = vadd.f32 %v1520, %v1567
  %v1574 = vadd.f32 %v1521, %v1567
  %v1575 = vadd.f32 %v1522, %v1567
  %v1576 = vadd.f32 %v1523, %v1567
  %v1577 = vadd.f32 %v1524, %v1567
  %v1578 = vadd.f32 %v1525, %v1567
  %v1579 = vadd.f32 %v1526, %v1567
  %v1580 = vadd.f32 %v1527, %v1567
  %v1581 = vadd.f32 %v1528, %v1567
  %v1582 = vadd.f32 %v1529, %v1567
  %v1583 = vadd.f32 %v1530, %v1567
  %v1584 = vadd.f32 %v1531, %v1567
  %v1585 = vadd.f32 %v1532, %v1567
  %v1586 = vadd.f32 %v1533, %v1567
  %v1587 = vadd.f32 %v1534, %v1567
  %v1588 = vadd.f32 %v1535, %v1567
  %v1589 = vadd.f32 %v1536, %v1567
  %v1590 = vadd.f32 %v1537, %v1567
  %v1591 = vadd.f32 %v1538, %v1567
  %v1592 = vadd.f32 %v1539, %v1567
  %v1593 = vadd.f32 %v1540, %v1567
  %v1594 = vadd.f32 %v1541, %v1567
  %v1595 = vadd.f32 %v1542, %v1567
  %v1596 = vadd.f32 %v1543, %v1567
  %v1597 = vadd.f32 %v1544, %v1567
  %v1598 = vadd.f32 %v1545, %v1567
  %v1599 = vadd.f32 %v1546, %v1567
  %v1600 = vadd.f32 %v1547, %v1567
  %v1601 = vadd.f32 %v1548, %v1567
  %v1602 = vadd.f32 %v1549, %v1567
  %v1603 = vadd.f32 %v1550, %v1567
  %v1604 = vadd.f32 %v1551, %v1567
  %v1605 = vadd.f32 %v1552, %v1567
  %v1606 = vadd.f32 %v1553, %v1567
  %v1607 = vadd.f32 %v1554, %v1567
  %v1608 = vadd.f32 %v1555, %v1567
  %v1609 = vadd.f32 %v1556, %v1567
  %v1610 = vadd.f32 %v1557, %v1567
  %v1611 = vadd.f32 %v1558, %v1567
  %v1612 = vadd.f32 %v1559, %v1567
  %v1613 = vadd.f32 %v1560, %v1567
  %v1614 = vadd.f32 %v1561, %v1567
  %v1615 = vadd.f32 %v1562, %v1567
  %v1616 = vadd.f32 %v1563, %v1567
  %v1617 = vadd.f32 %v1564, %v1567
  %v1618 = vmax.f32 %v1569, 0.0
  %v1619 = vmax.f32 %v1570, 0.0
  %v1620 = vmax.f32 %v1571, 0.0
  %v1621 = vmax.f32 %v1572, 0.0
  %v1622 = vmax.f32 %v1573, 0.0
  %v1623 = vmax.f32 %v1574, 0.0
  %v1624 = vmax.f32 %v1575, 0.0
  %v1625 = vmax.f32 %v1576, 0.0
  %v1626 = vmax.f32 %v1577, 0.0
  %v1627 = vmax.f32 %v1578, 0.0
  %v1628 = vmax.f32 %v1579, 0.0
  %v1629 = vmax.f32 %v1580, 0.0
  %v1630 = vmax.f32 %v1581, 0.0
  %v1631 = vmax.f32 %v1582, 0.0
  %v1632 = vmax.f32 %v1583, 0.0
  %v1633 = vmax.f32 %v1584, 0.0
  %v1634 = vmax.f32 %v1585, 0.0
  %v1635 = vmax.f32 %v1586, 0.0
  %v1636 = vmax.f32 %v1587, 0.0
  %v1637 = vmax.f32 %v1588, 0.0
  %v1638 = vmax.f32 %v1589, 0.0
  %v1639 = vmax.f32 %v1590, 0.0
  %v1640 = vmax.f32 %v1591, 0.0
  %v1641 = vmax.f32 %v1592, 0.0
  %v1642 = vmax.f32 %v1593, 0.0
  %v1643 = vmax.f32 %v1594, 0.0
  %v1644 = vmax.f32 %v1595, 0.0
  %v1645 = vmax.f32 %v1596, 0.0
  %v1646 = vmax.f32 %v1597, 0.0
  %v1647 = vmax.f32 %v1598, 0.0
  %v1648 = vmax.f32 %v1599, 0.0
  %v1649 = vmax.f32 %v1600, 0.0
  %v1650 = vmax.f32 %v1601, 0.0
  %v1651 = vmax.f32 %v1602, 0.0
  %v1652 = vmax.f32 %v1603, 0.0
  %v1653 = vmax.f32 %v1604, 0.0
  %v1654 = vmax.f32 %v1605, 0.0
  %v1655 = vmax.f32 %v1606, 0.0
  %v1656 = vmax.f32 %v1607, 0.0
  %v1657 = vmax.f32 %v1608, 0.0
  %v1658 = vmax.f32 %v1609, 0.0
  %v1659 = vmax.f32 %v1610, 0.0
  %v1660 = vmax.f32 %v1611, 0.0
  %v1661 = vmax.f32 %v1612, 0.0
  %v1662 = vmax.f32 %v1613, 0.0
  %v1663 = vmax.f32 %v1614, 0.0
  %v1664 = vmax.f32 %v1615, 0.0
  %v1665 = vmax.f32 %v1616, 0.0
  %v1666 = vmax.f32 %v1617, 0.0
  %vm1667 = vcmask 261120
  %1668 = vst.msk [vmem:[%s3] sm:$0xff] %vm1667, %v1618
  %1669 = vst.msk [vmem:[%s3 + $0x8] sm:$0xff] %vm1667, %v1619
  %1670 = vst.msk [vmem:[%s3 + $0x10] sm:$0xff] %vm1667, %v1620
  %1671 = vst.msk [vmem:[%s3 + $0x18] sm:$0xff] %vm1667, %v1621
  %1672 = vst.msk [vmem:[%s3 + $0x20] sm:$0xff] %vm1667, %v1622
  %1673 = vst.msk [vmem:[%s3 + $0x28] sm:$0xff] %vm1667, %v1623
  %1674 = vst.msk [vmem:[%s3 + $0x30] sm:$0xff] %vm1667, %v1624
  %1675 = vst.msk [vmem:[%s3 + $0x38] sm:$0xff] %vm1667, %v1625
  %1676 = vst.msk [vmem:[%s3 + $0x40] sm:$0xff] %vm1667, %v1626
  %1677 = vst.msk [vmem:[%s3 + $0x48] sm:$0xff] %vm1667, %v1627
  %1678 = vst.msk [vmem:[%s3 + $0x50] sm:$0xff] %vm1667, %v1628
  %1679 = vst.msk [vmem:[%s3 + $0x58] sm:$0xff] %vm1667, %v1629
  %1680 = vst.msk [vmem:[%s3 + $0x60] sm:$0xff] %vm1667, %v1630
  %1681 = vst.msk [vmem:[%s3 + $0x68] sm:$0xff] %vm1667, %v1631
  %1682 = vst.msk [vmem:[%s3 + $0x70] sm:$0xff] %vm1667, %v1632
  %1683 = vst.msk [vmem:[%s3 + $0x78] sm:$0xff] %vm1667, %v1633
  %1684 = vst.msk [vmem:[%s3 + $0x80] sm:$0xff] %vm1667, %v1634
  %1685 = vst.msk [vmem:[%s3 + $0x88] sm:$0xff] %vm1667, %v1635
  %1686 = vst.msk [vmem:[%s3 + $0x90] sm:$0xff] %vm1667, %v1636
  %1687 = vst.msk [vmem:[%s3 + $0x98] sm:$0xff] %vm1667, %v1637
  %1688 = vst.msk [vmem:[%s3 + $0xa0] sm:$0xff] %vm1667, %v1638
  %1689 = vst.msk [vmem:[%s3 + $0xa8] sm:$0xff] %vm1667, %v1639
  %1690 = vst.msk [vmem:[%s3 + $0xb0] sm:$0xff] %vm1667, %v1640
  %1691 = vst.msk [vmem:[%s3 + $0xb8] sm:$0xff] %vm1667, %v1641
  %1692 = vst.msk [vmem:[%s3 + $0xc0] sm:$0xff] %vm1667, %v1642
  %1693 = vst.msk [vmem:[%s3 + $0xc8] sm:$0xff] %vm1667, %v1643
  %1694 = vst.msk [vmem:[%s3 + $0xd0] sm:$0xff] %vm1667, %v1644
  %1695 = vst.msk [vmem:[%s3 + $0xd8] sm:$0xff] %vm1667, %v1645
  %1696 = vst.msk [vmem:[%s3 + $0xe0] sm:$0xff] %vm1667, %v1646
  %1697 = vst.msk [vmem:[%s3 + $0xe8] sm:$0xff] %vm1667, %v1647
  %1698 = vst.msk [vmem:[%s3 + $0xf0] sm:$0xff] %vm1667, %v1648
  %1699 = vst.msk [vmem:[%s3 + $0xf8] sm:$0xff] %vm1667, %v1649
  %1700 = vst.msk [vmem:[%s3 + $0x100] sm:$0xff] %vm1667, %v1650
  %1701 = vst.msk [vmem:[%s3 + $0x108] sm:$0xff] %vm1667, %v1651
  %1702 = vst.msk [vmem:[%s3 + $0x110] sm:$0xff] %vm1667, %v1652
  %1703 = vst.msk [vmem:[%s3 + $0x118] sm:$0xff] %vm1667, %v1653
  %1704 = vst.msk [vmem:[%s3 + $0x120] sm:$0xff] %vm1667, %v1654
  %1705 = vst.msk [vmem:[%s3 + $0x128] sm:$0xff] %vm1667, %v1655
  %1706 = vst.msk [vmem:[%s3 + $0x130] sm:$0xff] %vm1667, %v1656
  %1707 = vst.msk [vmem:[%s3 + $0x138] sm:$0xff] %vm1667, %v1657
  %1708 = vst.msk [vmem:[%s3 + $0x140] sm:$0xff] %vm1667, %v1658
  %1709 = vst.msk [vmem:[%s3 + $0x148] sm:$0xff] %vm1667, %v1659
  %1710 = vst.msk [vmem:[%s3 + $0x150] sm:$0xff] %vm1667, %v1660
  %1711 = vst.msk [vmem:[%s3 + $0x158] sm:$0xff] %vm1667, %v1661
  %1712 = vst.msk [vmem:[%s3 + $0x160] sm:$0xff] %vm1667, %v1662
  %1713 = vst.msk [vmem:[%s3 + $0x168] sm:$0xff] %vm1667, %v1663
  %1714 = vst.msk [vmem:[%s3 + $0x170] sm:$0xff] %vm1667, %v1664
  %1715 = vst.msk [vmem:[%s3 + $0x178] sm:$0xff] %vm1667, %v1665
  %1716 = vst.msk [vmem:[%s3 + $0x180] sm:$0xff] %vm1667, %v1666
  // Predicated region
  $region14: #{net_forward.2} parent=0 // pred_check
    _
  $region15: #{net_forward.2} parent=0 // pred_check_branch
    %1718 = sbr.rel (0) target = $region17
  $region16: #{net_forward.2} parent=0 // pred_region
    _
  $region17: #{net_forward.2} parent=0 // pred_fallthru
    _
  // Predicated region
  $region18: #{net_forward.2} parent=0 // pred_check
    _
  $region19: #{net_forward.2} parent=0 // pred_check_branch
    %1720 = sbr.rel (0) target = $region21
  $region20: #{net_forward.2} parent=0 // pred_region
    _
  $region21: #{net_forward.2} parent=0 // pred_fallthru
    _

// kernel: net_forward.3
$region0: #{net_forward.3}
  #allocation0 [shape = 'u32[]', space=smem, size = 0x4, offset = 0x4, fixed_abs, tag = 'smem constant byte address 0x4 - core index']
  #allocation1 [shape = 'u32[72,128]{1,0:T(1,128)}', space=vmem, size = 0x9000, scoped, tag = 'internal scratch']
  %s0 = inlined_call_operand.vmem [shape: f32[1,200,800], index: 0, kind: input, shape index: {}]
  %s1 = inlined_call_operand.vmem [shape: f32[800,64], index: 1, kind: input, shape index: {}]
  %s2 = inlined_call_operand.vmem [shape: f32[1,64], index: 2, kind: input, shape index: {}]
  %s3 = inlined_call_operand.vmem [shape: f32[1600,120], index: 3, kind: input, shape index: {}]
  %s4 = inlined_call_operand.vmem [shape: f32[1,120], index: 4, kind: input, shape index: {}]
  %s5 = inlined_call_operand.vmem [shape: f32[120,128], index: 5, kind: input, shape index: {}]
  %s6 = inlined_call_operand.vmem [shape: f32[1,128], index: 6, kind: input, shape index: {}]
  %s7 = inlined_call_operand.hbm [shape: f32[1,2,128], index: 7, kind: output, shape index: {}]
  %s8 = sld [smem:[#allocation0]]
  $region38: #{net_forward.3} parent=0
    _
  %s10 = ssub.s32 1, %s8
  %s11 = scalar_select 0, %s10, %s8
  $region1: #{net_forward.3} parent=0
    #allocation2 [shape = 'u8[1024]{0}', space=vmem, size = 0x400, scoped, tag = 'output window, operand 0, single buffered']
    #allocation3 [shape = 's32[1]{0}', space=sflag, size = 0x4, scoped, tag = 'scoped memory for net_forward.3']
    %12 = vsyncpa [#allocation3], 0
    // Predicated region
    $region2: #{net_forward.3} parent=1 // pred_check
      _
    $region3: #{net_forward.3} parent=1 // pred_check_branch
      %14 = sbr.rel (0) target = $region5
    $region4: #{net_forward.3} parent=1 // pred_region
      _
    $region5: #{net_forward.3} parent=1 // pred_fallthru
      _
    // Predicated region
    $region6: #{net_forward.3} parent=1 // pred_check
      _
    $region7: #{net_forward.3} parent=1 // pred_check_branch
      %16 = sbr.rel (0) target = $region9
    $region8: #{net_forward.3} parent=1 // pred_region
      _
    $region9: #{net_forward.3} parent=1 // pred_fallthru
      _
    // Predicated region
    $region10: #{net_forward.3} parent=1 // pred_check
      _
    $region11: #{net_forward.3} parent=1 // pred_check_branch
      %18 = sbr.rel (0) target = $region13
    $region12: #{net_forward.3} parent=1 // pred_region
      _
    $region13: #{net_forward.3} parent=1 // pred_fallthru
      _
    // Predicated region
    $region14: #{net_forward.3} parent=1 // pred_check
      _
    $region15: #{net_forward.3} parent=1 // pred_check_branch
      %20 = sbr.rel (0) target = $region17
    $region16: #{net_forward.3} parent=1 // pred_region
      _
    $region17: #{net_forward.3} parent=1 // pred_fallthru
      _
    // Predicated region
    $region18: #{net_forward.3} parent=1 // pred_check
      _
    $region19: #{net_forward.3} parent=1 // pred_check_branch
      %22 = sbr.rel (0) target = $region21
    $region20: #{net_forward.3} parent=1 // pred_region
      _
    $region21: #{net_forward.3} parent=1 // pred_fallthru
      _
    // Predicated region
    $region22: #{net_forward.3} parent=1 // pred_check
      _
    $region23: #{net_forward.3} parent=1 // pred_check_branch
      %24 = sbr.rel (0) target = $region25
    $region24: #{net_forward.3} parent=1 // pred_region
      _
    $region25: #{net_forward.3} parent=1 // pred_fallthru
      _
    // Predicated region
    $region26: #{net_forward.3} parent=1 // pred_check
      _
    $region27: #{net_forward.3} parent=1 // pred_check_branch
      %26 = sbr.rel (0) target = $region29
    $region28: #{net_forward.3} parent=1 // pred_region
      _
    $region29: #{net_forward.3} parent=1 // pred_fallthru
      _
    %v27 = vld [vmem:[%s0] sm:$0xff]
    %v28 = vld [vmem:[%s0 + $0x8] sm:$0xff]
    %v29 = vld [vmem:[%s0 + $0x10] sm:$0xff]
    %v30 = vld [vmem:[%s0 + $0x18] sm:$0xff]
    %v31 = vld [vmem:[%s0 + $0x20] sm:$0xff]
    %v32 = vld [vmem:[%s0 + $0x28] sm:$0xff]
    %v33 = vld [vmem:[%s0 + $0x30] sm:$0xff]
    %v34 = vld [vmem:[%s0 + $0x38] sm:$0xff]
    %v35 = vld [vmem:[%s0 + $0x40] sm:$0xff]
    %v36 = vld [vmem:[%s0 + $0x48] sm:$0xff]
    %v37 = vld [vmem:[%s0 + $0x50] sm:$0xff]
    %v38 = vld [vmem:[%s0 + $0x58] sm:$0xff]
    %v39 = vld [vmem:[%s0 + $0x60] sm:$0xff]
    %v40 = vld [vmem:[%s0 + $0x68] sm:$0xff]
    %v41 = vld [vmem:[%s0 + $0x70] sm:$0xff]
    %v42 = vld [vmem:[%s0 + $0x78] sm:$0xff]
    %v43 = vld [vmem:[%s0 + $0x80] sm:$0xff]
    %v44 = vld [vmem:[%s0 + $0x88] sm:$0xff]
    %v45 = vld [vmem:[%s0 + $0x90] sm:$0xff]
    %v46 = vld [vmem:[%s0 + $0x98] sm:$0xff]
    %v47 = vld [vmem:[%s0 + $0xa0] sm:$0xff]
    %v48 = vld [vmem:[%s0 + $0xa8] sm:$0xff]
    %v49 = vld [vmem:[%s0 + $0xb0] sm:$0xff]
    %v50 = vld [vmem:[%s0 + $0xb8] sm:$0xff]
    %v51 = vld [vmem:[%s0 + $0xc0] sm:$0xff]
    %v52 = vld [vmem:[%s0 + $0xc8] sm:$0xff]
    %v53 = vld [vmem:[%s0 + $0xd0] sm:$0xff]
    %v54 = vld [vmem:[%s0 + $0xd8] sm:$0xff]
    %v55 = vld [vmem:[%s0 + $0xe0] sm:$0xff]
    %v56 = vld [vmem:[%s0 + $0xe8] sm:$0xff]
    %v57 = vld [vmem:[%s0 + $0xf0] sm:$0xff]
    %v58 = vld [vmem:[%s0 + $0xf8] sm:$0xff]
    %v59 = vld [vmem:[%s0 + $0x100] sm:$0xff]
    %v60 = vld [vmem:[%s0 + $0x108] sm:$0xff]
    %v61 = vld [vmem:[%s0 + $0x110] sm:$0xff]
    %v62 = vld [vmem:[%s0 + $0x118] sm:$0xff]
    %v63 = vld [vmem:[%s0 + $0x120] sm:$0xff]
    %v64 = vld [vmem:[%s0 + $0x128] sm:$0xff]
    %v65 = vld [vmem:[%s0 + $0x130] sm:$0xff]
    %v66 = vld [vmem:[%s0 + $0x138] sm:$0xff]
    %v67 = vld [vmem:[%s0 + $0x140] sm:$0xff]
    %v68 = vld [vmem:[%s0 + $0x148] sm:$0xff]
    %v69 = vld [vmem:[%s0 + $0x150] sm:$0xff]
    %v70 = vld [vmem:[%s0 + $0x158] sm:$0xff]
    %v71 = vld [vmem:[%s0 + $0x160] sm:$0xff]
    %v72 = vld [vmem:[%s0 + $0x168] sm:$0xff]
    %v73 = vld [vmem:[%s0 + $0x170] sm:$0xff]
    %v74 = vld [vmem:[%s0 + $0x178] sm:$0xff]
    %v75 = vld [vmem:[%s0 + $0x180] sm:$0xff]
    %v76 = vld [vmem:[%s0 + $0x188] sm:$0xff]
    %v77 = vld [vmem:[%s0 + $0x190] sm:$0xff]
    %v78 = vld [vmem:[%s0 + $0x198] sm:$0xff]
    %v79 = vld [vmem:[%s0 + $0x1a0] sm:$0xff]
    %v80 = vld [vmem:[%s0 + $0x1a8] sm:$0xff]
    %v81 = vld [vmem:[%s0 + $0x1b0] sm:$0xff]
    %v82 = vld [vmem:[%s0 + $0x1b8] sm:$0xff]
    %v83 = vld [vmem:[%s0 + $0x1c0] sm:$0xff]
    %v84 = vld [vmem:[%s0 + $0x1c8] sm:$0xff]
    %v85 = vld [vmem:[%s0 + $0x1d0] sm:$0xff]
    %v86 = vld [vmem:[%s0 + $0x1d8] sm:$0xff]
    %v87 = vld [vmem:[%s0 + $0x1e0] sm:$0xff]
    %v88 = vld [vmem:[%s0 + $0x1e8] sm:$0xff]
    %v89 = vld [vmem:[%s0 + $0x1f0] sm:$0xff]
    %v90 = vld [vmem:[%s0 + $0x1f8] sm:$0xff]
    %v91 = vld [vmem:[%s0 + $0x200] sm:$0xff]
    %v92 = vld [vmem:[%s0 + $0x208] sm:$0xff]
    %v93 = vld [vmem:[%s0 + $0x210] sm:$0xff]
    %v94 = vld [vmem:[%s0 + $0x218] sm:$0xff]
    %v95 = vld [vmem:[%s0 + $0x220] sm:$0xff]
    %v96 = vld [vmem:[%s0 + $0x228] sm:$0xff]
    %v97 = vld [vmem:[%s0 + $0x230] sm:$0xff]
    %v98 = vld [vmem:[%s0 + $0x238] sm:$0xff]
    %v99 = vld [vmem:[%s0 + $0x240] sm:$0xff]
    %v100 = vld [vmem:[%s0 + $0x248] sm:$0xff]
    %v101 = vld [vmem:[%s0 + $0x250] sm:$0xff]
    %v102 = vld [vmem:[%s0 + $0x258] sm:$0xff]
    %v103 = vld [vmem:[%s0 + $0x260] sm:$0xff]
    %v104 = vld [vmem:[%s0 + $0x268] sm:$0xff]
    %v105 = vld [vmem:[%s0 + $0x270] sm:$0xff]
    %v106 = vld [vmem:[%s0 + $0x278] sm:$0xff]
    %v107 = vld [vmem:[%s0 + $0x280] sm:$0xff]
    %v108 = vld [vmem:[%s0 + $0x288] sm:$0xff]
    %v109 = vld [vmem:[%s0 + $0x290] sm:$0xff]
    %v110 = vld [vmem:[%s0 + $0x298] sm:$0xff]
    %v111 = vld [vmem:[%s0 + $0x2a0] sm:$0xff]
    %v112 = vld [vmem:[%s0 + $0x2a8] sm:$0xff]
    %v113 = vld [vmem:[%s0 + $0x2b0] sm:$0xff]
    %v114 = vld [vmem:[%s0 + $0x2b8] sm:$0xff]
    %v115 = vld [vmem:[%s0 + $0x2c0] sm:$0xff]
    %v116 = vld [vmem:[%s0 + $0x2c8] sm:$0xff]
    %v117 = vld [vmem:[%s0 + $0x2d0] sm:$0xff]
    %v118 = vld [vmem:[%s0 + $0x2d8] sm:$0xff]
    %v119 = vld [vmem:[%s0 + $0x2e0] sm:$0xff]
    %v120 = vld [vmem:[%s0 + $0x2e8] sm:$0xff]
    %v121 = vld [vmem:[%s0 + $0x2f0] sm:$0xff]
    %v122 = vld [vmem:[%s0 + $0x2f8] sm:$0xff]
    %v123 = vld [vmem:[%s0 + $0x300] sm:$0xff]
    %v124 = vld [vmem:[%s0 + $0x308] sm:$0xff]
    %v125 = vld [vmem:[%s0 + $0x310] sm:$0xff]
    %v126 = vld [vmem:[%s0 + $0x318] sm:$0xff]
    %v127 = vld [vmem:[%s0 + $0x320] sm:$0xff]
    %v128 = vld [vmem:[%s0 + $0x328] sm:$0xff]
    %v129 = vld [vmem:[%s0 + $0x330] sm:$0xff]
    %v130 = vld [vmem:[%s0 + $0x338] sm:$0xff]
    %v131 = vld [vmem:[%s0 + $0x340] sm:$0xff]
    %v132 = vld [vmem:[%s0 + $0x348] sm:$0xff]
    %v133 = vld [vmem:[%s0 + $0x350] sm:$0xff]
    %v134 = vld [vmem:[%s0 + $0x358] sm:$0xff]
    %v135 = vld [vmem:[%s0 + $0x360] sm:$0xff]
    %v136 = vld [vmem:[%s0 + $0x368] sm:$0xff]
    %v137 = vld [vmem:[%s0 + $0x370] sm:$0xff]
    %v138 = vld [vmem:[%s0 + $0x378] sm:$0xff]
    %v139 = vld [vmem:[%s0 + $0x380] sm:$0xff]
    %v140 = vld [vmem:[%s0 + $0x388] sm:$0xff]
    %v141 = vld [vmem:[%s0 + $0x390] sm:$0xff]
    %v142 = vld [vmem:[%s0 + $0x398] sm:$0xff]
    %v143 = vld [vmem:[%s0 + $0x3a0] sm:$0xff]
    %v144 = vld [vmem:[%s0 + $0x3a8] sm:$0xff]
    %v145 = vld [vmem:[%s0 + $0x3b0] sm:$0xff]
    %v146 = vld [vmem:[%s0 + $0x3b8] sm:$0xff]
    %v147 = vld [vmem:[%s0 + $0x3c0] sm:$0xff]
    %v148 = vld [vmem:[%s0 + $0x3c8] sm:$0xff]
    %v149 = vld [vmem:[%s0 + $0x3d0] sm:$0xff]
    %v150 = vld [vmem:[%s0 + $0x3d8] sm:$0xff]
    %v151 = vld [vmem:[%s0 + $0x3e0] sm:$0xff]
    %v152 = vld [vmem:[%s0 + $0x3e8] sm:$0xff]
    %v153 = vld [vmem:[%s0 + $0x3f0] sm:$0xff]
    %v154 = vld [vmem:[%s0 + $0x3f8] sm:$0xff]
    %v155 = vld [vmem:[%s0 + $0x400] sm:$0xff]
    %v156 = vld [vmem:[%s0 + $0x408] sm:$0xff]
    %v157 = vld [vmem:[%s0 + $0x410] sm:$0xff]
    %v158 = vld [vmem:[%s0 + $0x418] sm:$0xff]
    %v159 = vld [vmem:[%s0 + $0x420] sm:$0xff]
    %v160 = vld [vmem:[%s0 + $0x428] sm:$0xff]
    %v161 = vld [vmem:[%s0 + $0x430] sm:$0xff]
    %v162 = vld [vmem:[%s0 + $0x438] sm:$0xff]
    %v163 = vld [vmem:[%s0 + $0x440] sm:$0xff]
    %v164 = vld [vmem:[%s0 + $0x448] sm:$0xff]
    %v165 = vld [vmem:[%s0 + $0x450] sm:$0xff]
    %v166 = vld [vmem:[%s0 + $0x458] sm:$0xff]
    %v167 = vld [vmem:[%s0 + $0x460] sm:$0xff]
    %v168 = vld [vmem:[%s0 + $0x468] sm:$0xff]
    %v169 = vld [vmem:[%s0 + $0x470] sm:$0xff]
    %v170 = vld [vmem:[%s0 + $0x478] sm:$0xff]
    %v171 = vld [vmem:[%s0 + $0x480] sm:$0xff]
    %v172 = vld [vmem:[%s0 + $0x488] sm:$0xff]
    %v173 = vld [vmem:[%s0 + $0x490] sm:$0xff]
    %v174 = vld [vmem:[%s0 + $0x498] sm:$0xff]
    %v175 = vld [vmem:[%s0 + $0x4a0] sm:$0xff]
    %v176 = vld [vmem:[%s0 + $0x4a8] sm:$0xff]
    %v177 = vld [vmem:[%s0 + $0x4b0] sm:$0xff]
    %v178 = vld [vmem:[%s0 + $0x4b8] sm:$0xff]
    %v179 = vld [vmem:[%s0 + $0x4c0] sm:$0xff]
    %v180 = vld [vmem:[%s0 + $0x4c8] sm:$0xff]
    %v181 = vld [vmem:[%s0 + $0x4d0] sm:$0xff]
    %v182 = vld [vmem:[%s0 + $0x4d8] sm:$0xff]
    %v183 = vld [vmem:[%s0 + $0x4e0] sm:$0xff]
    %v184 = vld [vmem:[%s0 + $0x4e8] sm:$0xff]
    %v185 = vld [vmem:[%s0 + $0x4f0] sm:$0xff]
    %v186 = vld [vmem:[%s0 + $0x4f8] sm:$0xff]
    %v187 = vld [vmem:[%s0 + $0x500] sm:$0xff]
    %v188 = vld [vmem:[%s0 + $0x508] sm:$0xff]
    %v189 = vld [vmem:[%s0 + $0x510] sm:$0xff]
    %v190 = vld [vmem:[%s0 + $0x518] sm:$0xff]
    %v191 = vld [vmem:[%s0 + $0x520] sm:$0xff]
    %v192 = vld [vmem:[%s0 + $0x528] sm:$0xff]
    %v193 = vld [vmem:[%s0 + $0x530] sm:$0xff]
    %v194 = vld [vmem:[%s0 + $0x538] sm:$0xff]
    %v195 = vld [vmem:[%s0 + $0x540] sm:$0xff]
    %v196 = vld [vmem:[%s0 + $0x548] sm:$0xff]
    %v197 = vld [vmem:[%s0 + $0x550] sm:$0xff]
    %v198 = vld [vmem:[%s0 + $0x558] sm:$0xff]
    %v199 = vld [vmem:[%s0 + $0x560] sm:$0xff]
    %v200 = vld [vmem:[%s0 + $0x568] sm:$0xff]
    %v201 = vld [vmem:[%s0 + $0x570] sm:$0xff]
    %v202 = vld [vmem:[%s1] sm:$0xff]
    %v203 = vld [vmem:[%s1 + $0x8] sm:$0xff]
    %v204 = vld [vmem:[%s1 + $0x10] sm:$0xff]
    %v205 = vld [vmem:[%s1 + $0x18] sm:$0xff]
    %v206 = vld [vmem:[%s1 + $0x20] sm:$0xff]
    %v207 = vld [vmem:[%s1 + $0x28] sm:$0xff]
    %v208 = vld [vmem:[%s1 + $0x30] sm:$0xff]
    %v209 = vld [vmem:[%s1 + $0x38] sm:$0xff]
    %v210 = vld [vmem:[%s1 + $0x40] sm:$0xff]
    %v211 = vld [vmem:[%s1 + $0x48] sm:$0xff]
    %v212 = vld [vmem:[%s1 + $0x50] sm:$0xff]
    %v213 = vld [vmem:[%s1 + $0x58] sm:$0xff]
    %v214 = vld [vmem:[%s1 + $0x60] sm:$0xff]
    %v215 = vld [vmem:[%s1 + $0x68] sm:$0xff]
    %v216 = vld [vmem:[%s1 + $0x70] sm:$0xff]
    %v217 = vld [vmem:[%s1 + $0x78] sm:$0xff]
    %v218 = vld [vmem:[%s1 + $0x80] sm:$0xff]
    %v219 = vld [vmem:[%s1 + $0x88] sm:$0xff]
    %v220 = vld [vmem:[%s1 + $0x90] sm:$0xff]
    %v221 = vld [vmem:[%s1 + $0x98] sm:$0xff]
    %v222 = vld [vmem:[%s1 + $0xa0] sm:$0xff]
    %v223 = vld [vmem:[%s1 + $0xa8] sm:$0xff]
    %v224 = vld [vmem:[%s1 + $0xb0] sm:$0xff]
    %v225 = vld [vmem:[%s1 + $0xb8] sm:$0xff]
    %v226 = vld [vmem:[%s1 + $0xc0] sm:$0xff]
    %v227 = vld [vmem:[%s1 + $0xc8] sm:$0xff]
    %v228 = vld [vmem:[%s1 + $0xd0] sm:$0xff]
    %v229 = vld [vmem:[%s1 + $0xd8] sm:$0xff]
    %v230 = vld [vmem:[%s1 + $0xe0] sm:$0xff]
    %v231 = vld [vmem:[%s1 + $0xe8] sm:$0xff]
    %v232 = vld [vmem:[%s1 + $0xf0] sm:$0xff]
    %v233 = vld [vmem:[%s1 + $0xf8] sm:$0xff]
    %v234 = vld [vmem:[%s1 + $0x100] sm:$0xff]
    %v235 = vld [vmem:[%s1 + $0x108] sm:$0xff]
    %v236 = vld [vmem:[%s1 + $0x110] sm:$0xff]
    %v237 = vld [vmem:[%s1 + $0x118] sm:$0xff]
    %v238 = vld [vmem:[%s1 + $0x120] sm:$0xff]
    %v239 = vld [vmem:[%s1 + $0x128] sm:$0xff]
    %v240 = vld [vmem:[%s1 + $0x130] sm:$0xff]
    %v241 = vld [vmem:[%s1 + $0x138] sm:$0xff]
    %v242 = vld [vmem:[%s1 + $0x140] sm:$0xff]
    %v243 = vld [vmem:[%s1 + $0x148] sm:$0xff]
    %v244 = vld [vmem:[%s1 + $0x150] sm:$0xff]
    %v245 = vld [vmem:[%s1 + $0x158] sm:$0xff]
    %v246 = vld [vmem:[%s1 + $0x160] sm:$0xff]
    %v247 = vld [vmem:[%s1 + $0x168] sm:$0xff]
    %v248 = vld [vmem:[%s1 + $0x170] sm:$0xff]
    %v249 = vld [vmem:[%s1 + $0x178] sm:$0xff]
    %v250 = vld [vmem:[%s1 + $0x180] sm:$0xff]
    %v251 = vld [vmem:[%s1 + $0x188] sm:$0xff]
    %v252 = vld [vmem:[%s1 + $0x190] sm:$0xff]
    %v253 = vld [vmem:[%s1 + $0x198] sm:$0xff]
    %v254 = vld [vmem:[%s1 + $0x1a0] sm:$0xff]
    %v255 = vld [vmem:[%s1 + $0x1a8] sm:$0xff]
    %v256 = vld [vmem:[%s1 + $0x1b0] sm:$0xff]
    %v257 = vld [vmem:[%s1 + $0x1b8] sm:$0xff]
    %v258 = vld [vmem:[%s1 + $0x1c0] sm:$0xff]
    %v259 = vld [vmem:[%s1 + $0x1c8] sm:$0xff]
    %v260 = vld [vmem:[%s1 + $0x1d0] sm:$0xff]
    %v261 = vld [vmem:[%s1 + $0x1d8] sm:$0xff]
    %v262 = vld [vmem:[%s1 + $0x1e0] sm:$0xff]
    %v263 = vld [vmem:[%s1 + $0x1e8] sm:$0xff]
    %v264 = vld [vmem:[%s1 + $0x1f0] sm:$0xff]
    %v265 = vld [vmem:[%s1 + $0x1f8] sm:$0xff]
    %v266 = vld [vmem:[%s1 + $0x200] sm:$0xff]
    %v267 = vld [vmem:[%s1 + $0x208] sm:$0xff]
    %v268 = vld [vmem:[%s1 + $0x210] sm:$0xff]
    %v269 = vld [vmem:[%s1 + $0x218] sm:$0xff]
    %v270 = vld [vmem:[%s1 + $0x220] sm:$0xff]
    %v271 = vld [vmem:[%s1 + $0x228] sm:$0xff]
    %v272 = vld [vmem:[%s1 + $0x230] sm:$0xff]
    %v273 = vld [vmem:[%s1 + $0x238] sm:$0xff]
    %v274 = vld [vmem:[%s1 + $0x240] sm:$0xff]
    %v275 = vld [vmem:[%s1 + $0x248] sm:$0xff]
    %v276 = vld [vmem:[%s1 + $0x250] sm:$0xff]
    %v277 = vld [vmem:[%s1 + $0x258] sm:$0xff]
    %v278 = vld [vmem:[%s1 + $0x260] sm:$0xff]
    %v279 = vld [vmem:[%s1 + $0x268] sm:$0xff]
    %v280 = vld [vmem:[%s1 + $0x270] sm:$0xff]
    %v281 = vld [vmem:[%s1 + $0x278] sm:$0xff]
    %v282 = vld [vmem:[%s1 + $0x280] sm:$0xff]
    %v283 = vld [vmem:[%s1 + $0x288] sm:$0xff]
    %v284 = vld [vmem:[%s1 + $0x290] sm:$0xff]
    %v285 = vld [vmem:[%s1 + $0x298] sm:$0xff]
    %v286 = vld [vmem:[%s1 + $0x2a0] sm:$0xff]
    %v287 = vld [vmem:[%s1 + $0x2a8] sm:$0xff]
    %v288 = vld [vmem:[%s1 + $0x2b0] sm:$0xff]
    %v289 = vld [vmem:[%s1 + $0x2b8] sm:$0xff]
    %v290 = vld [vmem:[%s1 + $0x2c0] sm:$0xff]
    %v291 = vld [vmem:[%s1 + $0x2c8] sm:$0xff]
    %v292 = vld [vmem:[%s1 + $0x2d0] sm:$0xff]
    %v293 = vld [vmem:[%s1 + $0x2d8] sm:$0xff]
    %v294 = vld [vmem:[%s1 + $0x2e0] sm:$0xff]
    %v295 = vld [vmem:[%s1 + $0x2e8] sm:$0xff]
    %v296 = vld [vmem:[%s1 + $0x2f0] sm:$0xff]
    %v297 = vld [vmem:[%s1 + $0x2f8] sm:$0xff]
    %v298 = vld [vmem:[%s1 + $0x300] sm:$0xff]
    %v299 = vld [vmem:[%s1 + $0x308] sm:$0xff]
    %v300 = vld [vmem:[%s1 + $0x310] sm:$0xff]
    %v301 = vld [vmem:[%s1 + $0x318] sm:$0xff]
    %vm302 = vcmask 261120
    %v304 = vsel %vm302, %v33, 0
    %v307 = vsel %vm302, %v40, 0
    %v310 = vsel %vm302, %v47, 0
    %v313 = vsel %vm302, %v54, 0
    %v316 = vsel %vm302, %v61, 0
    %v319 = vsel %vm302, %v68, 0
    %v322 = vsel %vm302, %v75, 0
    %v325 = vsel %vm302, %v82, 0
    %v328 = vsel %vm302, %v89, 0
    %v331 = vsel %vm302, %v96, 0
    %v334 = vsel %vm302, %v103, 0
    %v337 = vsel %vm302, %v110, 0
    %v340 = vsel %vm302, %v117, 0
    %v343 = vsel %vm302, %v124, 0
    %v346 = vsel %vm302, %v131, 0
    %v349 = vsel %vm302, %v138, 0
    %v352 = vsel %vm302, %v145, 0
    %v355 = vsel %vm302, %v152, 0
    %v358 = vsel %vm302, %v159, 0
    %v361 = vsel %vm302, %v166, 0
    %v364 = vsel %vm302, %v173, 0
    %v367 = vsel %vm302, %v180, 0
    %v370 = vsel %vm302, %v187, 0
    %v373 = vsel %vm302, %v194, 0
    %v376 = vsel %vm302, %v201, 0
    %378 = vmatpush.msra.mxu0 %v217
    %379 = vmatpush.msra.mxu0 %v216
    %380 = vmatpush.msra.mxu0 %v215
    %381 = vmatpush.msra.mxu0 %v214
    %382 = vmatpush.msra.mxu0 %v213
    %383 = vmatpush.msra.mxu0 %v212
    %384 = vmatpush.msra.mxu0 %v211
    %385 = vmatpush.msra.mxu0 %v210
    %386 = vmatpush.msra.mxu0 %v209
    %387 = vmatpush.msra.mxu0 %v208
    %388 = vmatpush.msra.mxu0 %v207
    %389 = vmatpush.msra.mxu0 %v206
    %390 = vmatpush.msra.mxu0 %v205
    %391 = vmatpush.msra.mxu0 %v204
    %392 = vmatpush.msra.mxu0 %v203
    %393 = vmatpush.msra.mxu0 %v202
    %394 = vmatmul.f32.gmra.mxu0 %v27
    %v395 = vpop.f32.mrf.mxu0
    %v396 = vadd.f32 0.0, %v395
    %397 = vmatmul.f32.gmra.mxu0 %v34
    %v398 = vpop.f32.mrf.mxu0
    %v399 = vadd.f32 0.0, %v398
    %400 = vmatmul.f32.gmra.mxu0 %v41
    %v401 = vpop.f32.mrf.mxu0
    %v402 = vadd.f32 0.0, %v401
    %403 = vmatmul.f32.gmra.mxu0 %v48
    %v404 = vpop.f32.mrf.mxu0
    %v405 = vadd.f32 0.0, %v404
    %406 = vmatmul.f32.gmra.mxu0 %v55
    %v407 = vpop.f32.mrf.mxu0
    %v408 = vadd.f32 0.0, %v407
    %409 = vmatmul.f32.gmra.mxu0 %v62
    %v410 = vpop.f32.mrf.mxu0
    %v411 = vadd.f32 0.0, %v410
    %412 = vmatmul.f32.gmra.mxu0 %v69
    %v413 = vpop.f32.mrf.mxu0
    %v414 = vadd.f32 0.0, %v413
    %415 = vmatmul.f32.gmra.mxu0 %v76
    %v416 = vpop.f32.mrf.mxu0
    %v417 = vadd.f32 0.0, %v416
    %418 = vmatmul.f32.gmra.mxu0 %v83
    %v419 = vpop.f32.mrf.mxu0
    %v420 = vadd.f32 0.0, %v419
    %421 = vmatmul.f32.gmra.mxu0 %v90
    %v422 = vpop.f32.mrf.mxu0
    %v423 = vadd.f32 0.0, %v422
    %424 = vmatmul.f32.gmra.mxu0 %v97
    %v425 = vpop.f32.mrf.mxu0
    %v426 = vadd.f32 0.0, %v425
    %427 = vmatmul.f32.gmra.mxu0 %v104
    %v428 = vpop.f32.mrf.mxu0
    %v429 = vadd.f32 0.0, %v428
    %430 = vmatmul.f32.gmra.mxu0 %v111
    %v431 = vpop.f32.mrf.mxu0
    %v432 = vadd.f32 0.0, %v431
    %433 = vmatmul.f32.gmra.mxu0 %v118
    %v434 = vpop.f32.mrf.mxu0
    %v435 = vadd.f32 0.0, %v434
    %436 = vmatmul.f32.gmra.mxu0 %v125
    %v437 = vpop.f32.mrf.mxu0
    %v438 = vadd.f32 0.0, %v437
    %439 = vmatmul.f32.gmra.mxu0 %v132
    %v440 = vpop.f32.mrf.mxu0
    %v441 = vadd.f32 0.0, %v440
    %442 = vmatmul.f32.gmra.mxu0 %v139
    %v443 = vpop.f32.mrf.mxu0
    %v444 = vadd.f32 0.0, %v443
    %445 = vmatmul.f32.gmra.mxu0 %v146
    %v446 = vpop.f32.mrf.mxu0
    %v447 = vadd.f32 0.0, %v446
    %448 = vmatmul.f32.gmra.mxu0 %v153
    %v449 = vpop.f32.mrf.mxu0
    %v450 = vadd.f32 0.0, %v449
    %451 = vmatmul.f32.gmra.mxu0 %v160
    %v452 = vpop.f32.mrf.mxu0
    %v453 = vadd.f32 0.0, %v452
    %454 = vmatmul.f32.gmra.mxu0 %v167
    %v455 = vpop.f32.mrf.mxu0
    %v456 = vadd.f32 0.0, %v455
    %457 = vmatmul.f32.gmra.mxu0 %v174
    %v458 = vpop.f32.mrf.mxu0
    %v459 = vadd.f32 0.0, %v458
    %460 = vmatmul.f32.gmra.mxu0 %v181
    %v461 = vpop.f32.mrf.mxu0
    %v462 = vadd.f32 0.0, %v461
    %463 = vmatmul.f32.gmra.mxu0 %v188
    %v464 = vpop.f32.mrf.mxu0
    %v465 = vadd.f32 0.0, %v464
    %466 = vmatmul.f32.gmra.mxu0 %v195
    %v467 = vpop.f32.mrf.mxu0
    %v468 = vadd.f32 0.0, %v467
    %469 = vdwg.mxu0
    %470 = vmatpush.msra.mxu0 %v233
    %471 = vmatpush.msra.mxu0 %v232
    %472 = vmatpush.msra.mxu0 %v231
    %473 = vmatpush.msra.mxu0 %v230
    %474 = vmatpush.msra.mxu0 %v229
    %475 = vmatpush.msra.mxu0 %v228
    %476 = vmatpush.msra.mxu0 %v227
    %477 = vmatpush.msra.mxu0 %v226
    %478 = vmatpush.msra.mxu0 %v225
    %479 = vmatpush.msra.mxu0 %v224
    %480 = vmatpush.msra.mxu0 %v223
    %481 = vmatpush.msra.mxu0 %v222
    %482 = vmatpush.msra.mxu0 %v221
    %483 = vmatpush.msra.mxu0 %v220
    %484 = vmatpush.msra.mxu0 %v219
    %485 = vmatpush.msra.mxu0 %v218
    %486 = vmatmul.f32.gmra.mxu0 %v28
    %v487 = vpop.f32.mrf.mxu0
    %v488 = vadd.f32 %v396, %v487
    %489 = vmatmul.f32.gmra.mxu0 %v35
    %v490 = vpop.f32.mrf.mxu0
    %v491 = vadd.f32 %v399, %v490
    %492 = vmatmul.f32.gmra.mxu0 %v42
    %v493 = vpop.f32.mrf.mxu0
    %v494 = vadd.f32 %v402, %v493
    %495 = vmatmul.f32.gmra.mxu0 %v49
    %v496 = vpop.f32.mrf.mxu0
    %v497 = vadd.f32 %v405, %v496
    %498 = vmatmul.f32.gmra.mxu0 %v56
    %v499 = vpop.f32.mrf.mxu0
    %v500 = vadd.f32 %v408, %v499
    %501 = vmatmul.f32.gmra.mxu0 %v63
    %v502 = vpop.f32.mrf.mxu0
    %v503 = vadd.f32 %v411, %v502
    %504 = vmatmul.f32.gmra.mxu0 %v70
    %v505 = vpop.f32.mrf.mxu0
    %v506 = vadd.f32 %v414, %v505
    %507 = vmatmul.f32.gmra.mxu0 %v77
    %v508 = vpop.f32.mrf.mxu0
    %v509 = vadd.f32 %v417, %v508
    %510 = vmatmul.f32.gmra.mxu0 %v84
    %v511 = vpop.f32.mrf.mxu0
    %v512 = vadd.f32 %v420, %v511
    %513 = vmatmul.f32.gmra.mxu0 %v91
    %v514 = vpop.f32.mrf.mxu0
    %v515 = vadd.f32 %v423, %v514
    %516 = vmatmul.f32.gmra.mxu0 %v98
    %v517 = vpop.f32.mrf.mxu0
    %v518 = vadd.f32 %v426, %v517
    %519 = vmatmul.f32.gmra.mxu0 %v105
    %v520 = vpop.f32.mrf.mxu0
    %v521 = vadd.f32 %v429, %v520
    %522 = vmatmul.f32.gmra.mxu0 %v112
    %v523 = vpop.f32.mrf.mxu0
    %v524 = vadd.f32 %v432, %v523
    %525 = vmatmul.f32.gmra.mxu0 %v119
    %v526 = vpop.f32.mrf.mxu0
    %v527 = vadd.f32 %v435, %v526
    %528 = vmatmul.f32.gmra.mxu0 %v126
    %v529 = vpop.f32.mrf.mxu0
    %v530 = vadd.f32 %v438, %v529
    %531 = vmatmul.f32.gmra.mxu0 %v133
    %v532 = vpop.f32.mrf.mxu0
    %v533 = vadd.f32 %v441, %v532
    %534 = vmatmul.f32.gmra.mxu0 %v140
    %v535 = vpop.f32.mrf.mxu0
    %v536 = vadd.f32 %v444, %v535
    %537 = vmatmul.f32.gmra.mxu0 %v147
    %v538 = vpop.f32.mrf.mxu0
    %v539 = vadd.f32 %v447, %v538
    %540 = vmatmul.f32.gmra.mxu0 %v154
    %v541 = vpop.f32.mrf.mxu0
    %v542 = vadd.f32 %v450, %v541
    %543 = vmatmul.f32.gmra.mxu0 %v161
    %v544 = vpop.f32.mrf.mxu0
    %v545 = vadd.f32 %v453, %v544
    %546 = vmatmul.f32.gmra.mxu0 %v168
    %v547 = vpop.f32.mrf.mxu0
    %v548 = vadd.f32 %v456, %v547
    %549 = vmatmul.f32.gmra.mxu0 %v175
    %v550 = vpop.f32.mrf.mxu0
    %v551 = vadd.f32 %v459, %v550
    %552 = vmatmul.f32.gmra.mxu0 %v182
    %v553 = vpop.f32.mrf.mxu0
    %v554 = vadd.f32 %v462, %v553
    %555 = vmatmul.f32.gmra.mxu0 %v189
    %v556 = vpop.f32.mrf.mxu0
    %v557 = vadd.f32 %v465, %v556
    %558 = vmatmul.f32.gmra.mxu0 %v196
    %v559 = vpop.f32.mrf.mxu0
    %v560 = vadd.f32 %v468, %v559
    %561 = vdwg.mxu0
    %562 = vmatpush.msra.mxu0 %v249
    %563 = vmatpush.msra.mxu0 %v248
    %564 = vmatpush.msra.mxu0 %v247
    %565 = vmatpush.msra.mxu0 %v246
    %566 = vmatpush.msra.mxu0 %v245
    %567 = vmatpush.msra.mxu0 %v244
    %568 = vmatpush.msra.mxu0 %v243
    %569 = vmatpush.msra.mxu0 %v242
    %570 = vmatpush.msra.mxu0 %v241
    %571 = vmatpush.msra.mxu0 %v240
    %572 = vmatpush.msra.mxu0 %v239
    %573 = vmatpush.msra.mxu0 %v238
    %574 = vmatpush.msra.mxu0 %v237
    %575 = vmatpush.msra.mxu0 %v236
    %576 = vmatpush.msra.mxu0 %v235
    %577 = vmatpush.msra.mxu0 %v234
    %578 = vmatmul.f32.gmra.mxu0 %v29
    %v579 = vpop.f32.mrf.mxu0
    %v580 = vadd.f32 %v488, %v579
    %581 = vmatmul.f32.gmra.mxu0 %v36
    %v582 = vpop.f32.mrf.mxu0
    %v583 = vadd.f32 %v491, %v582
    %584 = vmatmul.f32.gmra.mxu0 %v43
    %v585 = vpop.f32.mrf.mxu0
    %v586 = vadd.f32 %v494, %v585
    %587 = vmatmul.f32.gmra.mxu0 %v50
    %v588 = vpop.f32.mrf.mxu0
    %v589 = vadd.f32 %v497, %v588
    %590 = vmatmul.f32.gmra.mxu0 %v57
    %v591 = vpop.f32.mrf.mxu0
    %v592 = vadd.f32 %v500, %v591
    %593 = vmatmul.f32.gmra.mxu0 %v64
    %v594 = vpop.f32.mrf.mxu0
    %v595 = vadd.f32 %v503, %v594
    %596 = vmatmul.f32.gmra.mxu0 %v71
    %v597 = vpop.f32.mrf.mxu0
    %v598 = vadd.f32 %v506, %v597
    %599 = vmatmul.f32.gmra.mxu0 %v78
    %v600 = vpop.f32.mrf.mxu0
    %v601 = vadd.f32 %v509, %v600
    %602 = vmatmul.f32.gmra.mxu0 %v85
    %v603 = vpop.f32.mrf.mxu0
    %v604 = vadd.f32 %v512, %v603
    %605 = vmatmul.f32.gmra.mxu0 %v92
    %v606 = vpop.f32.mrf.mxu0
    %v607 = vadd.f32 %v515, %v606
    %608 = vmatmul.f32.gmra.mxu0 %v99
    %v609 = vpop.f32.mrf.mxu0
    %v610 = vadd.f32 %v518, %v609
    %611 = vmatmul.f32.gmra.mxu0 %v106
    %v612 = vpop.f32.mrf.mxu0
    %v613 = vadd.f32 %v521, %v612
    %614 = vmatmul.f32.gmra.mxu0 %v113
    %v615 = vpop.f32.mrf.mxu0
    %v616 = vadd.f32 %v524, %v615
    %617 = vmatmul.f32.gmra.mxu0 %v120
    %v618 = vpop.f32.mrf.mxu0
    %v619 = vadd.f32 %v527, %v618
    %620 = vmatmul.f32.gmra.mxu0 %v127
    %v621 = vpop.f32.mrf.mxu0
    %v622 = vadd.f32 %v530, %v621
    %623 = vmatmul.f32.gmra.mxu0 %v134
    %v624 = vpop.f32.mrf.mxu0
    %v625 = vadd.f32 %v533, %v624
    %626 = vmatmul.f32.gmra.mxu0 %v141
    %v627 = vpop.f32.mrf.mxu0
    %v628 = vadd.f32 %v536, %v627
    %629 = vmatmul.f32.gmra.mxu0 %v148
    %v630 = vpop.f32.mrf.mxu0
    %v631 = vadd.f32 %v539, %v630
    %632 = vmatmul.f32.gmra.mxu0 %v155
    %v633 = vpop.f32.mrf.mxu0
    %v634 = vadd.f32 %v542, %v633
    %635 = vmatmul.f32.gmra.mxu0 %v162
    %v636 = vpop.f32.mrf.mxu0
    %v637 = vadd.f32 %v545, %v636
    %638 = vmatmul.f32.gmra.mxu0 %v169
    %v639 = vpop.f32.mrf.mxu0
    %v640 = vadd.f32 %v548, %v639
    %641 = vmatmul.f32.gmra.mxu0 %v176
    %v642 = vpop.f32.mrf.mxu0
    %v643 = vadd.f32 %v551, %v642
    %644 = vmatmul.f32.gmra.mxu0 %v183
    %v645 = vpop.f32.mrf.mxu0
    %v646 = vadd.f32 %v554, %v645
    %647 = vmatmul.f32.gmra.mxu0 %v190
    %v648 = vpop.f32.mrf.mxu0
    %v649 = vadd.f32 %v557, %v648
    %650 = vmatmul.f32.gmra.mxu0 %v197
    %v651 = vpop.f32.mrf.mxu0
    %v652 = vadd.f32 %v560, %v651
    %653 = vdwg.mxu0
    %654 = vmatpush.msra.mxu0 %v265
    %655 = vmatpush.msra.mxu0 %v264
    %656 = vmatpush.msra.mxu0 %v263
    %657 = vmatpush.msra.mxu0 %v262
    %658 = vmatpush.msra.mxu0 %v261
    %659 = vmatpush.msra.mxu0 %v260
    %660 = vmatpush.msra.mxu0 %v259
    %661 = vmatpush.msra.mxu0 %v258
    %662 = vmatpush.msra.mxu0 %v257
    %663 = vmatpush.msra.mxu0 %v256
    %664 = vmatpush.msra.mxu0 %v255
    %665 = vmatpush.msra.mxu0 %v254
    %666 = vmatpush.msra.mxu0 %v253
    %667 = vmatpush.msra.mxu0 %v252
    %668 = vmatpush.msra.mxu0 %v251
    %669 = vmatpush.msra.mxu0 %v250
    %670 = vmatmul.f32.gmra.mxu0 %v30
    %v671 = vpop.f32.mrf.mxu0
    %v672 = vadd.f32 %v580, %v671
    %673 = vmatmul.f32.gmra.mxu0 %v37
    %v674 = vpop.f32.mrf.mxu0
    %v675 = vadd.f32 %v583, %v674
    %676 = vmatmul.f32.gmra.mxu0 %v44
    %v677 = vpop.f32.mrf.mxu0
    %v678 = vadd.f32 %v586, %v677
    %679 = vmatmul.f32.gmra.mxu0 %v51
    %v680 = vpop.f32.mrf.mxu0
    %v681 = vadd.f32 %v589, %v680
    %682 = vmatmul.f32.gmra.mxu0 %v58
    %v683 = vpop.f32.mrf.mxu0
    %v684 = vadd.f32 %v592, %v683
    %685 = vmatmul.f32.gmra.mxu0 %v65
    %v686 = vpop.f32.mrf.mxu0
    %v687 = vadd.f32 %v595, %v686
    %688 = vmatmul.f32.gmra.mxu0 %v72
    %v689 = vpop.f32.mrf.mxu0
    %v690 = vadd.f32 %v598, %v689
    %691 = vmatmul.f32.gmra.mxu0 %v79
    %v692 = vpop.f32.mrf.mxu0
    %v693 = vadd.f32 %v601, %v692
    %694 = vmatmul.f32.gmra.mxu0 %v86
    %v695 = vpop.f32.mrf.mxu0
    %v696 = vadd.f32 %v604, %v695
    %697 = vmatmul.f32.gmra.mxu0 %v93
    %v698 = vpop.f32.mrf.mxu0
    %v699 = vadd.f32 %v607, %v698
    %700 = vmatmul.f32.gmra.mxu0 %v100
    %v701 = vpop.f32.mrf.mxu0
    %v702 = vadd.f32 %v610, %v701
    %703 = vmatmul.f32.gmra.mxu0 %v107
    %v704 = vpop.f32.mrf.mxu0
    %v705 = vadd.f32 %v613, %v704
    %706 = vmatmul.f32.gmra.mxu0 %v114
    %v707 = vpop.f32.mrf.mxu0
    %v708 = vadd.f32 %v616, %v707
    %709 = vmatmul.f32.gmra.mxu0 %v121
    %v710 = vpop.f32.mrf.mxu0
    %v711 = vadd.f32 %v619, %v710
    %712 = vmatmul.f32.gmra.mxu0 %v128
    %v713 = vpop.f32.mrf.mxu0
    %v714 = vadd.f32 %v622, %v713
    %715 = vmatmul.f32.gmra.mxu0 %v135
    %v716 = vpop.f32.mrf.mxu0
    %v717 = vadd.f32 %v625, %v716
    %718 = vmatmul.f32.gmra.mxu0 %v142
    %v719 = vpop.f32.mrf.mxu0
    %v720 = vadd.f32 %v628, %v719
    %721 = vmatmul.f32.gmra.mxu0 %v149
    %v722 = vpop.f32.mrf.mxu0
    %v723 = vadd.f32 %v631, %v722
    %724 = vmatmul.f32.gmra.mxu0 %v156
    %v725 = vpop.f32.mrf.mxu0
    %v726 = vadd.f32 %v634, %v725
    %727 = vmatmul.f32.gmra.mxu0 %v163
    %v728 = vpop.f32.mrf.mxu0
    %v729 = vadd.f32 %v637, %v728
    %730 = vmatmul.f32.gmra.mxu0 %v170
    %v731 = vpop.f32.mrf.mxu0
    %v732 = vadd.f32 %v640, %v731
    %733 = vmatmul.f32.gmra.mxu0 %v177
    %v734 = vpop.f32.mrf.mxu0
    %v735 = vadd.f32 %v643, %v734
    %736 = vmatmul.f32.gmra.mxu0 %v184
    %v737 = vpop.f32.mrf.mxu0
    %v738 = vadd.f32 %v646, %v737
    %739 = vmatmul.f32.gmra.mxu0 %v191
    %v740 = vpop.f32.mrf.mxu0
    %v741 = vadd.f32 %v649, %v740
    %742 = vmatmul.f32.gmra.mxu0 %v198
    %v743 = vpop.f32.mrf.mxu0
    %v744 = vadd.f32 %v652, %v743
    %745 = vdwg.mxu0
    %746 = vmatpush.msra.mxu0 %v281
    %747 = vmatpush.msra.mxu0 %v280
    %748 = vmatpush.msra.mxu0 %v279
    %749 = vmatpush.msra.mxu0 %v278
    %750 = vmatpush.msra.mxu0 %v277
    %751 = vmatpush.msra.mxu0 %v276
    %752 = vmatpush.msra.mxu0 %v275
    %753 = vmatpush.msra.mxu0 %v274
    %754 = vmatpush.msra.mxu0 %v273
    %755 = vmatpush.msra.mxu0 %v272
    %756 = vmatpush.msra.mxu0 %v271
    %757 = vmatpush.msra.mxu0 %v270
    %758 = vmatpush.msra.mxu0 %v269
    %759 = vmatpush.msra.mxu0 %v268
    %760 = vmatpush.msra.mxu0 %v267
    %761 = vmatpush.msra.mxu0 %v266
    %762 = vmatmul.f32.gmra.mxu0 %v31
    %v763 = vpop.f32.mrf.mxu0
    %v764 = vadd.f32 %v672, %v763
    %765 = vmatmul.f32.gmra.mxu0 %v38
    %v766 = vpop.f32.mrf.mxu0
    %v767 = vadd.f32 %v675, %v766
    %768 = vmatmul.f32.gmra.mxu0 %v45
    %v769 = vpop.f32.mrf.mxu0
    %v770 = vadd.f32 %v678, %v769
    %771 = vmatmul.f32.gmra.mxu0 %v52
    %v772 = vpop.f32.mrf.mxu0
    %v773 = vadd.f32 %v681, %v772
    %774 = vmatmul.f32.gmra.mxu0 %v59
    %v775 = vpop.f32.mrf.mxu0
    %v776 = vadd.f32 %v684, %v775
    %777 = vmatmul.f32.gmra.mxu0 %v66
    %v778 = vpop.f32.mrf.mxu0
    %v779 = vadd.f32 %v687, %v778
    %780 = vmatmul.f32.gmra.mxu0 %v73
    %v781 = vpop.f32.mrf.mxu0
    %v782 = vadd.f32 %v690, %v781
    %783 = vmatmul.f32.gmra.mxu0 %v80
    %v784 = vpop.f32.mrf.mxu0
    %v785 = vadd.f32 %v693, %v784
    %786 = vmatmul.f32.gmra.mxu0 %v87
    %v787 = vpop.f32.mrf.mxu0
    %v788 = vadd.f32 %v696, %v787
    %789 = vmatmul.f32.gmra.mxu0 %v94
    %v790 = vpop.f32.mrf.mxu0
    %v791 = vadd.f32 %v699, %v790
    %792 = vmatmul.f32.gmra.mxu0 %v101
    %v793 = vpop.f32.mrf.mxu0
    %v794 = vadd.f32 %v702, %v793
    %795 = vmatmul.f32.gmra.mxu0 %v108
    %v796 = vpop.f32.mrf.mxu0
    %v797 = vadd.f32 %v705, %v796
    %798 = vmatmul.f32.gmra.mxu0 %v115
    %v799 = vpop.f32.mrf.mxu0
    %v800 = vadd.f32 %v708, %v799
    %801 = vmatmul.f32.gmra.mxu0 %v122
    %v802 = vpop.f32.mrf.mxu0
    %v803 = vadd.f32 %v711, %v802
    %804 = vmatmul.f32.gmra.mxu0 %v129
    %v805 = vpop.f32.mrf.mxu0
    %v806 = vadd.f32 %v714, %v805
    %807 = vmatmul.f32.gmra.mxu0 %v136
    %v808 = vpop.f32.mrf.mxu0
    %v809 = vadd.f32 %v717, %v808
    %810 = vmatmul.f32.gmra.mxu0 %v143
    %v811 = vpop.f32.mrf.mxu0
    %v812 = vadd.f32 %v720, %v811
    %813 = vmatmul.f32.gmra.mxu0 %v150
    %v814 = vpop.f32.mrf.mxu0
    %v815 = vadd.f32 %v723, %v814
    %816 = vmatmul.f32.gmra.mxu0 %v157
    %v817 = vpop.f32.mrf.mxu0
    %v818 = vadd.f32 %v726, %v817
    %819 = vmatmul.f32.gmra.mxu0 %v164
    %v820 = vpop.f32.mrf.mxu0
    %v821 = vadd.f32 %v729, %v820
    %822 = vmatmul.f32.gmra.mxu0 %v171
    %v823 = vpop.f32.mrf.mxu0
    %v824 = vadd.f32 %v732, %v823
    %825 = vmatmul.f32.gmra.mxu0 %v178
    %v826 = vpop.f32.mrf.mxu0
    %v827 = vadd.f32 %v735, %v826
    %828 = vmatmul.f32.gmra.mxu0 %v185
    %v829 = vpop.f32.mrf.mxu0
    %v830 = vadd.f32 %v738, %v829
    %831 = vmatmul.f32.gmra.mxu0 %v192
    %v832 = vpop.f32.mrf.mxu0
    %v833 = vadd.f32 %v741, %v832
    %834 = vmatmul.f32.gmra.mxu0 %v199
    %v835 = vpop.f32.mrf.mxu0
    %v836 = vadd.f32 %v744, %v835
    %837 = vdwg.mxu0
    %838 = vmatpush.msra.mxu0 %v297
    %839 = vmatpush.msra.mxu0 %v296
    %840 = vmatpush.msra.mxu0 %v295
    %841 = vmatpush.msra.mxu0 %v294
    %842 = vmatpush.msra.mxu0 %v293
    %843 = vmatpush.msra.mxu0 %v292
    %844 = vmatpush.msra.mxu0 %v291
    %845 = vmatpush.msra.mxu0 %v290
    %846 = vmatpush.msra.mxu0 %v289
    %847 = vmatpush.msra.mxu0 %v288
    %848 = vmatpush.msra.mxu0 %v287
    %849 = vmatpush.msra.mxu0 %v286
    %850 = vmatpush.msra.mxu0 %v285
    %851 = vmatpush.msra.mxu0 %v284
    %852 = vmatpush.msra.mxu0 %v283
    %853 = vmatpush.msra.mxu0 %v282
    %854 = vmatmul.f32.gmra.mxu0 %v32
    %v855 = vpop.f32.mrf.mxu0
    %v856 = vadd.f32 %v764, %v855
    %857 = vmatmul.f32.gmra.mxu0 %v39
    %v858 = vpop.f32.mrf.mxu0
    %v859 = vadd.f32 %v767, %v858
    %860 = vmatmul.f32.gmra.mxu0 %v46
    %v861 = vpop.f32.mrf.mxu0
    %v862 = vadd.f32 %v770, %v861
    %863 = vmatmul.f32.gmra.mxu0 %v53
    %v864 = vpop.f32.mrf.mxu0
    %v865 = vadd.f32 %v773, %v864
    %866 = vmatmul.f32.gmra.mxu0 %v60
    %v867 = vpop.f32.mrf.mxu0
    %v868 = vadd.f32 %v776, %v867
    %869 = vmatmul.f32.gmra.mxu0 %v67
    %v870 = vpop.f32.mrf.mxu0
    %v871 = vadd.f32 %v779, %v870
    %872 = vmatmul.f32.gmra.mxu0 %v74
    %v873 = vpop.f32.mrf.mxu0
    %v874 = vadd.f32 %v782, %v873
    %875 = vmatmul.f32.gmra.mxu0 %v81
    %v876 = vpop.f32.mrf.mxu0
    %v877 = vadd.f32 %v785, %v876
    %878 = vmatmul.f32.gmra.mxu0 %v88
    %v879 = vpop.f32.mrf.mxu0
    %v880 = vadd.f32 %v788, %v879
    %881 = vmatmul.f32.gmra.mxu0 %v95
    %v882 = vpop.f32.mrf.mxu0
    %v883 = vadd.f32 %v791, %v882
    %884 = vmatmul.f32.gmra.mxu0 %v102
    %v885 = vpop.f32.mrf.mxu0
    %v886 = vadd.f32 %v794, %v885
    %887 = vmatmul.f32.gmra.mxu0 %v109
    %v888 = vpop.f32.mrf.mxu0
    %v889 = vadd.f32 %v797, %v888
    %890 = vmatmul.f32.gmra.mxu0 %v116
    %v891 = vpop.f32.mrf.mxu0
    %v892 = vadd.f32 %v800, %v891
    %893 = vmatmul.f32.gmra.mxu0 %v123
    %v894 = vpop.f32.mrf.mxu0
    %v895 = vadd.f32 %v803, %v894
    %896 = vmatmul.f32.gmra.mxu0 %v130
    %v897 = vpop.f32.mrf.mxu0
    %v898 = vadd.f32 %v806, %v897
    %899 = vmatmul.f32.gmra.mxu0 %v137
    %v900 = vpop.f32.mrf.mxu0
    %v901 = vadd.f32 %v809, %v900
    %902 = vmatmul.f32.gmra.mxu0 %v144
    %v903 = vpop.f32.mrf.mxu0
    %v904 = vadd.f32 %v812, %v903
    %905 = vmatmul.f32.gmra.mxu0 %v151
    %v906 = vpop.f32.mrf.mxu0
    %v907 = vadd.f32 %v815, %v906
    %908 = vmatmul.f32.gmra.mxu0 %v158
    %v909 = vpop.f32.mrf.mxu0
    %v910 = vadd.f32 %v818, %v909
    %911 = vmatmul.f32.gmra.mxu0 %v165
    %v912 = vpop.f32.mrf.mxu0
    %v913 = vadd.f32 %v821, %v912
    %914 = vmatmul.f32.gmra.mxu0 %v172
    %v915 = vpop.f32.mrf.mxu0
    %v916 = vadd.f32 %v824, %v915
    %917 = vmatmul.f32.gmra.mxu0 %v179
    %v918 = vpop.f32.mrf.mxu0
    %v919 = vadd.f32 %v827, %v918
    %920 = vmatmul.f32.gmra.mxu0 %v186
    %v921 = vpop.f32.mrf.mxu0
    %v922 = vadd.f32 %v830, %v921
    %923 = vmatmul.f32.gmra.mxu0 %v193
    %v924 = vpop.f32.mrf.mxu0
    %v925 = vadd.f32 %v833, %v924
    %926 = vmatmul.f32.gmra.mxu0 %v200
    %v927 = vpop.f32.mrf.mxu0
    %v928 = vadd.f32 %v836, %v927
    %929 = vdwg.mxu0
    %930 = vmatpush.msra.mxu0 0.0
    %931 = vmatpush.msra.mxu0 0.0
    %932 = vmatpush.msra.mxu0 0.0
    %933 = vmatpush.msra.mxu0 0.0
    %934 = vmatpush.msra.mxu0 0.0
    %935 = vmatpush.msra.mxu0 0.0
    %936 = vmatpush.msra.mxu0 0.0
    %937 = vmatpush.msra.mxu0 0.0
    %938 = vmatpush.msra.mxu0 0.0
    %939 = vmatpush.msra.mxu0 0.0
    %940 = vmatpush.msra.mxu0 0.0
    %941 = vmatpush.msra.mxu0 0.0
    %942 = vmatpush.msra.mxu0 %v301
    %943 = vmatpush.msra.mxu0 %v300
    %944 = vmatpush.msra.mxu0 %v299
    %945 = vmatpush.msra.mxu0 %v298
    %946 = vmatmul.f32.gmra.mxu0 %v304
    %v947 = vpop.f32.mrf.mxu0
    %v948 = vadd.f32 %v856, %v947
    %949 = vmatmul.f32.gmra.mxu0 %v307
    %v950 = vpop.f32.mrf.mxu0
    %v951 = vadd.f32 %v859, %v950
    %952 = vmatmul.f32.gmra.mxu0 %v310
    %v953 = vpop.f32.mrf.mxu0
    %v954 = vadd.f32 %v862, %v953
    %955 = vmatmul.f32.gmra.mxu0 %v313
    %v956 = vpop.f32.mrf.mxu0
    %v957 = vadd.f32 %v865, %v956
    %958 = vmatmul.f32.gmra.mxu0 %v316
    %v959 = vpop.f32.mrf.mxu0
    %v960 = vadd.f32 %v868, %v959
    %961 = vmatmul.f32.gmra.mxu0 %v319
    %v962 = vpop.f32.mrf.mxu0
    %v963 = vadd.f32 %v871, %v962
    %964 = vmatmul.f32.gmra.mxu0 %v322
    %v965 = vpop.f32.mrf.mxu0
    %v966 = vadd.f32 %v874, %v965
    %967 = vmatmul.f32.gmra.mxu0 %v325
    %v968 = vpop.f32.mrf.mxu0
    %v969 = vadd.f32 %v877, %v968
    %970 = vmatmul.f32.gmra.mxu0 %v328
    %v971 = vpop.f32.mrf.mxu0
    %v972 = vadd.f32 %v880, %v971
    %973 = vmatmul.f32.gmra.mxu0 %v331
    %v974 = vpop.f32.mrf.mxu0
    %v975 = vadd.f32 %v883, %v974
    %976 = vmatmul.f32.gmra.mxu0 %v334
    %v977 = vpop.f32.mrf.mxu0
    %v978 = vadd.f32 %v886, %v977
    %979 = vmatmul.f32.gmra.mxu0 %v337
    %v980 = vpop.f32.mrf.mxu0
    %v981 = vadd.f32 %v889, %v980
    %982 = vmatmul.f32.gmra.mxu0 %v340
    %v983 = vpop.f32.mrf.mxu0
    %v984 = vadd.f32 %v892, %v983
    %985 = vmatmul.f32.gmra.mxu0 %v343
    %v986 = vpop.f32.mrf.mxu0
    %v987 = vadd.f32 %v895, %v986
    %988 = vmatmul.f32.gmra.mxu0 %v346
    %v989 = vpop.f32.mrf.mxu0
    %v990 = vadd.f32 %v898, %v989
    %991 = vmatmul.f32.gmra.mxu0 %v349
    %v992 = vpop.f32.mrf.mxu0
    %v993 = vadd.f32 %v901, %v992
    %994 = vmatmul.f32.gmra.mxu0 %v352
    %v995 = vpop.f32.mrf.mxu0
    %v996 = vadd.f32 %v904, %v995
    %997 = vmatmul.f32.gmra.mxu0 %v355
    %v998 = vpop.f32.mrf.mxu0
    %v999 = vadd.f32 %v907, %v998
    %1000 = vmatmul.f32.gmra.mxu0 %v358
    %v1001 = vpop.f32.mrf.mxu0
    %v1002 = vadd.f32 %v910, %v1001
    %1003 = vmatmul.f32.gmra.mxu0 %v361
    %v1004 = vpop.f32.mrf.mxu0
    %v1005 = vadd.f32 %v913, %v1004
    %1006 = vmatmul.f32.gmra.mxu0 %v364
    %v1007 = vpop.f32.mrf.mxu0
    %v1008 = vadd.f32 %v916, %v1007
    %1009 = vmatmul.f32.gmra.mxu0 %v367
    %v1010 = vpop.f32.mrf.mxu0
    %v1011 = vadd.f32 %v919, %v1010
    %1012 = vmatmul.f32.gmra.mxu0 %v370
    %v1013 = vpop.f32.mrf.mxu0
    %v1014 = vadd.f32 %v922, %v1013
    %1015 = vmatmul.f32.gmra.mxu0 %v373
    %v1016 = vpop.f32.mrf.mxu0
    %v1017 = vadd.f32 %v925, %v1016
    %1018 = vmatmul.f32.gmra.mxu0 %v376
    %v1019 = vpop.f32.mrf.mxu0
    %v1020 = vadd.f32 %v928, %v1019
    %1021 = vdwg.mxu0
    %vm1029 = vcmask 1045504
    %v1030 = vrot.slane %v966, 2
    %v1031 = vrot.slane %v969, 2
    %v1032 = vsel %vm1029, %v1030, %v1031
    %v1033 = vrot.slane %v972, 2
    %v1034 = vsel %vm1029, %v1031, %v1033
    %v1035 = vrot.slane %v975, 2
    %v1036 = vsel %vm1029, %v1033, %v1035
    %v1037 = vrot.slane %v978, 2
    %v1038 = vsel %vm1029, %v1035, %v1037
    %v1039 = vrot.slane %v981, 2
    %v1040 = vsel %vm1029, %v1037, %v1039
    %v1041 = vrot.slane %v984, 2
    %v1042 = vsel %vm1029, %v1039, %v1041
    %v1050 = vmax.f32 %v948, %v1032
    %v1051 = vmax.f32 %v951, %v1034
    %v1052 = vmax.f32 %v954, %v1036
    %v1053 = vmax.f32 %v957, %v1038
    %v1054 = vmax.f32 %v960, %v1040
    %v1055 = vmax.f32 %v963, %v1042
    %v1056 = vmax.f32 %v966, %v1041
    %vm1063 = vcmask 1043456
    %v1064 = vrot.slane %v984, 4
    %v1065 = vrot.slane %v987, 4
    %v1066 = vsel %vm1063, %v1064, %v1065
    %v1067 = vrot.slane %v990, 4
    %v1068 = vsel %vm1063, %v1065, %v1067
    %v1069 = vrot.slane %v993, 4
    %v1070 = vsel %vm1063, %v1067, %v1069
    %v1071 = vrot.slane %v996, 4
    %v1072 = vsel %vm1063, %v1069, %v1071
    %v1073 = vrot.slane %v999, 4
    %v1074 = vsel %vm1063, %v1071, %v1073
    %v1075 = vrot.slane %v1002, 4
    %v1076 = vsel %vm1063, %v1073, %v1075
    %v1084 = vmax.f32 %v1050, %v1066
    %v1085 = vmax.f32 %v1051, %v1068
    %v1086 = vmax.f32 %v1052, %v1070
    %v1087 = vmax.f32 %v1053, %v1072
    %v1088 = vmax.f32 %v1054, %v1074
    %v1089 = vmax.f32 %v1055, %v1076
    %v1090 = vmax.f32 %v1056, %v1075
    %vm1097 = vcmask 1041408
    %v1098 = vrot.slane %v1002, 6
    %v1099 = vrot.slane %v1005, 6
    %v1100 = vsel %vm1097, %v1098, %v1099
    %v1101 = vrot.slane %v1008, 6
    %v1102 = vsel %vm1097, %v1099, %v1101
    %v1103 = vrot.slane %v1011, 6
    %v1104 = vsel %vm1097, %v1101, %v1103
    %v1105 = vrot.slane %v1014, 6
    %v1106 = vsel %vm1097, %v1103, %v1105
    %v1107 = vrot.slane %v1017, 6
    %v1108 = vsel %vm1097, %v1105, %v1107
    %v1109 = vrot.slane %v1020, 6
    %v1110 = vsel %vm1097, %v1107, %v1109
    %v1118 = vmax.f32 %v1084, %v1100
    %v1119 = vmax.f32 %v1085, %v1102
    %v1120 = vmax.f32 %v1086, %v1104
    %v1121 = vmax.f32 %v1087, %v1106
    %v1122 = vmax.f32 %v1088, %v1108
    %v1123 = vmax.f32 %v1089, %v1110
    %v1124 = vmax.f32 %v1090, %v1109
    %v1125 = vld [vmem:[%s2] sm:$0x1]
    %v1127 = vperm.slane %v1125, 0
    %v1129 = vadd.f32 %v1118, %v1127
    %v1130 = vadd.f32 %v1119, %v1127
    %v1131 = vadd.f32 %v1120, %v1127
    %v1132 = vadd.f32 %v1121, %v1127
    %v1133 = vadd.f32 %v1122, %v1127
    %v1134 = vadd.f32 %v1123, %v1127
    %v1135 = vadd.f32 %v1124, %v1127
    %v1136 = vmax.f32 %v1129, 0.0
    %v1137 = vmax.f32 %v1130, 0.0
    %v1138 = vmax.f32 %v1131, 0.0
    %v1139 = vmax.f32 %v1132, 0.0
    %v1140 = vmax.f32 %v1133, 0.0
    %v1141 = vmax.f32 %v1134, 0.0
    %v1142 = vmax.f32 %v1135, 0.0
    %v1143 = vld [vmem:[%s3] sm:$0xff]
    %v1144 = vld [vmem:[%s3 + $0x8] sm:$0xff]
    %v1145 = vld [vmem:[%s3 + $0x10] sm:$0xff]
    %v1146 = vld [vmem:[%s3 + $0x18] sm:$0xff]
    %v1147 = vld [vmem:[%s3 + $0x20] sm:$0xff]
    %v1148 = vld [vmem:[%s3 + $0x28] sm:$0xff]
    %v1149 = vld [vmem:[%s3 + $0x30] sm:$0xff]
    %v1150 = vld [vmem:[%s3 + $0x38] sm:$0xff]
    %v1151 = vld [vmem:[%s3 + $0x40] sm:$0xff]
    %v1152 = vld [vmem:[%s3 + $0x48] sm:$0xff]
    %v1153 = vld [vmem:[%s3 + $0x50] sm:$0xff]
    %v1154 = vld [vmem:[%s3 + $0x58] sm:$0xff]
    %v1155 = vld [vmem:[%s3 + $0x60] sm:$0xff]
    %v1156 = vld [vmem:[%s3 + $0x68] sm:$0xff]
    %v1157 = vld [vmem:[%s3 + $0x70] sm:$0xff]
    %v1158 = vld [vmem:[%s3 + $0x78] sm:$0xff]
    %v1160 = vrot.slane %v1136, 2
    %vm1161 = vcmask 523264
    %v1162 = vsel %vm1161, %v1160, 0
    %1164 = vmatpush.msra.mxu0 0.0
    %1165 = vmatpush.msra.mxu0 0.0
    %1166 = vmatpush.msra.mxu0 0.0
    %1167 = vmatpush.msra.mxu0 0.0
    %1168 = vmatpush.msra.mxu0 0.0
    %1169 = vmatpush.msra.mxu0 0.0
    %1170 = vmatpush.msra.mxu0 0.0
    %1171 = vmatpush.msra.mxu0 0.0
    %1172 = vmatpush.msra.mxu0 %v1158
    %1173 = vmatpush.msra.mxu0 %v1157
    %1174 = vmatpush.msra.mxu0 %v1156
    %1175 = vmatpush.msra.mxu0 %v1155
    %1176 = vmatpush.msra.mxu0 %v1154
    %1177 = vmatpush.msra.mxu0 %v1153
    %1178 = vmatpush.msra.mxu0 %v1152
    %1179 = vmatpush.msra.mxu0 %v1151
    %1180 = vmatmul.f32.gmra.mxu0 %v1162
    %v1181 = vpop.f32.mrf.mxu0
    %v1182 = vadd.f32 0.0, %v1181
    %1183 = vdwg.mxu0
    %v1184 = vsel %vm1161, %v1136, 0
    %1186 = vmatpush.msra.mxu0 0.0
    %1187 = vmatpush.msra.mxu0 0.0
    %1188 = vmatpush.msra.mxu0 0.0
    %1189 = vmatpush.msra.mxu0 0.0
    %1190 = vmatpush.msra.mxu0 0.0
    %1191 = vmatpush.msra.mxu0 0.0
    %1192 = vmatpush.msra.mxu0 0.0
    %1193 = vmatpush.msra.mxu0 0.0
    %1194 = vmatpush.msra.mxu0 %v1150
    %1195 = vmatpush.msra.mxu0 %v1149
    %1196 = vmatpush.msra.mxu0 %v1148
    %1197 = vmatpush.msra.mxu0 %v1147
    %1198 = vmatpush.msra.mxu0 %v1146
    %1199 = vmatpush.msra.mxu0 %v1145
    %1200 = vmatpush.msra.mxu0 %v1144
    %1201 = vmatpush.msra.mxu0 %v1143
    %1202 = vmatmul.f32.gmra.mxu0 %v1184
    %v1203 = vpop.f32.mrf.mxu0
    %v1204 = vadd.f32 %v1182, %v1203
    %1205 = vdwg.mxu0
    %v1206 = vld [vmem:[%s3 + $0x80] sm:$0xff]
    %v1207 = vld [vmem:[%s3 + $0x88] sm:$0xff]
    %v1208 = vld [vmem:[%s3 + $0x90] sm:$0xff]
    %v1209 = vld [vmem:[%s3 + $0x98] sm:$0xff]
    %v1210 = vld [vmem:[%s3 + $0xa0] sm:$0xff]
    %v1211 = vld [vmem:[%s3 + $0xa8] sm:$0xff]
    %v1212 = vld [vmem:[%s3 + $0xb0] sm:$0xff]
    %v1213 = vld [vmem:[%s3 + $0xb8] sm:$0xff]
    %v1214 = vrot.slane %v1136, 4
    %v1215 = vsel %vm1161, %v1214, 0
    %1217 = vmatpush.msra.mxu0 0.0
    %1218 = vmatpush.msra.mxu0 0.0
    %1219 = vmatpush.msra.mxu0 0.0
    %1220 = vmatpush.msra.mxu0 0.0
    %1221 = vmatpush.msra.mxu0 0.0
    %1222 = vmatpush.msra.mxu0 0.0
    %1223 = vmatpush.msra.mxu0 0.0
    %1224 = vmatpush.msra.mxu0 0.0
    %1225 = vmatpush.msra.mxu0 %v1213
    %1226 = vmatpush.msra.mxu0 %v1212
    %1227 = vmatpush.msra.mxu0 %v1211
    %1228 = vmatpush.msra.mxu0 %v1210
    %1229 = vmatpush.msra.mxu0 %v1209
    %1230 = vmatpush.msra.mxu0 %v1208
    %1231 = vmatpush.msra.mxu0 %v1207
    %1232 = vmatpush.msra.mxu0 %v1206
    %1233 = vmatmul.f32.gmra.mxu0 %v1215
    %v1234 = vpop.f32.mrf.mxu0
    %v1235 = vadd.f32 0.0, %v1234
    %1236 = vdwg.mxu0
    %v1237 = vadd.f32 %v1204, %v1235
    %v1238 = vld [vmem:[%s3 + $0xc0] sm:$0xff]
    %v1239 = vld [vmem:[%s3 + $0xc8] sm:$0xff]
    %v1240 = vld [vmem:[%s3 + $0xd0] sm:$0xff]
    %v1241 = vld [vmem:[%s3 + $0xd8] sm:$0xff]
    %v1242 = vld [vmem:[%s3 + $0xe0] sm:$0xff]
    %v1243 = vld [vmem:[%s3 + $0xe8] sm:$0xff]
    %v1244 = vld [vmem:[%s3 + $0xf0] sm:$0xff]
    %v1245 = vld [vmem:[%s3 + $0xf8] sm:$0xff]
    %v1246 = vrot.slane %v1136, 6
    %v1247 = vsel %vm1161, %v1246, 0
    %1249 = vmatpush.msra.mxu0 0.0
    %1250 = vmatpush.msra.mxu0 0.0
    %1251 = vmatpush.msra.mxu0 0.0
    %1252 = vmatpush.msra.mxu0 0.0
    %1253 = vmatpush.msra.mxu0 0.0
    %1254 = vmatpush.msra.mxu0 0.0
    %1255 = vmatpush.msra.mxu0 0.0
    %1256 = vmatpush.msra.mxu0 0.0
    %1257 = vmatpush.msra.mxu0 %v1245
    %1258 = vmatpush.msra.mxu0 %v1244
    %1259 = vmatpush.msra.mxu0 %v1243
    %1260 = vmatpush.msra.mxu0 %v1242
    %1261 = vmatpush.msra.mxu0 %v1241
    %1262 = vmatpush.msra.mxu0 %v1240
    %1263 = vmatpush.msra.mxu0 %v1239
    %1264 = vmatpush.msra.mxu0 %v1238
    %1265 = vmatmul.f32.gmra.mxu0 %v1247
    %v1266 = vpop.f32.mrf.mxu0
    %v1267 = vadd.f32 0.0, %v1266
    %1268 = vdwg.mxu0
    %v1269 = vadd.f32 %v1237, %v1267
    %v1270 = vld [vmem:[%s3 + $0x100] sm:$0xff]
    %v1271 = vld [vmem:[%s3 + $0x108] sm:$0xff]
    %v1272 = vld [vmem:[%s3 + $0x110] sm:$0xff]
    %v1273 = vld [vmem:[%s3 + $0x118] sm:$0xff]
    %v1274 = vld [vmem:[%s3 + $0x120] sm:$0xff]
    %v1275 = vld [vmem:[%s3 + $0x128] sm:$0xff]
    %v1276 = vld [vmem:[%s3 + $0x130] sm:$0xff]
    %v1277 = vld [vmem:[%s3 + $0x138] sm:$0xff]
    %v1279 = vsel %vm1161, %v1137, 0
    %1281 = vmatpush.msra.mxu0 0.0
    %1282 = vmatpush.msra.mxu0 0.0
    %1283 = vmatpush.msra.mxu0 0.0
    %1284 = vmatpush.msra.mxu0 0.0
    %1285 = vmatpush.msra.mxu0 0.0
    %1286 = vmatpush.msra.mxu0 0.0
    %1287 = vmatpush.msra.mxu0 0.0
    %1288 = vmatpush.msra.mxu0 0.0
    %1289 = vmatpush.msra.mxu0 %v1277
    %1290 = vmatpush.msra.mxu0 %v1276
    %1291 = vmatpush.msra.mxu0 %v1275
    %1292 = vmatpush.msra.mxu0 %v1274
    %1293 = vmatpush.msra.mxu0 %v1273
    %1294 = vmatpush.msra.mxu0 %v1272
    %1295 = vmatpush.msra.mxu0 %v1271
    %1296 = vmatpush.msra.mxu0 %v1270
    %1297 = vmatmul.f32.gmra.mxu0 %v1279
    %v1298 = vpop.f32.mrf.mxu0
    %v1299 = vadd.f32 0.0, %v1298
    %1300 = vdwg.mxu0
    %v1301 = vadd.f32 %v1269, %v1299
    %v1302 = vld [vmem:[%s3 + $0x140] sm:$0xff]
    %v1303 = vld [vmem:[%s3 + $0x148] sm:$0xff]
    %v1304 = vld [vmem:[%s3 + $0x150] sm:$0xff]
    %v1305 = vld [vmem:[%s3 + $0x158] sm:$0xff]
    %v1306 = vld [vmem:[%s3 + $0x160] sm:$0xff]
    %v1307 = vld [vmem:[%s3 + $0x168] sm:$0xff]
    %v1308 = vld [vmem:[%s3 + $0x170] sm:$0xff]
    %v1309 = vld [vmem:[%s3 + $0x178] sm:$0xff]
    %v1310 = vrot.slane %v1137, 2
    %v1311 = vsel %vm1161, %v1310, 0
    %1313 = vmatpush.msra.mxu0 0.0
    %1314 = vmatpush.msra.mxu0 0.0
    %1315 = vmatpush.msra.mxu0 0.0
    %1316 = vmatpush.msra.mxu0 0.0
    %1317 = vmatpush.msra.mxu0 0.0
    %1318 = vmatpush.msra.mxu0 0.0
    %1319 = vmatpush.msra.mxu0 0.0
    %1320 = vmatpush.msra.mxu0 0.0
    %1321 = vmatpush.msra.mxu0 %v1309
    %1322 = vmatpush.msra.mxu0 %v1308
    %1323 = vmatpush.msra.mxu0 %v1307
    %1324 = vmatpush.msra.mxu0 %v1306
    %1325 = vmatpush.msra.mxu0 %v1305
    %1326 = vmatpush.msra.mxu0 %v1304
    %1327 = vmatpush.msra.mxu0 %v1303
    %1328 = vmatpush.msra.mxu0 %v1302
    %1329 = vmatmul.f32.gmra.mxu0 %v1311
    %v1330 = vpop.f32.mrf.mxu0
    %v1331 = vadd.f32 0.0, %v1330
    %1332 = vdwg.mxu0
    %v1333 = vadd.f32 %v1301, %v1331
    %v1334 = vld [vmem:[%s3 + $0x180] sm:$0xff]
    %v1335 = vld [vmem:[%s3 + $0x188] sm:$0xff]
    %v1336 = vld [vmem:[%s3 + $0x190] sm:$0xff]
    %v1337 = vld [vmem:[%s3 + $0x198] sm:$0xff]
    %v1338 = vld [vmem:[%s3 + $0x1a0] sm:$0xff]
    %v1339 = vld [vmem:[%s3 + $0x1a8] sm:$0xff]
    %v1340 = vld [vmem:[%s3 + $0x1b0] sm:$0xff]
    %v1341 = vld [vmem:[%s3 + $0x1b8] sm:$0xff]
    %v1342 = vrot.slane %v1137, 4
    %v1343 = vsel %vm1161, %v1342, 0
    %1345 = vmatpush.msra.mxu0 0.0
    %1346 = vmatpush.msra.mxu0 0.0
    %1347 = vmatpush.msra.mxu0 0.0
    %1348 = vmatpush.msra.mxu0 0.0
    %1349 = vmatpush.msra.mxu0 0.0
    %1350 = vmatpush.msra.mxu0 0.0
    %1351 = vmatpush.msra.mxu0 0.0
    %1352 = vmatpush.msra.mxu0 0.0
    %1353 = vmatpush.msra.mxu0 %v1341
    %1354 = vmatpush.msra.mxu0 %v1340
    %1355 = vmatpush.msra.mxu0 %v1339
    %1356 = vmatpush.msra.mxu0 %v1338
    %1357 = vmatpush.msra.mxu0 %v1337
    %1358 = vmatpush.msra.mxu0 %v1336
    %1359 = vmatpush.msra.mxu0 %v1335
    %1360 = vmatpush.msra.mxu0 %v1334
    %1361 = vmatmul.f32.gmra.mxu0 %v1343
    %v1362 = vpop.f32.mrf.mxu0
    %v1363 = vadd.f32 0.0, %v1362
    %1364 = vdwg.mxu0
    %v1365 = vadd.f32 %v1333, %v1363
    %v1366 = vld [vmem:[%s3 + $0x1c0] sm:$0xff]
    %v1367 = vld [vmem:[%s3 + $0x1c8] sm:$0xff]
    %v1368 = vld [vmem:[%s3 + $0x1d0] sm:$0xff]
    %v1369 = vld [vmem:[%s3 + $0x1d8] sm:$0xff]
    %v1370 = vld [vmem:[%s3 + $0x1e0] sm:$0xff]
    %v1371 = vld [vmem:[%s3 + $0x1e8] sm:$0xff]
    %v1372 = vld [vmem:[%s3 + $0x1f0] sm:$0xff]
    %v1373 = vld [vmem:[%s3 + $0x1f8] sm:$0xff]
    %v1374 = vrot.slane %v1137, 6
    %v1375 = vsel %vm1161, %v1374, 0
    %1377 = vmatpush.msra.mxu0 0.0
    %1378 = vmatpush.msra.mxu0 0.0
    %1379 = vmatpush.msra.mxu0 0.0
    %1380 = vmatpush.msra.mxu0 0.0
    %1381 = vmatpush.msra.mxu0 0.0
    %1382 = vmatpush.msra.mxu0 0.0
    %1383 = vmatpush.msra.mxu0 0.0
    %1384 = vmatpush.msra.mxu0 0.0
    %1385 = vmatpush.msra.mxu0 %v1373
    %1386 = vmatpush.msra.mxu0 %v1372
    %1387 = vmatpush.msra.mxu0 %v1371
    %1388 = vmatpush.msra.mxu0 %v1370
    %1389 = vmatpush.msra.mxu0 %v1369
    %1390 = vmatpush.msra.mxu0 %v1368
    %1391 = vmatpush.msra.mxu0 %v1367
    %1392 = vmatpush.msra.mxu0 %v1366
    %1393 = vmatmul.f32.gmra.mxu0 %v1375
    %v1394 = vpop.f32.mrf.mxu0
    %v1395 = vadd.f32 0.0, %v1394
    %1396 = vdwg.mxu0
    %v1397 = vadd.f32 %v1365, %v1395
    %v1398 = vld [vmem:[%s3 + $0x200] sm:$0xff]
    %v1399 = vld [vmem:[%s3 + $0x208] sm:$0xff]
    %v1400 = vld [vmem:[%s3 + $0x210] sm:$0xff]
    %v1401 = vld [vmem:[%s3 + $0x218] sm:$0xff]
    %v1402 = vld [vmem:[%s3 + $0x220] sm:$0xff]
    %v1403 = vld [vmem:[%s3 + $0x228] sm:$0xff]
    %v1404 = vld [vmem:[%s3 + $0x230] sm:$0xff]
    %v1405 = vld [vmem:[%s3 + $0x238] sm:$0xff]
    %v1407 = vsel %vm1161, %v1138, 0
    %1409 = vmatpush.msra.mxu0 0.0
    %1410 = vmatpush.msra.mxu0 0.0
    %1411 = vmatpush.msra.mxu0 0.0
    %1412 = vmatpush.msra.mxu0 0.0
    %1413 = vmatpush.msra.mxu0 0.0
    %1414 = vmatpush.msra.mxu0 0.0
    %1415 = vmatpush.msra.mxu0 0.0
    %1416 = vmatpush.msra.mxu0 0.0
    %1417 = vmatpush.msra.mxu0 %v1405
    %1418 = vmatpush.msra.mxu0 %v1404
    %1419 = vmatpush.msra.mxu0 %v1403
    %1420 = vmatpush.msra.mxu0 %v1402
    %1421 = vmatpush.msra.mxu0 %v1401
    %1422 = vmatpush.msra.mxu0 %v1400
    %1423 = vmatpush.msra.mxu0 %v1399
    %1424 = vmatpush.msra.mxu0 %v1398
    %1425 = vmatmul.f32.gmra.mxu0 %v1407
    %v1426 = vpop.f32.mrf.mxu0
    %v1427 = vadd.f32 0.0, %v1426
    %1428 = vdwg.mxu0
    %v1429 = vadd.f32 %v1397, %v1427
    %v1430 = vld [vmem:[%s3 + $0x240] sm:$0xff]
    %v1431 = vld [vmem:[%s3 + $0x248] sm:$0xff]
    %v1432 = vld [vmem:[%s3 + $0x250] sm:$0xff]
    %v1433 = vld [vmem:[%s3 + $0x258] sm:$0xff]
    %v1434 = vld [vmem:[%s3 + $0x260] sm:$0xff]
    %v1435 = vld [vmem:[%s3 + $0x268] sm:$0xff]
    %v1436 = vld [vmem:[%s3 + $0x270] sm:$0xff]
    %v1437 = vld [vmem:[%s3 + $0x278] sm:$0xff]
    %v1438 = vrot.slane %v1138, 2
    %v1439 = vsel %vm1161, %v1438, 0
    %1441 = vmatpush.msra.mxu0 0.0
    %1442 = vmatpush.msra.mxu0 0.0
    %1443 = vmatpush.msra.mxu0 0.0
    %1444 = vmatpush.msra.mxu0 0.0
    %1445 = vmatpush.msra.mxu0 0.0
    %1446 = vmatpush.msra.mxu0 0.0
    %1447 = vmatpush.msra.mxu0 0.0
    %1448 = vmatpush.msra.mxu0 0.0
    %1449 = vmatpush.msra.mxu0 %v1437
    %1450 = vmatpush.msra.mxu0 %v1436
    %1451 = vmatpush.msra.mxu0 %v1435
    %1452 = vmatpush.msra.mxu0 %v1434
    %1453 = vmatpush.msra.mxu0 %v1433
    %1454 = vmatpush.msra.mxu0 %v1432
    %1455 = vmatpush.msra.mxu0 %v1431
    %1456 = vmatpush.msra.mxu0 %v1430
    %1457 = vmatmul.f32.gmra.mxu0 %v1439
    %v1458 = vpop.f32.mrf.mxu0
    %v1459 = vadd.f32 0.0, %v1458
    %1460 = vdwg.mxu0
    %v1461 = vadd.f32 %v1429, %v1459
    %v1462 = vld [vmem:[%s3 + $0x280] sm:$0xff]
    %v1463 = vld [vmem:[%s3 + $0x288] sm:$0xff]
    %v1464 = vld [vmem:[%s3 + $0x290] sm:$0xff]
    %v1465 = vld [vmem:[%s3 + $0x298] sm:$0xff]
    %v1466 = vld [vmem:[%s3 + $0x2a0] sm:$0xff]
    %v1467 = vld [vmem:[%s3 + $0x2a8] sm:$0xff]
    %v1468 = vld [vmem:[%s3 + $0x2b0] sm:$0xff]
    %v1469 = vld [vmem:[%s3 + $0x2b8] sm:$0xff]
    %v1470 = vrot.slane %v1138, 4
    %v1471 = vsel %vm1161, %v1470, 0
    %1473 = vmatpush.msra.mxu0 0.0
    %1474 = vmatpush.msra.mxu0 0.0
    %1475 = vmatpush.msra.mxu0 0.0
    %1476 = vmatpush.msra.mxu0 0.0
    %1477 = vmatpush.msra.mxu0 0.0
    %1478 = vmatpush.msra.mxu0 0.0
    %1479 = vmatpush.msra.mxu0 0.0
    %1480 = vmatpush.msra.mxu0 0.0
    %1481 = vmatpush.msra.mxu0 %v1469
    %1482 = vmatpush.msra.mxu0 %v1468
    %1483 = vmatpush.msra.mxu0 %v1467
    %1484 = vmatpush.msra.mxu0 %v1466
    %1485 = vmatpush.msra.mxu0 %v1465
    %1486 = vmatpush.msra.mxu0 %v1464
    %1487 = vmatpush.msra.mxu0 %v1463
    %1488 = vmatpush.msra.mxu0 %v1462
    %1489 = vmatmul.f32.gmra.mxu0 %v1471
    %v1490 = vpop.f32.mrf.mxu0
    %v1491 = vadd.f32 0.0, %v1490
    %1492 = vdwg.mxu0
    %v1493 = vadd.f32 %v1461, %v1491
    %v1494 = vld [vmem:[%s3 + $0x2c0] sm:$0xff]
    %v1495 = vld [vmem:[%s3 + $0x2c8] sm:$0xff]
    %v1496 = vld [vmem:[%s3 + $0x2d0] sm:$0xff]
    %v1497 = vld [vmem:[%s3 + $0x2d8] sm:$0xff]
    %v1498 = vld [vmem:[%s3 + $0x2e0] sm:$0xff]
    %v1499 = vld [vmem:[%s3 + $0x2e8] sm:$0xff]
    %v1500 = vld [vmem:[%s3 + $0x2f0] sm:$0xff]
    %v1501 = vld [vmem:[%s3 + $0x2f8] sm:$0xff]
    %v1502 = vrot.slane %v1138, 6
    %v1503 = vsel %vm1161, %v1502, 0
    %1505 = vmatpush.msra.mxu0 0.0
    %1506 = vmatpush.msra.mxu0 0.0
    %1507 = vmatpush.msra.mxu0 0.0
    %1508 = vmatpush.msra.mxu0 0.0
    %1509 = vmatpush.msra.mxu0 0.0
    %1510 = vmatpush.msra.mxu0 0.0
    %1511 = vmatpush.msra.mxu0 0.0
    %1512 = vmatpush.msra.mxu0 0.0
    %1513 = vmatpush.msra.mxu0 %v1501
    %1514 = vmatpush.msra.mxu0 %v1500
    %1515 = vmatpush.msra.mxu0 %v1499
    %1516 = vmatpush.msra.mxu0 %v1498
    %1517 = vmatpush.msra.mxu0 %v1497
    %1518 = vmatpush.msra.mxu0 %v1496
    %1519 = vmatpush.msra.mxu0 %v1495
    %1520 = vmatpush.msra.mxu0 %v1494
    %1521 = vmatmul.f32.gmra.mxu0 %v1503
    %v1522 = vpop.f32.mrf.mxu0
    %v1523 = vadd.f32 0.0, %v1522
    %1524 = vdwg.mxu0
    %v1525 = vadd.f32 %v1493, %v1523
    %v1526 = vld [vmem:[%s3 + $0x300] sm:$0xff]
    %v1527 = vld [vmem:[%s3 + $0x308] sm:$0xff]
    %v1528 = vld [vmem:[%s3 + $0x310] sm:$0xff]
    %v1529 = vld [vmem:[%s3 + $0x318] sm:$0xff]
    %v1530 = vld [vmem:[%s3 + $0x320] sm:$0xff]
    %v1531 = vld [vmem:[%s3 + $0x328] sm:$0xff]
    %v1532 = vld [vmem:[%s3 + $0x330] sm:$0xff]
    %v1533 = vld [vmem:[%s3 + $0x338] sm:$0xff]
    %v1535 = vsel %vm1161, %v1139, 0
    %1537 = vmatpush.msra.mxu0 0.0
    %1538 = vmatpush.msra.mxu0 0.0
    %1539 = vmatpush.msra.mxu0 0.0
    %1540 = vmatpush.msra.mxu0 0.0
    %1541 = vmatpush.msra.mxu0 0.0
    %1542 = vmatpush.msra.mxu0 0.0
    %1543 = vmatpush.msra.mxu0 0.0
    %1544 = vmatpush.msra.mxu0 0.0
    %1545 = vmatpush.msra.mxu0 %v1533
    %1546 = vmatpush.msra.mxu0 %v1532
    %1547 = vmatpush.msra.mxu0 %v1531
    %1548 = vmatpush.msra.mxu0 %v1530
    %1549 = vmatpush.msra.mxu0 %v1529
    %1550 = vmatpush.msra.mxu0 %v1528
    %1551 = vmatpush.msra.mxu0 %v1527
    %1552 = vmatpush.msra.mxu0 %v1526
    %1553 = vmatmul.f32.gmra.mxu0 %v1535
    %v1554 = vpop.f32.mrf.mxu0
    %v1555 = vadd.f32 0.0, %v1554
    %1556 = vdwg.mxu0
    %v1557 = vadd.f32 %v1525, %v1555
    %v1558 = vld [vmem:[%s3 + $0x340] sm:$0xff]
    %v1559 = vld [vmem:[%s3 + $0x348] sm:$0xff]
    %v1560 = vld [vmem:[%s3 + $0x350] sm:$0xff]
    %v1561 = vld [vmem:[%s3 + $0x358] sm:$0xff]
    %v1562 = vld [vmem:[%s3 + $0x360] sm:$0xff]
    %v1563 = vld [vmem:[%s3 + $0x368] sm:$0xff]
    %v1564 = vld [vmem:[%s3 + $0x370] sm:$0xff]
    %v1565 = vld [vmem:[%s3 + $0x378] sm:$0xff]
    %v1566 = vrot.slane %v1139, 2
    %v1567 = vsel %vm1161, %v1566, 0
    %1569 = vmatpush.msra.mxu0 0.0
    %1570 = vmatpush.msra.mxu0 0.0
    %1571 = vmatpush.msra.mxu0 0.0
    %1572 = vmatpush.msra.mxu0 0.0
    %1573 = vmatpush.msra.mxu0 0.0
    %1574 = vmatpush.msra.mxu0 0.0
    %1575 = vmatpush.msra.mxu0 0.0
    %1576 = vmatpush.msra.mxu0 0.0
    %1577 = vmatpush.msra.mxu0 %v1565
    %1578 = vmatpush.msra.mxu0 %v1564
    %1579 = vmatpush.msra.mxu0 %v1563
    %1580 = vmatpush.msra.mxu0 %v1562
    %1581 = vmatpush.msra.mxu0 %v1561
    %1582 = vmatpush.msra.mxu0 %v1560
    %1583 = vmatpush.msra.mxu0 %v1559
    %1584 = vmatpush.msra.mxu0 %v1558
    %1585 = vmatmul.f32.gmra.mxu0 %v1567
    %v1586 = vpop.f32.mrf.mxu0
    %v1587 = vadd.f32 0.0, %v1586
    %1588 = vdwg.mxu0
    %v1589 = vadd.f32 %v1557, %v1587
    %v1590 = vld [vmem:[%s3 + $0x380] sm:$0xff]
    %v1591 = vld [vmem:[%s3 + $0x388] sm:$0xff]
    %v1592 = vld [vmem:[%s3 + $0x390] sm:$0xff]
    %v1593 = vld [vmem:[%s3 + $0x398] sm:$0xff]
    %v1594 = vld [vmem:[%s3 + $0x3a0] sm:$0xff]
    %v1595 = vld [vmem:[%s3 + $0x3a8] sm:$0xff]
    %v1596 = vld [vmem:[%s3 + $0x3b0] sm:$0xff]
    %v1597 = vld [vmem:[%s3 + $0x3b8] sm:$0xff]
    %v1598 = vrot.slane %v1139, 4
    %v1599 = vsel %vm1161, %v1598, 0
    %1601 = vmatpush.msra.mxu0 0.0
    %1602 = vmatpush.msra.mxu0 0.0
    %1603 = vmatpush.msra.mxu0 0.0
    %1604 = vmatpush.msra.mxu0 0.0
    %1605 = vmatpush.msra.mxu0 0.0
    %1606 = vmatpush.msra.mxu0 0.0
    %1607 = vmatpush.msra.mxu0 0.0
    %1608 = vmatpush.msra.mxu0 0.0
    %1609 = vmatpush.msra.mxu0 %v1597
    %1610 = vmatpush.msra.mxu0 %v1596
    %1611 = vmatpush.msra.mxu0 %v1595
    %1612 = vmatpush.msra.mxu0 %v1594
    %1613 = vmatpush.msra.mxu0 %v1593
    %1614 = vmatpush.msra.mxu0 %v1592
    %1615 = vmatpush.msra.mxu0 %v1591
    %1616 = vmatpush.msra.mxu0 %v1590
    %1617 = vmatmul.f32.gmra.mxu0 %v1599
    %v1618 = vpop.f32.mrf.mxu0
    %v1619 = vadd.f32 0.0, %v1618
    %1620 = vdwg.mxu0
    %v1621 = vadd.f32 %v1589, %v1619
    %v1622 = vld [vmem:[%s3 + $0x3c0] sm:$0xff]
    %v1623 = vld [vmem:[%s3 + $0x3c8] sm:$0xff]
    %v1624 = vld [vmem:[%s3 + $0x3d0] sm:$0xff]
    %v1625 = vld [vmem:[%s3 + $0x3d8] sm:$0xff]
    %v1626 = vld [vmem:[%s3 + $0x3e0] sm:$0xff]
    %v1627 = vld [vmem:[%s3 + $0x3e8] sm:$0xff]
    %v1628 = vld [vmem:[%s3 + $0x3f0] sm:$0xff]
    %v1629 = vld [vmem:[%s3 + $0x3f8] sm:$0xff]
    %v1630 = vrot.slane %v1139, 6
    %v1631 = vsel %vm1161, %v1630, 0
    %1633 = vmatpush.msra.mxu0 0.0
    %1634 = vmatpush.msra.mxu0 0.0
    %1635 = vmatpush.msra.mxu0 0.0
    %1636 = vmatpush.msra.mxu0 0.0
    %1637 = vmatpush.msra.mxu0 0.0
    %1638 = vmatpush.msra.mxu0 0.0
    %1639 = vmatpush.msra.mxu0 0.0
    %1640 = vmatpush.msra.mxu0 0.0
    %1641 = vmatpush.msra.mxu0 %v1629
    %1642 = vmatpush.msra.mxu0 %v1628
    %1643 = vmatpush.msra.mxu0 %v1627
    %1644 = vmatpush.msra.mxu0 %v1626
    %1645 = vmatpush.msra.mxu0 %v1625
    %1646 = vmatpush.msra.mxu0 %v1624
    %1647 = vmatpush.msra.mxu0 %v1623
    %1648 = vmatpush.msra.mxu0 %v1622
    %1649 = vmatmul.f32.gmra.mxu0 %v1631
    %v1650 = vpop.f32.mrf.mxu0
    %v1651 = vadd.f32 0.0, %v1650
    %1652 = vdwg.mxu0
    %v1653 = vadd.f32 %v1621, %v1651
    %v1654 = vld [vmem:[%s3 + $0x400] sm:$0xff]
    %v1655 = vld [vmem:[%s3 + $0x408] sm:$0xff]
    %v1656 = vld [vmem:[%s3 + $0x410] sm:$0xff]
    %v1657 = vld [vmem:[%s3 + $0x418] sm:$0xff]
    %v1658 = vld [vmem:[%s3 + $0x420] sm:$0xff]
    %v1659 = vld [vmem:[%s3 + $0x428] sm:$0xff]
    %v1660 = vld [vmem:[%s3 + $0x430] sm:$0xff]
    %v1661 = vld [vmem:[%s3 + $0x438] sm:$0xff]
    %v1663 = vsel %vm1161, %v1140, 0
    %1665 = vmatpush.msra.mxu0 0.0
    %1666 = vmatpush.msra.mxu0 0.0
    %1667 = vmatpush.msra.mxu0 0.0
    %1668 = vmatpush.msra.mxu0 0.0
    %1669 = vmatpush.msra.mxu0 0.0
    %1670 = vmatpush.msra.mxu0 0.0
    %1671 = vmatpush.msra.mxu0 0.0
    %1672 = vmatpush.msra.mxu0 0.0
    %1673 = vmatpush.msra.mxu0 %v1661
    %1674 = vmatpush.msra.mxu0 %v1660
    %1675 = vmatpush.msra.mxu0 %v1659
    %1676 = vmatpush.msra.mxu0 %v1658
    %1677 = vmatpush.msra.mxu0 %v1657
    %1678 = vmatpush.msra.mxu0 %v1656
    %1679 = vmatpush.msra.mxu0 %v1655
    %1680 = vmatpush.msra.mxu0 %v1654
    %1681 = vmatmul.f32.gmra.mxu0 %v1663
    %v1682 = vpop.f32.mrf.mxu0
    %v1683 = vadd.f32 0.0, %v1682
    %1684 = vdwg.mxu0
    %v1685 = vadd.f32 %v1653, %v1683
    %v1686 = vld [vmem:[%s3 + $0x440] sm:$0xff]
    %v1687 = vld [vmem:[%s3 + $0x448] sm:$0xff]
    %v1688 = vld [vmem:[%s3 + $0x450] sm:$0xff]
    %v1689 = vld [vmem:[%s3 + $0x458] sm:$0xff]
    %v1690 = vld [vmem:[%s3 + $0x460] sm:$0xff]
    %v1691 = vld [vmem:[%s3 + $0x468] sm:$0xff]
    %v1692 = vld [vmem:[%s3 + $0x470] sm:$0xff]
    %v1693 = vld [vmem:[%s3 + $0x478] sm:$0xff]
    %v1694 = vrot.slane %v1140, 2
    %v1695 = vsel %vm1161, %v1694, 0
    %1697 = vmatpush.msra.mxu0 0.0
    %1698 = vmatpush.msra.mxu0 0.0
    %1699 = vmatpush.msra.mxu0 0.0
    %1700 = vmatpush.msra.mxu0 0.0
    %1701 = vmatpush.msra.mxu0 0.0
    %1702 = vmatpush.msra.mxu0 0.0
    %1703 = vmatpush.msra.mxu0 0.0
    %1704 = vmatpush.msra.mxu0 0.0
    %1705 = vmatpush.msra.mxu0 %v1693
    %1706 = vmatpush.msra.mxu0 %v1692
    %1707 = vmatpush.msra.mxu0 %v1691
    %1708 = vmatpush.msra.mxu0 %v1690
    %1709 = vmatpush.msra.mxu0 %v1689
    %1710 = vmatpush.msra.mxu0 %v1688
    %1711 = vmatpush.msra.mxu0 %v1687
    %1712 = vmatpush.msra.mxu0 %v1686
    %1713 = vmatmul.f32.gmra.mxu0 %v1695
    %v1714 = vpop.f32.mrf.mxu0
    %v1715 = vadd.f32 0.0, %v1714
    %1716 = vdwg.mxu0
    %v1717 = vadd.f32 %v1685, %v1715
    %v1718 = vld [vmem:[%s3 + $0x480] sm:$0xff]
    %v1719 = vld [vmem:[%s3 + $0x488] sm:$0xff]
    %v1720 = vld [vmem:[%s3 + $0x490] sm:$0xff]
    %v1721 = vld [vmem:[%s3 + $0x498] sm:$0xff]
    %v1722 = vld [vmem:[%s3 + $0x4a0] sm:$0xff]
    %v1723 = vld [vmem:[%s3 + $0x4a8] sm:$0xff]
    %v1724 = vld [vmem:[%s3 + $0x4b0] sm:$0xff]
    %v1725 = vld [vmem:[%s3 + $0x4b8] sm:$0xff]
    %v1726 = vrot.slane %v1140, 4
    %v1727 = vsel %vm1161, %v1726, 0
    %1729 = vmatpush.msra.mxu0 0.0
    %1730 = vmatpush.msra.mxu0 0.0
    %1731 = vmatpush.msra.mxu0 0.0
    %1732 = vmatpush.msra.mxu0 0.0
    %1733 = vmatpush.msra.mxu0 0.0
    %1734 = vmatpush.msra.mxu0 0.0
    %1735 = vmatpush.msra.mxu0 0.0
    %1736 = vmatpush.msra.mxu0 0.0
    %1737 = vmatpush.msra.mxu0 %v1725
    %1738 = vmatpush.msra.mxu0 %v1724
    %1739 = vmatpush.msra.mxu0 %v1723
    %1740 = vmatpush.msra.mxu0 %v1722
    %1741 = vmatpush.msra.mxu0 %v1721
    %1742 = vmatpush.msra.mxu0 %v1720
    %1743 = vmatpush.msra.mxu0 %v1719
    %1744 = vmatpush.msra.mxu0 %v1718
    %1745 = vmatmul.f32.gmra.mxu0 %v1727
    %v1746 = vpop.f32.mrf.mxu0
    %v1747 = vadd.f32 0.0, %v1746
    %1748 = vdwg.mxu0
    %v1749 = vadd.f32 %v1717, %v1747
    %v1750 = vld [vmem:[%s3 + $0x4c0] sm:$0xff]
    %v1751 = vld [vmem:[%s3 + $0x4c8] sm:$0xff]
    %v1752 = vld [vmem:[%s3 + $0x4d0] sm:$0xff]
    %v1753 = vld [vmem:[%s3 + $0x4d8] sm:$0xff]
    %v1754 = vld [vmem:[%s3 + $0x4e0] sm:$0xff]
    %v1755 = vld [vmem:[%s3 + $0x4e8] sm:$0xff]
    %v1756 = vld [vmem:[%s3 + $0x4f0] sm:$0xff]
    %v1757 = vld [vmem:[%s3 + $0x4f8] sm:$0xff]
    %v1758 = vrot.slane %v1140, 6
    %v1759 = vsel %vm1161, %v1758, 0
    %1761 = vmatpush.msra.mxu0 0.0
    %1762 = vmatpush.msra.mxu0 0.0
    %1763 = vmatpush.msra.mxu0 0.0
    %1764 = vmatpush.msra.mxu0 0.0
    %1765 = vmatpush.msra.mxu0 0.0
    %1766 = vmatpush.msra.mxu0 0.0
    %1767 = vmatpush.msra.mxu0 0.0
    %1768 = vmatpush.msra.mxu0 0.0
    %1769 = vmatpush.msra.mxu0 %v1757
    %1770 = vmatpush.msra.mxu0 %v1756
    %1771 = vmatpush.msra.mxu0 %v1755
    %1772 = vmatpush.msra.mxu0 %v1754
    %1773 = vmatpush.msra.mxu0 %v1753
    %1774 = vmatpush.msra.mxu0 %v1752
    %1775 = vmatpush.msra.mxu0 %v1751
    %1776 = vmatpush.msra.mxu0 %v1750
    %1777 = vmatmul.f32.gmra.mxu0 %v1759
    %v1778 = vpop.f32.mrf.mxu0
    %v1779 = vadd.f32 0.0, %v1778
    %1780 = vdwg.mxu0
    %v1781 = vadd.f32 %v1749, %v1779
    %v1782 = vld [vmem:[%s3 + $0x500] sm:$0xff]
    %v1783 = vld [vmem:[%s3 + $0x508] sm:$0xff]
    %v1784 = vld [vmem:[%s3 + $0x510] sm:$0xff]
    %v1785 = vld [vmem:[%s3 + $0x518] sm:$0xff]
    %v1786 = vld [vmem:[%s3 + $0x520] sm:$0xff]
    %v1787 = vld [vmem:[%s3 + $0x528] sm:$0xff]
    %v1788 = vld [vmem:[%s3 + $0x530] sm:$0xff]
    %v1789 = vld [vmem:[%s3 + $0x538] sm:$0xff]
    %v1791 = vsel %vm1161, %v1141, 0
    %1793 = vmatpush.msra.mxu0 0.0
    %1794 = vmatpush.msra.mxu0 0.0
    %1795 = vmatpush.msra.mxu0 0.0
    %1796 = vmatpush.msra.mxu0 0.0
    %1797 = vmatpush.msra.mxu0 0.0
    %1798 = vmatpush.msra.mxu0 0.0
    %1799 = vmatpush.msra.mxu0 0.0
    %1800 = vmatpush.msra.mxu0 0.0
    %1801 = vmatpush.msra.mxu0 %v1789
    %1802 = vmatpush.msra.mxu0 %v1788
    %1803 = vmatpush.msra.mxu0 %v1787
    %1804 = vmatpush.msra.mxu0 %v1786
    %1805 = vmatpush.msra.mxu0 %v1785
    %1806 = vmatpush.msra.mxu0 %v1784
    %1807 = vmatpush.msra.mxu0 %v1783
    %1808 = vmatpush.msra.mxu0 %v1782
    %1809 = vmatmul.f32.gmra.mxu0 %v1791
    %v1810 = vpop.f32.mrf.mxu0
    %v1811 = vadd.f32 0.0, %v1810
    %1812 = vdwg.mxu0
    %v1813 = vadd.f32 %v1781, %v1811
    %v1814 = vld [vmem:[%s3 + $0x540] sm:$0xff]
    %v1815 = vld [vmem:[%s3 + $0x548] sm:$0xff]
    %v1816 = vld [vmem:[%s3 + $0x550] sm:$0xff]
    %v1817 = vld [vmem:[%s3 + $0x558] sm:$0xff]
    %v1818 = vld [vmem:[%s3 + $0x560] sm:$0xff]
    %v1819 = vld [vmem:[%s3 + $0x568] sm:$0xff]
    %v1820 = vld [vmem:[%s3 + $0x570] sm:$0xff]
    %v1821 = vld [vmem:[%s3 + $0x578] sm:$0xff]
    %v1822 = vrot.slane %v1141, 2
    %v1823 = vsel %vm1161, %v1822, 0
    %1825 = vmatpush.msra.mxu0 0.0
    %1826 = vmatpush.msra.mxu0 0.0
    %1827 = vmatpush.msra.mxu0 0.0
    %1828 = vmatpush.msra.mxu0 0.0
    %1829 = vmatpush.msra.mxu0 0.0
    %1830 = vmatpush.msra.mxu0 0.0
    %1831 = vmatpush.msra.mxu0 0.0
    %1832 = vmatpush.msra.mxu0 0.0
    %1833 = vmatpush.msra.mxu0 %v1821
    %1834 = vmatpush.msra.mxu0 %v1820
    %1835 = vmatpush.msra.mxu0 %v1819
    %1836 = vmatpush.msra.mxu0 %v1818
    %1837 = vmatpush.msra.mxu0 %v1817
    %1838 = vmatpush.msra.mxu0 %v1816
    %1839 = vmatpush.msra.mxu0 %v1815
    %1840 = vmatpush.msra.mxu0 %v1814
    %1841 = vmatmul.f32.gmra.mxu0 %v1823
    %v1842 = vpop.f32.mrf.mxu0
    %v1843 = vadd.f32 0.0, %v1842
    %1844 = vdwg.mxu0
    %v1845 = vadd.f32 %v1813, %v1843
    %v1846 = vld [vmem:[%s3 + $0x580] sm:$0xff]
    %v1847 = vld [vmem:[%s3 + $0x588] sm:$0xff]
    %v1848 = vld [vmem:[%s3 + $0x590] sm:$0xff]
    %v1849 = vld [vmem:[%s3 + $0x598] sm:$0xff]
    %v1850 = vld [vmem:[%s3 + $0x5a0] sm:$0xff]
    %v1851 = vld [vmem:[%s3 + $0x5a8] sm:$0xff]
    %v1852 = vld [vmem:[%s3 + $0x5b0] sm:$0xff]
    %v1853 = vld [vmem:[%s3 + $0x5b8] sm:$0xff]
    %v1854 = vrot.slane %v1141, 4
    %v1855 = vsel %vm1161, %v1854, 0
    %1857 = vmatpush.msra.mxu0 0.0
    %1858 = vmatpush.msra.mxu0 0.0
    %1859 = vmatpush.msra.mxu0 0.0
    %1860 = vmatpush.msra.mxu0 0.0
    %1861 = vmatpush.msra.mxu0 0.0
    %1862 = vmatpush.msra.mxu0 0.0
    %1863 = vmatpush.msra.mxu0 0.0
    %1864 = vmatpush.msra.mxu0 0.0
    %1865 = vmatpush.msra.mxu0 %v1853
    %1866 = vmatpush.msra.mxu0 %v1852
    %1867 = vmatpush.msra.mxu0 %v1851
    %1868 = vmatpush.msra.mxu0 %v1850
    %1869 = vmatpush.msra.mxu0 %v1849
    %1870 = vmatpush.msra.mxu0 %v1848
    %1871 = vmatpush.msra.mxu0 %v1847
    %1872 = vmatpush.msra.mxu0 %v1846
    %1873 = vmatmul.f32.gmra.mxu0 %v1855
    %v1874 = vpop.f32.mrf.mxu0
    %v1875 = vadd.f32 0.0, %v1874
    %1876 = vdwg.mxu0
    %v1877 = vadd.f32 %v1845, %v1875
    %v1878 = vld [vmem:[%s3 + $0x5c0] sm:$0xff]
    %v1879 = vld [vmem:[%s3 + $0x5c8] sm:$0xff]
    %v1880 = vld [vmem:[%s3 + $0x5d0] sm:$0xff]
    %v1881 = vld [vmem:[%s3 + $0x5d8] sm:$0xff]
    %v1882 = vld [vmem:[%s3 + $0x5e0] sm:$0xff]
    %v1883 = vld [vmem:[%s3 + $0x5e8] sm:$0xff]
    %v1884 = vld [vmem:[%s3 + $0x5f0] sm:$0xff]
    %v1885 = vld [vmem:[%s3 + $0x5f8] sm:$0xff]
    %v1886 = vrot.slane %v1141, 6
    %v1887 = vsel %vm1161, %v1886, 0
    %1889 = vmatpush.msra.mxu0 0.0
    %1890 = vmatpush.msra.mxu0 0.0
    %1891 = vmatpush.msra.mxu0 0.0
    %1892 = vmatpush.msra.mxu0 0.0
    %1893 = vmatpush.msra.mxu0 0.0
    %1894 = vmatpush.msra.mxu0 0.0
    %1895 = vmatpush.msra.mxu0 0.0
    %1896 = vmatpush.msra.mxu0 0.0
    %1897 = vmatpush.msra.mxu0 %v1885
    %1898 = vmatpush.msra.mxu0 %v1884
    %1899 = vmatpush.msra.mxu0 %v1883
    %1900 = vmatpush.msra.mxu0 %v1882
    %1901 = vmatpush.msra.mxu0 %v1881
    %1902 = vmatpush.msra.mxu0 %v1880
    %1903 = vmatpush.msra.mxu0 %v1879
    %1904 = vmatpush.msra.mxu0 %v1878
    %1905 = vmatmul.f32.gmra.mxu0 %v1887
    %v1906 = vpop.f32.mrf.mxu0
    %v1907 = vadd.f32 0.0, %v1906
    %1908 = vdwg.mxu0
    %v1909 = vadd.f32 %v1877, %v1907
    %v1910 = vld [vmem:[%s3 + $0x600] sm:$0xff]
    %v1911 = vld [vmem:[%s3 + $0x608] sm:$0xff]
    %v1912 = vld [vmem:[%s3 + $0x610] sm:$0xff]
    %v1913 = vld [vmem:[%s3 + $0x618] sm:$0xff]
    %v1914 = vld [vmem:[%s3 + $0x620] sm:$0xff]
    %v1915 = vld [vmem:[%s3 + $0x628] sm:$0xff]
    %v1916 = vld [vmem:[%s3 + $0x630] sm:$0xff]
    %v1917 = vld [vmem:[%s3 + $0x638] sm:$0xff]
    %v1919 = vsel %vm1161, %v1142, 0
    %1921 = vmatpush.msra.mxu0 0.0
    %1922 = vmatpush.msra.mxu0 0.0
    %1923 = vmatpush.msra.mxu0 0.0
    %1924 = vmatpush.msra.mxu0 0.0
    %1925 = vmatpush.msra.mxu0 0.0
    %1926 = vmatpush.msra.mxu0 0.0
    %1927 = vmatpush.msra.mxu0 0.0
    %1928 = vmatpush.msra.mxu0 0.0
    %1929 = vmatpush.msra.mxu0 %v1917
    %1930 = vmatpush.msra.mxu0 %v1916
    %1931 = vmatpush.msra.mxu0 %v1915
    %1932 = vmatpush.msra.mxu0 %v1914
    %1933 = vmatpush.msra.mxu0 %v1913
    %1934 = vmatpush.msra.mxu0 %v1912
    %1935 = vmatpush.msra.mxu0 %v1911
    %1936 = vmatpush.msra.mxu0 %v1910
    %1937 = vmatmul.f32.gmra.mxu0 %v1919
    %v1938 = vpop.f32.mrf.mxu0
    %v1939 = vadd.f32 0.0, %v1938
    %1940 = vdwg.mxu0
    %v1941 = vadd.f32 %v1909, %v1939
    %v1942 = vld [vmem:[%s4] sm:$0x1]
    %v1944 = vperm.slane %v1942, 0
    %v1946 = vadd.f32 %v1941, %v1944
    %v1947 = vld [vmem:[%s5] sm:$0xff]
    %v1948 = vld [vmem:[%s5 + $0x8] sm:$0xff]
    %v1949 = vld [vmem:[%s5 + $0x10] sm:$0xff]
    %v1950 = vld [vmem:[%s5 + $0x18] sm:$0xff]
    %v1951 = vld [vmem:[%s5 + $0x20] sm:$0xff]
    %v1952 = vld [vmem:[%s5 + $0x28] sm:$0xff]
    %v1953 = vld [vmem:[%s5 + $0x30] sm:$0xff]
    %v1954 = vld [vmem:[%s5 + $0x38] sm:$0xff]
    %v1955 = vld [vmem:[%s5 + $0x40] sm:$0xff]
    %v1956 = vld [vmem:[%s5 + $0x48] sm:$0xff]
    %v1957 = vld [vmem:[%s5 + $0x50] sm:$0xff]
    %v1958 = vld [vmem:[%s5 + $0x58] sm:$0xff]
    %v1959 = vld [vmem:[%s5 + $0x60] sm:$0xff]
    %v1960 = vld [vmem:[%s5 + $0x68] sm:$0xff]
    %v1961 = vld [vmem:[%s5 + $0x70] sm:$0xff]
    %v1962 = vld [vmem:[%s6] sm:$0x1]
    %v1964 = vperm.slane %v1962, 0
    %vm1966 = vcmask 982016
    %v1968 = vsel %vm1966, %v1946, 0
    %1970 = vmatpush.msra.mxu0 0.0
    %1971 = vmatpush.msra.mxu0 %v1961
    %1972 = vmatpush.msra.mxu0 %v1960
    %1973 = vmatpush.msra.mxu0 %v1959
    %1974 = vmatpush.msra.mxu0 %v1958
    %1975 = vmatpush.msra.mxu0 %v1957
    %1976 = vmatpush.msra.mxu0 %v1956
    %1977 = vmatpush.msra.mxu0 %v1955
    %1978 = vmatpush.msra.mxu0 %v1954
    %1979 = vmatpush.msra.mxu0 %v1953
    %1980 = vmatpush.msra.mxu0 %v1952
    %1981 = vmatpush.msra.mxu0 %v1951
    %1982 = vmatpush.msra.mxu0 %v1950
    %1983 = vmatpush.msra.mxu0 %v1949
    %1984 = vmatpush.msra.mxu0 %v1948
    %1985 = vmatpush.msra.mxu0 %v1947
    %1986 = vmatmul.f32.gmra.mxu0 %v1968
    %v1987 = vpop.f32.mrf.mxu0
    %v1988 = vadd.f32 %v1964, %v1987
    %1989 = vdwg.mxu0
    %v1990 = vsel %vm1097, %v1988, -inf
    %1991 = vmax.xlane.f32.xlu0 %v1990
    %v1992 = vpop.xlane.xlu0 %1991
    %v1993 = vsub.f32 %v1988, %v1992
    %v1994 = vmul.f32 %v1993, 1.442695
    %v1995 = vpow.pop %v1994
    %v1996 = vsel %vm1097, %v1995, 0.0
    %1997 = vadd.xlane.f32.xlu0 %v1996
    %v1998 = vpop.xlane.xlu0 %1997
    %v1999 = vlog2.pop %v1998
    %v2000 = vmul.f32 %v1999, 0.6931472
    %v2001 = vsub.f32 %v1993, %v2000
    %2002 = vst [vmem:[#allocation2] sm:$0x3] %v2001
    // Predicated region
    $region30: #{net_forward.3} parent=1 // pred_check
      _
    $region31: #{net_forward.3} parent=1 // pred_check_branch
      %2004 = sbr.rel (0) target = $region33
    $region32: #{net_forward.3} parent=1 // pred_region
      %2006 = vsyncadd [#allocation3], 0
      %s2008 = sshll.u32 [#allocation2], 4
      %s2009 = int_to_ptr.vmem [resolvable:$true] %s2008
      %s2010 = sshll.u32 %s7, 4
      %s2011 = int_to_ptr.hbm [resolvable:$true] %s2010
      %2013 = dma.vmem_to_hbm [thread:$0]  %s2009, 32, %s2011, [#allocation3]
    $region33: #{net_forward.3} parent=1 // pred_fallthru
      _
    // Predicated region
    $region34: #{net_forward.3} parent=1 // pred_check
      _
    $region35: #{net_forward.3} parent=1 // pred_check_branch
      %2015 = sbr.rel (0) target = $region37
    $region36: #{net_forward.3} parent=1 // pred_region
      %2017 = dma.done [#allocation3], 32
    $region37: #{net_forward.3} parent=1 // pred_fallthru
      _
    %2018 = vsyncpa [#allocation3], 1

</llo_original>
